<compile_context>
chip_gen: v5e
topology: v5e:2x2
jax: 0.10.0
libtpu: 0.0.40
codegen_flags: <defaults>
</compile_context>

<pallas_src>
import jax
import jax.numpy as jnp
from jax.experimental import pallas as pl
from jax.experimental.pallas import tpu as pltpu

EPS = 1e-12            # F.normalize default eps
EPS_SQ = EPS * EPS     # clamp sum-of-squares so rsqrt matches max(||x||, eps)
_GCOL_PAD = 128        # lanes appended to the fused QK matmul for the folded w_g column


def make_eaa_kernel(D, n_valid, n_padded):
    """EfficientAdditiveAttention on one (Bb, N, C) block.

    Host-prepared operands:
      x_ref    : (Bb, N, C)
      wqk_ref  : (C, 2D + 128)  columns = [Wq^T | Wk^T | Wq^T.w_g | 0-pad]
      bqk_ref  : (1, 2D + 128)  entries = [bq   | bk   | bq.w_g   | 0-pad]
      wtail_ref: (2D, T_pad)    rows    = [(Wf Wp)^T ; Wf^T]
      bfin_ref : (1, T_pad)     bf + bp @ Wf^T
    """
    def eaa_kernel(x_ref, wqk_ref, bqk_ref, wtail_ref, bfin_ref, out_ref):
        Bb, N, C = x_ref.shape
        mm_t = wqk_ref.dtype                    # f32, or bf16 (f32 accumulation)

        x2 = x_ref[...].reshape(Bb * N, C)
        if x2.dtype != mm_t:
            x2 = x2.astype(mm_t)

        # One wide MXU matmul: un-normalized q | k | (q . w_g) column.
        qk = jnp.dot(x2, wqk_ref[...],
                     preferred_element_type=jnp.float32) + bqk_ref[...]
        q_raw = qk[:, :D]
        k_raw = qk[:, D:2 * D]
        g_raw = qk[:, 2 * D:2 * D + 1]           # x @ (Wq^T w_g) + bq.w_g

        # L2 normalization via EUP rsqrt on clamped sum-of-squares.
        # TODO(synk): if a bundle dump shows the XLU lane-reduce slot saturating,
        # switch these reductions to an MXU matvec against a ones(D, 128) column.
        inv_q = jax.lax.rsqrt(
            jnp.maximum(jnp.sum(q_raw * q_raw, axis=-1, keepdims=True), EPS_SQ))
        inv_k = jax.lax.rsqrt(
            jnp.maximum(jnp.sum(k_raw * k_raw, axis=-1, keepdims=True), EPS_SQ))
        q = q_raw * inv_q                        # (M, D)
        k = k_raw * inv_k                        # (M, D)

        # query_weight = normalize(q) @ w_g  via the folded column.
        # scale_factor is dropped: a positive constant cancels exactly in the
        # token-axis L2 normalization below.
        qw = (g_raw * inv_q).reshape(Bb, N, 1)
        if n_valid != n_padded:                  # mask padded tokens out of A / G
            tok = jax.lax.broadcasted_iota(jnp.int32, (1, n_padded, 1), 1)
            qw = jnp.where(tok < n_valid, qw, 0.0)

        A = qw * jax.lax.rsqrt(
            jnp.maximum(jnp.sum(qw * qw, axis=1, keepdims=True), EPS_SQ))

        q3 = q.reshape(Bb, N, D)
        k3 = k.reshape(Bb, N, D)
        G = jnp.sum(A * q3, axis=1, keepdims=True)           # (Bb, 1, D)
        gk = (G * k3).reshape(Bb * N, D)                      # (M, D)

        # Fused tail:  [gk | q] @ [ (Wf Wp)^T ; Wf^T ] + (bf + bp Wf^T)
        gkq = jnp.concatenate([gk, q], axis=-1).astype(mm_t)  # (M, 2D), lane concat
        res = jnp.dot(gkq, wtail_ref[...],
                      preferred_element_type=jnp.float32) + bfin_ref[...]

        out_ref[...] = res.reshape(Bb, N, -1).astype(out_ref.dtype)

    return eaa_kernel


def _full_spec(arr):
    nd = arr.ndim
    return pl.BlockSpec(arr.shape, lambda b, nd=nd: (0,) * nd)


def _device_kind():
    try:
        return jax.devices()[0].device_kind.lower()
    except Exception:
        return ""


def efficient_additive_attention(x, params, token_dim, num_heads=1, *,
                                 batch_block=None, use_bf16_matmul=False):
    """x: (B, N, in_dims) float32. Returns (B, N, token_dim) float32."""
    B, N, C = x.shape
    assert C % 128 == 0, "in_dims must be a multiple of 128 (lane width)"
    D = token_dim * num_heads
    T = token_dim
    HIGH = jax.lax.Precision.HIGHEST

    wq, bq = params["wq"], params["bq"]        # (D, C), (D,)
    wk, bk = params["wk"], params["bk"]        # (D, C), (D,)
    wp, bp = params["wp"], params["bp"]        # (D, D), (D,)
    wf, bf = params["wf"], params["bf"]        # (T, D), (T,)
    wg = params["w_g"]                         # (D, 1)

    # lane-dense output: pad final projection to a multiple of 128 lanes
    T_pad = max(128, ((T + 127) // 128) * 128)
    if T_pad != T:
        wf = jnp.pad(wf, ((0, T_pad - T), (0, 0)))
        bf = jnp.pad(bf, (0, T_pad - T))

    # ---- host-side weight prep: pre-transposed, fused, folded ----
    # fused QK projection + folded w_g column -> (C, 2D + 128)
    wq_g = jnp.matmul(wq.T, wg, precision=HIGH)               # (C, 1)
    bq_g = jnp.matmul(bq.reshape(1, D), wg, precision=HIGH)   # (1, 1)
    wqk = jnp.concatenate(
        [wq.T, wk.T, wq_g, jnp.zeros((C, _GCOL_PAD - 1), wq.dtype)], axis=1)
    bqk = jnp.concatenate(
        [bq, bk, bq_g[0], jnp.zeros((_GCOL_PAD - 1,), bq.dtype)]).reshape(1, -1)

    # fused, folded tail weight: [ (Wf Wp)^T ; Wf^T ]  -> (2D, T_pad)
    wfp = jnp.matmul(wf, wp, precision=HIGH).T                 # (D, T_pad)
    wtail = jnp.concatenate([wfp, wf.T], axis=0)               # (2D, T_pad)
    bfin = (bf + jnp.matmul(bp, wf.T, precision=HIGH)).reshape(1, T_pad)

    x_in = x
    if use_bf16_matmul:     # bf16 MXU inputs / f32 accumulation (v5e/v6e/v7x)
        wqk = wqk.astype(jnp.bfloat16)
        wtail = wtail.astype(jnp.bfloat16)
        x_in = x.astype(jnp.bfloat16)           # halves per-step x-block DMA

    # ---- padding ----
    N_pad = ((N + 7) // 8) * 8                  # sublane alignment of token dim
    if N_pad != N:
        x_in = jnp.pad(x_in, ((0, 0), (0, N_pad - N), (0, 0)))

    # ---- VMEM-budgeted, generation-aware batch blocking ----
    x_itemsize = 2 if use_bf16_matmul else 4
    w_itemsize = 2 if use_bf16_matmul else 4
    w_bytes = (wqk.size + wtail.size) * w_itemsize + (bqk.size + bfin.size) * 4
    # f32 intermediates per matmul row: qk + q + k + gk + gkq + res
    per_row_f32 = (2 * D + _GCOL_PAD) + 2 * D + D + 2 * D + T_pad
    bytes_per_row = per_row_f32 * 4 + 2 * C * x_itemsize + 2 * T_pad * 4

    kind = _device_kind()
    is_v7x = "v7" in kind

    if batch_block is None:
        VMEM_BUDGET = 40 << 20
        max_rows = max(N_pad, (VMEM_BUDGET - 2 * w_bytes) // bytes_per_row)
        target_rows = 1024                      # >=512 rows/step feeds a 256-wide MXU
        rows = max(N_pad, min(target_rows, max_rows))
        batch_block = max(1, min(B, rows // N_pad))
        if is_v7x and B > 1:
            # >=2 (even) grid steps so both v7x TensorCores get equal work;
            # single-TC chips (v5e/v6e) keep one big step (serial loop otherwise).
            steps = max(2, -(-B // batch_block))
            if steps % 2:
                steps += 1
            batch_block = max(1, -(-B // steps))

    Bb = batch_block
    Bp = -(-B // Bb) * Bb
    if Bp != B:
        x_in = jnp.pad(x_in, ((0, Bp - B), (0, 0), (0, 0)))
    grid = (Bp // Bb,)

    est_bytes = 2 * w_bytes + Bb * N_pad * bytes_per_row
    vmem_limit = int(min(56 << 20, max(32 << 20, 2 * est_bytes)))

    out = pl.pallas_call(
        make_eaa_kernel(D, N, N_pad),
        out_shape=jax.ShapeDtypeStruct((Bp, N_pad, T_pad), jnp.float32),
        grid_spec=pltpu.PrefetchScalarGridSpec(
            num_scalar_prefetch=0,
            grid=grid,
            in_specs=[
                pl.BlockSpec((Bb, N_pad, C), lambda b: (b, 0, 0)),   # x block
                _full_spec(wqk), _full_spec(bqk),                    # fused q/k/w_g
                _full_spec(wtail), _full_spec(bfin),                 # fused tail
            ],
            out_specs=pl.BlockSpec((Bb, N_pad, T_pad), lambda b: (b, 0, 0)),
        ),
        compiler_params=pltpu.CompilerParams(
            dimension_semantics=("parallel",),
            vmem_limit_bytes=vmem_limit,
        ),
    )(x_in, wqk, bqk, wtail, bfin)

    return out[:B, :N, :T]


def reference_jax(x, params, token_dim, num_heads=1):
    """Plain-JAX reproduction of the PyTorch forward (un-fused), for checking."""
    HIGH = jax.lax.Precision.HIGHEST
    mm = lambda a, b: jnp.matmul(a, b, precision=HIGH)
    scale = token_dim ** (-0.5)

    def l2n(v, axis):
        n = jnp.sqrt(jnp.sum(v * v, axis=axis, keepdims=True))
        return v / jnp.maximum(n, EPS)

    q = mm(x, params["wq"].T) + params["bq"]
    k = mm(x, params["wk"].T) + params["bk"]
    q = l2n(q, -1)
    k = l2n(k, -1)
    qw = mm(q, params["w_g"])                      # (B, N, 1)
    A = qw * scale
    A = l2n(A, 1)                                  # F.normalize(A, dim=1)
    G = jnp.sum(A * q, axis=1, keepdims=True)      # (B, 1, D)
    out = mm(G * k, params["wp"].T) + params["bp"] + q
    return mm(out, params["wf"].T) + params["bf"]


def init_params(key, in_dims, token_dim, num_heads=1):
    D = token_dim * num_heads
    ks = jax.random.split(key, 9)
    lin = lambda k, o, i: jax.random.normal(k, (o, i), jnp.float32) * (1.0 / jnp.sqrt(i))
    return {
        "wq": lin(ks[0], D, in_dims),
        "bq": jax.random.normal(ks[1], (D,), jnp.float32) * 0.01,
        "wk": lin(ks[2], D, in_dims),
        "bk": jax.random.normal(ks[3], (D,), jnp.float32) * 0.01,
        "w_g": jax.random.normal(ks[4], (D, 1), jnp.float32),
        "wp": lin(ks[5], D, D),
        "bp": jax.random.normal(ks[6], (D,), jnp.float32) * 0.01,
        "wf": lin(ks[7], token_dim, D),
        "bf": jax.random.normal(ks[8], (token_dim,), jnp.float32) * 0.01,
    }


if __name__ == "__main__":
    # DeepFI.post_combine_attn config: in_dims=128, token_dim=128, num_heads=4
    B, N = 8, 32
    in_dims, token_dim, num_heads = 128, 128, 4

    key = jax.random.PRNGKey(0)
    kx, kp = jax.random.split(key)
    x = jax.random.normal(kx, (B, N, in_dims), jnp.float32)
    params = init_params(kp, in_dims, token_dim, num_heads)

    ref = reference_jax(x, params, token_dim, num_heads)

    # f32 path (correctness)
    out = efficient_additive_attention(x, params, token_dim, num_heads)
    out = jax.block_until_ready(out)
    assert out.shape == (B, N, token_dim)
    assert jnp.allclose(out, ref, atol=5e-4, rtol=5e-3), (
        "f32 kernel mismatch vs reference: max abs diff = %g"
        % float(jnp.max(jnp.abs(out - ref))))

    # bf16-MXU deployment path (v5e/v6e/v7x): tolerance-checked vs f32 reference
    out_bf16 = efficient_additive_attention(x, params, token_dim, num_heads,
                                            use_bf16_matmul=True)
    out_bf16 = jax.block_until_ready(out_bf16)
    assert out_bf16.shape == (B, N, token_dim)
    assert bool(jnp.all(jnp.isfinite(out_bf16)))
    assert float(jnp.max(jnp.abs(out_bf16 - ref))) < 5e-2, (
        "bf16 kernel drifted from f32 reference")

    print("KERNEL_OK")
</pallas_src>

<mosaic_0001>
module attributes {stable_mosaic.version = 11 : i64} {
  func.func @eaa_kernel(%arg0: i32, %arg1: memref<8x32x128xf32, #tpu.memory_space<vmem>>, %arg2: memref<128x1152xf32, #tpu.memory_space<vmem>>, %arg3: memref<1x1152xf32, #tpu.memory_space<vmem>>, %arg4: memref<1024x128xf32, #tpu.memory_space<vmem>>, %arg5: memref<1x128xf32, #tpu.memory_space<vmem>>, %arg6: memref<8x32x128xf32, #tpu.memory_space<vmem>>) attributes {dimension_semantics = [#tpu.dimension_semantics<parallel>], iteration_bounds = array<i64: 1>, scalar_prefetch = 0 : i64, scratch_operands = 0 : i64, tpu.core_type = #tpu.core_type<tc>, window_params = [{transform_indices = @transform_0, window_bounds = array<i64: 8, 32, 128>}, {pipeline_mode = #tpu.pipeline_mode<synchronous>, transform_indices = @transform_1, window_bounds = array<i64: 128, 1152>}, {pipeline_mode = #tpu.pipeline_mode<synchronous>, transform_indices = @transform_2, window_bounds = array<i64: 1, 1152>}, {pipeline_mode = #tpu.pipeline_mode<synchronous>, transform_indices = @transform_3, window_bounds = array<i64: 1024, 128>}, {pipeline_mode = #tpu.pipeline_mode<synchronous>, transform_indices = @transform_4, window_bounds = array<i64: 1, 128>}, {transform_indices = @transform_5, window_bounds = array<i64: 8, 32, 128>}]} {
    %c0 = arith.constant 0 : index
    %c0_0 = arith.constant 0 : index
    %c0_1 = arith.constant 0 : index
    %0 = vector.load %arg1[%c0, %c0_0, %c0_1] : memref<8x32x128xf32, #tpu.memory_space<vmem>>, vector<8x32x128xf32>
    %1 = vector.shape_cast %0 : vector<8x32x128xf32> to vector<256x128xf32>
    %c0_2 = arith.constant 0 : index
    %c0_3 = arith.constant 0 : index
    %2 = vector.load %arg2[%c0_2, %c0_3] : memref<128x1152xf32, #tpu.memory_space<vmem>>, vector<128x1152xf32>
    %cst = arith.constant dense<0.000000e+00> : vector<256x1152xf32>
    %3 = tpu.matmul %1, %2, %cst {dimension_numbers = #tpu.dot_dimension_numbers<[1], [0], [0], [1], [0, 0, 1, 1], [], []>} : vector<256x128xf32>, vector<128x1152xf32>, vector<256x1152xf32> -> vector<256x1152xf32>
    %c0_4 = arith.constant 0 : index
    %c0_5 = arith.constant 0 : index
    %4 = vector.load %arg3[%c0_4, %c0_5] : memref<1x1152xf32, #tpu.memory_space<vmem>>, vector<1x1152xf32>
    %5 = vector.broadcast %4 : vector<1x1152xf32> to vector<256x1152xf32>
    %6 = arith.addf %3, %5 : vector<256x1152xf32>
    %7 = vector.extract_strided_slice %6 {offsets = [0, 0], sizes = [256, 512], strides = [1, 1]} : vector<256x1152xf32> to vector<256x512xf32>
    %8 = vector.extract_strided_slice %6 {offsets = [0, 512], sizes = [256, 512], strides = [1, 1]} : vector<256x1152xf32> to vector<256x512xf32>
    %9 = vector.extract_strided_slice %6 {offsets = [0, 1024], sizes = [256, 1], strides = [1, 1]} : vector<256x1152xf32> to vector<256x1xf32>
    %10 = arith.mulf %7, %7 : vector<256x512xf32>
    %cst_6 = arith.constant dense<0.000000e+00> : vector<256xf32>
    %11 = vector.multi_reduction <add>, %10, %cst_6 [1] : vector<256x512xf32> to vector<256xf32>
    %12 = vector.shape_cast %11 : vector<256xf32> to vector<256x1xf32>
    %cst_7 = arith.constant 1.000000e-24 : f32
    %13 = vector.broadcast %cst_7 : f32 to vector<256x1xf32>
    %14 = arith.maximumf %12, %13 : vector<256x1xf32>
    %15 = math.rsqrt %14 : vector<256x1xf32>
    %16 = arith.mulf %8, %8 : vector<256x512xf32>
    %cst_8 = arith.constant dense<0.000000e+00> : vector<256xf32>
    %17 = vector.multi_reduction <add>, %16, %cst_8 [1] : vector<256x512xf32> to vector<256xf32>
    %18 = vector.shape_cast %17 : vector<256xf32> to vector<256x1xf32>
    %cst_9 = arith.constant 1.000000e-24 : f32
    %19 = vector.broadcast %cst_9 : f32 to vector<256x1xf32>
    %20 = arith.maximumf %18, %19 : vector<256x1xf32>
    %21 = math.rsqrt %20 : vector<256x1xf32>
    %22 = vector.broadcast %15 : vector<256x1xf32> to vector<256x512xf32>
    %23 = arith.mulf %7, %22 : vector<256x512xf32>
    %24 = vector.broadcast %21 : vector<256x1xf32> to vector<256x512xf32>
    %25 = arith.mulf %8, %24 : vector<256x512xf32>
    %26 = arith.mulf %9, %15 : vector<256x1xf32>
    %27 = vector.shape_cast %26 : vector<256x1xf32> to vector<8x32x1xf32>
    %28 = arith.mulf %27, %27 : vector<8x32x1xf32>
    %cst_10 = arith.constant dense<0.000000e+00> : vector<8x1xf32>
    %29 = vector.multi_reduction <add>, %28, %cst_10 [1] : vector<8x32x1xf32> to vector<8x1xf32>
    %30 = vector.shape_cast %29 : vector<8x1xf32> to vector<8x1x1xf32>
    %cst_11 = arith.constant 1.000000e-24 : f32
    %31 = vector.broadcast %cst_11 : f32 to vector<8x1x1xf32>
    %32 = arith.maximumf %30, %31 : vector<8x1x1xf32>
    %33 = math.rsqrt %32 : vector<8x1x1xf32>
    %34 = vector.broadcast %33 : vector<8x1x1xf32> to vector<8x32x1xf32>
    %35 = arith.mulf %27, %34 : vector<8x32x1xf32>
    %36 = vector.shape_cast %23 : vector<256x512xf32> to vector<8x32x512xf32>
    %37 = vector.shape_cast %25 : vector<256x512xf32> to vector<8x32x512xf32>
    %38 = vector.broadcast %35 : vector<8x32x1xf32> to vector<8x32x512xf32>
    %39 = arith.mulf %38, %36 : vector<8x32x512xf32>
    %cst_12 = arith.constant dense<0.000000e+00> : vector<8x512xf32>
    %40 = vector.multi_reduction <add>, %39, %cst_12 [1] : vector<8x32x512xf32> to vector<8x512xf32>
    %41 = vector.shape_cast %40 : vector<8x512xf32> to vector<8x1x512xf32>
    %42 = vector.broadcast %41 : vector<8x1x512xf32> to vector<8x32x512xf32>
    %43 = arith.mulf %42, %37 : vector<8x32x512xf32>
    %44 = vector.shape_cast %43 : vector<8x32x512xf32> to vector<256x512xf32>
    %45 = tpu.concatenate %44, %23 in 1 : vector<256x512xf32>, vector<256x512xf32> -> vector<256x1024xf32>
    %c0_13 = arith.constant 0 : index
    %c0_14 = arith.constant 0 : index
    %46 = vector.load %arg4[%c0_13, %c0_14] : memref<1024x128xf32, #tpu.memory_space<vmem>>, vector<1024x128xf32>
    %cst_15 = arith.constant dense<0.000000e+00> : vector<256x128xf32>
    %47 = tpu.matmul %45, %46, %cst_15 {dimension_numbers = #tpu.dot_dimension_numbers<[1], [0], [0], [1], [0, 0, 1, 1], [], []>} : vector<256x1024xf32>, vector<1024x128xf32>, vector<256x128xf32> -> vector<256x128xf32>
    %c0_16 = arith.constant 0 : index
    %c0_17 = arith.constant 0 : index
    %48 = vector.load %arg5[%c0_16, %c0_17] : memref<1x128xf32, #tpu.memory_space<vmem>>, vector<1x128xf32>
    %49 = vector.broadcast %48 : vector<1x128xf32> to vector<256x128xf32>
    %50 = arith.addf %47, %49 : vector<256x128xf32>
    %51 = vector.shape_cast %50 : vector<256x128xf32> to vector<8x32x128xf32>
    %c0_18 = arith.constant 0 : index
    %c0_19 = arith.constant 0 : index
    %c0_20 = arith.constant 0 : index
    %52 = vector.load %arg6[%c0_18, %c0_19, %c0_20] : memref<8x32x128xf32, #tpu.memory_space<vmem>>, vector<8x32x128xf32>
    tpu.vector_store %arg6[%c0_18, %c0_19, %c0_20], %51 {strides = array<i32>} : memref<8x32x128xf32, #tpu.memory_space<vmem>>, vector<8x32x128xf32>,
    return
  }
  func.func @transform_0(%arg0: i32) -> (i32, i32, i32) {
    %c0_i32 = arith.constant 0 : i32
    %c0_i32_0 = arith.constant 0 : i32
    %c0_i32_1 = arith.constant 0 : i32
    return %arg0, %c0_i32, %c0_i32_0 : i32, i32, i32
  }
  func.func @transform_1(%arg0: i32) -> (i32, i32) {
    %c0_i32 = arith.constant 0 : i32
    %c0_i32_0 = arith.constant 0 : i32
    %c0_i32_1 = arith.constant 0 : i32
    return %c0_i32, %c0_i32_0 : i32, i32
  }
  func.func @transform_2(%arg0: i32) -> (i32, i32) {
    %c0_i32 = arith.constant 0 : i32
    %c0_i32_0 = arith.constant 0 : i32
    %c0_i32_1 = arith.constant 0 : i32
    return %c0_i32, %c0_i32_0 : i32, i32
  }
  func.func @transform_3(%arg0: i32) -> (i32, i32) {
    %c0_i32 = arith.constant 0 : i32
    %c0_i32_0 = arith.constant 0 : i32
    %c0_i32_1 = arith.constant 0 : i32
    return %c0_i32, %c0_i32_0 : i32, i32
  }
  func.func @transform_4(%arg0: i32) -> (i32, i32) {
    %c0_i32 = arith.constant 0 : i32
    %c0_i32_0 = arith.constant 0 : i32
    %c0_i32_1 = arith.constant 0 : i32
    return %c0_i32, %c0_i32_0 : i32, i32
  }
  func.func @transform_5(%arg0: i32) -> (i32, i32, i32) {
    %c0_i32 = arith.constant 0 : i32
    %c0_i32_0 = arith.constant 0 : i32
    %c0_i32_1 = arith.constant 0 : i32
    return %arg0, %c0_i32, %c0_i32_0 : i32, i32, i32
  }
}

</mosaic_0001>

<llo_original>
// kernel: tpu_custom_call.1
$region0: #{tpu_custom_call.1}
  #allocation0 [shape = 'u32[]', space=smem, size = 0x4, offset = 0x4, fixed_abs, tag = 'smem constant byte address 0x4 - core index']
  #allocation1 [shape = 'u32[72,128]{1,0:T(1,128)}', space=vmem, size = 0x9000, scoped, tag = 'internal scratch']
  %s0 = inlined_call_operand.hbm [shape: f32[8,32,128], index: 0, kind: input, shape index: {}]
  %s1 = inlined_call_operand.hbm [shape: f32[128,1152], index: 1, kind: input, shape index: {}]
  %s2 = inlined_call_operand.hbm [shape: f32[1,1152], index: 2, kind: input, shape index: {}]
  %s3 = inlined_call_operand.hbm [shape: f32[1024,128], index: 3, kind: input, shape index: {}]
  %s4 = inlined_call_operand.vmem [shape: f32[1,128], index: 4, kind: input, shape index: {}]
  %s5 = inlined_call_operand.hbm [shape: f32[8,32,128], index: 5, kind: output, shape index: {}]
  %s6 = sld [smem:[#allocation0]]
  $region46: #{tpu_custom_call.1} parent=0
    _
  %s8 = ssub.s32 1, %s6
  %s9 = scalar_select 0, %s8, %s6
  $region1: #{tpu_custom_call.1} parent=0
    #allocation2 [shape = 'u8[131072]{0}', space=vmem, size = 0x20000, scoped, tag = 'input window, operand 0, single buffered']
    #allocation3 [shape = 's32[1]{0}', space=sflag, size = 0x4, scoped, tag = 'scoped memory for tpu_custom_call.1']
    #allocation4 [shape = 's32[1]{0}', space=sflag, size = 0x4, scoped, tag = 'scoped memory for tpu_custom_call.1']
    #allocation5 [shape = 'u8[589824]{0}', space=vmem, size = 0x90000, scoped, tag = 'input window, operand 1, single buffered']
    #allocation6 [shape = 's32[1]{0}', space=sflag, size = 0x4, scoped, tag = 'scoped memory for tpu_custom_call.1']
    #allocation7 [shape = 'u8[4608]{0}', space=vmem, size = 0x1400, scoped, tag = 'input window, operand 2, single buffered']
    #allocation8 [shape = 'u8[524288]{0}', space=vmem, size = 0x80000, scoped, tag = 'input window, operand 3, single buffered']
    #allocation9 [shape = 's32[1]{0}', space=sflag, size = 0x4, scoped, tag = 'scoped memory for tpu_custom_call.1']
    #allocation10 [shape = 'u8[131072]{0}', space=vmem, size = 0x20000, scoped, tag = 'output window, operand 0, single buffered']
    %10 = vsyncpa [#allocation3], 0
    %11 = vsyncpa [#allocation6], 0
    %12 = vsyncpa [#allocation9], 0
    %13 = vsyncpa [#allocation4], 0
    // Predicated region
    $region2: #{tpu_custom_call.1} parent=1 // pred_check
      _
    $region3: #{tpu_custom_call.1} parent=1 // pred_check_branch
      %15 = sbr.rel (0) target = $region5
    $region4: #{tpu_custom_call.1} parent=1 // pred_region
      %17 = vsyncadd [#allocation3], 0
      %s18 = sshll.u32 %s0, 4
      %s19 = int_to_ptr.hbm [resolvable:$true] %s18
      %s20 = sshll.u32 [#allocation2], 4
      %s21 = int_to_ptr.vmem [resolvable:$true] %s20
      %26 = dma.hbm_to_vmem [thread:$0]  %s19, 4096, %s21, [#allocation3], 128, 128, 8
    $region5: #{tpu_custom_call.1} parent=1 // pred_fallthru
      _
    // Predicated region
    $region6: #{tpu_custom_call.1} parent=1 // pred_check
      _
    $region7: #{tpu_custom_call.1} parent=1 // pred_check_branch
      %28 = sbr.rel (0) target = $region9
    $region8: #{tpu_custom_call.1} parent=1 // pred_region
      %30 = vsyncadd [#allocation6], 0
      %s31 = sshll.u32 %s1, 4
      %s32 = int_to_ptr.hbm [resolvable:$true] %s31
      %s33 = sshll.u32 [#allocation5], 4
      %s34 = int_to_ptr.vmem [resolvable:$true] %s33
      %39 = dma.hbm_to_vmem [thread:$0]  %s32, 18432, %s34, [#allocation6], 1152, 1152, 72
    $region9: #{tpu_custom_call.1} parent=1 // pred_fallthru
      _
    // Predicated region
    $region10: #{tpu_custom_call.1} parent=1 // pred_check
      _
    $region11: #{tpu_custom_call.1} parent=1 // pred_check_branch
      %41 = sbr.rel (0) target = $region13
    $region12: #{tpu_custom_call.1} parent=1 // pred_region
      %43 = vsyncadd [#allocation6], 0
      %s45 = sshll.u32 %s2, 4
      %s46 = int_to_ptr.hbm [resolvable:$true] %s45
      %s47 = sshll.u32 [#allocation7], 4
      %s48 = int_to_ptr.vmem [resolvable:$true] %s47
      %50 = dma.hbm_to_vmem [thread:$0]  %s46, 144, %s48, [#allocation6]
    $region13: #{tpu_custom_call.1} parent=1 // pred_fallthru
      _
    // Predicated region
    $region14: #{tpu_custom_call.1} parent=1 // pred_check
      _
    $region15: #{tpu_custom_call.1} parent=1 // pred_check_branch
      %52 = sbr.rel (0) target = $region17
    $region16: #{tpu_custom_call.1} parent=1 // pred_region
      %54 = vsyncadd [#allocation9], 0
      %s55 = sshll.u32 %s3, 4
      %s56 = int_to_ptr.hbm [resolvable:$true] %s55
      %s57 = sshll.u32 [#allocation8], 4
      %s58 = int_to_ptr.vmem [resolvable:$true] %s57
      %63 = dma.hbm_to_vmem [thread:$0]  %s56, 16384, %s58, [#allocation9], 128, 128, 8
    $region17: #{tpu_custom_call.1} parent=1 // pred_fallthru
      _
    // Predicated region
    $region18: #{tpu_custom_call.1} parent=1 // pred_check
      _
    $region19: #{tpu_custom_call.1} parent=1 // pred_check_branch
      %65 = sbr.rel (0) target = $region21
    $region20: #{tpu_custom_call.1} parent=1 // pred_region
      _
    $region21: #{tpu_custom_call.1} parent=1 // pred_fallthru
      _
    // Predicated region
    $region22: #{tpu_custom_call.1} parent=1 // pred_check
      _
    $region23: #{tpu_custom_call.1} parent=1 // pred_check_branch
      %67 = sbr.rel (0) target = $region25
    $region24: #{tpu_custom_call.1} parent=1 // pred_region
      %69 = dma.done [#allocation3], 4096
    $region25: #{tpu_custom_call.1} parent=1 // pred_fallthru
      _
    // Predicated region
    $region26: #{tpu_custom_call.1} parent=1 // pred_check
      _
    $region27: #{tpu_custom_call.1} parent=1 // pred_check_branch
      %71 = sbr.rel (0) target = $region29
    $region28: #{tpu_custom_call.1} parent=1 // pred_region
      %73 = dma.done [#allocation6], 18432
    $region29: #{tpu_custom_call.1} parent=1 // pred_fallthru
      _
    // Predicated region
    $region30: #{tpu_custom_call.1} parent=1 // pred_check
      _
    $region31: #{tpu_custom_call.1} parent=1 // pred_check_branch
      %75 = sbr.rel (0) target = $region33
    $region32: #{tpu_custom_call.1} parent=1 // pred_region
      %77 = dma.done [#allocation6], 144
    $region33: #{tpu_custom_call.1} parent=1 // pred_fallthru
      _
    // Predicated region
    $region34: #{tpu_custom_call.1} parent=1 // pred_check
      _
    $region35: #{tpu_custom_call.1} parent=1 // pred_check_branch
      %79 = sbr.rel (0) target = $region37
    $region36: #{tpu_custom_call.1} parent=1 // pred_region
      %81 = dma.done [#allocation9], 16384
    $region37: #{tpu_custom_call.1} parent=1 // pred_fallthru
      _
    %v82 = vld [vmem:[#allocation2] sm:$0xff]
    %v83 = vld [vmem:[#allocation2 + $0x8] sm:$0xff]
    %v84 = vld [vmem:[#allocation2 + $0x10] sm:$0xff]
    %v85 = vld [vmem:[#allocation2 + $0x18] sm:$0xff]
    %v86 = vld [vmem:[#allocation2 + $0x20] sm:$0xff]
    %v87 = vld [vmem:[#allocation2 + $0x28] sm:$0xff]
    %v88 = vld [vmem:[#allocation2 + $0x30] sm:$0xff]
    %v89 = vld [vmem:[#allocation2 + $0x38] sm:$0xff]
    %v90 = vld [vmem:[#allocation2 + $0x40] sm:$0xff]
    %v91 = vld [vmem:[#allocation2 + $0x48] sm:$0xff]
    %v92 = vld [vmem:[#allocation2 + $0x50] sm:$0xff]
    %v93 = vld [vmem:[#allocation2 + $0x58] sm:$0xff]
    %v94 = vld [vmem:[#allocation2 + $0x60] sm:$0xff]
    %v95 = vld [vmem:[#allocation2 + $0x68] sm:$0xff]
    %v96 = vld [vmem:[#allocation2 + $0x70] sm:$0xff]
    %v97 = vld [vmem:[#allocation2 + $0x78] sm:$0xff]
    %v98 = vld [vmem:[#allocation2 + $0x80] sm:$0xff]
    %v99 = vld [vmem:[#allocation2 + $0x88] sm:$0xff]
    %v100 = vld [vmem:[#allocation2 + $0x90] sm:$0xff]
    %v101 = vld [vmem:[#allocation2 + $0x98] sm:$0xff]
    %v102 = vld [vmem:[#allocation2 + $0xa0] sm:$0xff]
    %v103 = vld [vmem:[#allocation2 + $0xa8] sm:$0xff]
    %v104 = vld [vmem:[#allocation2 + $0xb0] sm:$0xff]
    %v105 = vld [vmem:[#allocation2 + $0xb8] sm:$0xff]
    %v106 = vld [vmem:[#allocation2 + $0xc0] sm:$0xff]
    %v107 = vld [vmem:[#allocation2 + $0xc8] sm:$0xff]
    %v108 = vld [vmem:[#allocation2 + $0xd0] sm:$0xff]
    %v109 = vld [vmem:[#allocation2 + $0xd8] sm:$0xff]
    %v110 = vld [vmem:[#allocation2 + $0xe0] sm:$0xff]
    %v111 = vld [vmem:[#allocation2 + $0xe8] sm:$0xff]
    %v112 = vld [vmem:[#allocation2 + $0xf0] sm:$0xff]
    %v113 = vld [vmem:[#allocation2 + $0xf8] sm:$0xff]
    %v114 = vld [vmem:[#allocation5] sm:$0xff]
    %v115 = vld [vmem:[#allocation5 + $0x8] sm:$0xff]
    %v116 = vld [vmem:[#allocation5 + $0x10] sm:$0xff]
    %v117 = vld [vmem:[#allocation5 + $0x18] sm:$0xff]
    %v118 = vld [vmem:[#allocation5 + $0x20] sm:$0xff]
    %v119 = vld [vmem:[#allocation5 + $0x28] sm:$0xff]
    %v120 = vld [vmem:[#allocation5 + $0x30] sm:$0xff]
    %v121 = vld [vmem:[#allocation5 + $0x38] sm:$0xff]
    %v122 = vld [vmem:[#allocation5 + $0x40] sm:$0xff]
    %v123 = vld [vmem:[#allocation5 + $0x48] sm:$0xff]
    %v124 = vld [vmem:[#allocation5 + $0x50] sm:$0xff]
    %v125 = vld [vmem:[#allocation5 + $0x58] sm:$0xff]
    %v126 = vld [vmem:[#allocation5 + $0x60] sm:$0xff]
    %v127 = vld [vmem:[#allocation5 + $0x68] sm:$0xff]
    %v128 = vld [vmem:[#allocation5 + $0x70] sm:$0xff]
    %v129 = vld [vmem:[#allocation5 + $0x78] sm:$0xff]
    %v130 = vld [vmem:[#allocation5 + $0x80] sm:$0xff]
    %v131 = vld [vmem:[#allocation5 + $0x88] sm:$0xff]
    %v132 = vld [vmem:[#allocation5 + $0x90] sm:$0xff]
    %v133 = vld [vmem:[#allocation5 + $0x98] sm:$0xff]
    %v134 = vld [vmem:[#allocation5 + $0xa0] sm:$0xff]
    %v135 = vld [vmem:[#allocation5 + $0xa8] sm:$0xff]
    %v136 = vld [vmem:[#allocation5 + $0xb0] sm:$0xff]
    %v137 = vld [vmem:[#allocation5 + $0xb8] sm:$0xff]
    %v138 = vld [vmem:[#allocation5 + $0xc0] sm:$0xff]
    %v139 = vld [vmem:[#allocation5 + $0xc8] sm:$0xff]
    %v140 = vld [vmem:[#allocation5 + $0xd0] sm:$0xff]
    %v141 = vld [vmem:[#allocation5 + $0xd8] sm:$0xff]
    %v142 = vld [vmem:[#allocation5 + $0xe0] sm:$0xff]
    %v143 = vld [vmem:[#allocation5 + $0xe8] sm:$0xff]
    %v144 = vld [vmem:[#allocation5 + $0xf0] sm:$0xff]
    %v145 = vld [vmem:[#allocation5 + $0xf8] sm:$0xff]
    %v146 = vld [vmem:[#allocation5 + $0x100] sm:$0xff]
    %v147 = vld [vmem:[#allocation5 + $0x108] sm:$0xff]
    %v148 = vld [vmem:[#allocation5 + $0x110] sm:$0xff]
    %v149 = vld [vmem:[#allocation5 + $0x118] sm:$0xff]
    %v150 = vld [vmem:[#allocation5 + $0x120] sm:$0xff]
    %v151 = vld [vmem:[#allocation5 + $0x128] sm:$0xff]
    %v152 = vld [vmem:[#allocation5 + $0x130] sm:$0xff]
    %v153 = vld [vmem:[#allocation5 + $0x138] sm:$0xff]
    %v154 = vld [vmem:[#allocation5 + $0x140] sm:$0xff]
    %v155 = vld [vmem:[#allocation5 + $0x148] sm:$0xff]
    %v156 = vld [vmem:[#allocation5 + $0x150] sm:$0xff]
    %v157 = vld [vmem:[#allocation5 + $0x158] sm:$0xff]
    %v158 = vld [vmem:[#allocation5 + $0x160] sm:$0xff]
    %v159 = vld [vmem:[#allocation5 + $0x168] sm:$0xff]
    %v160 = vld [vmem:[#allocation5 + $0x170] sm:$0xff]
    %v161 = vld [vmem:[#allocation5 + $0x178] sm:$0xff]
    %v162 = vld [vmem:[#allocation5 + $0x180] sm:$0xff]
    %v163 = vld [vmem:[#allocation5 + $0x188] sm:$0xff]
    %v164 = vld [vmem:[#allocation5 + $0x190] sm:$0xff]
    %v165 = vld [vmem:[#allocation5 + $0x198] sm:$0xff]
    %v166 = vld [vmem:[#allocation5 + $0x1a0] sm:$0xff]
    %v167 = vld [vmem:[#allocation5 + $0x1a8] sm:$0xff]
    %v168 = vld [vmem:[#allocation5 + $0x1b0] sm:$0xff]
    %v169 = vld [vmem:[#allocation5 + $0x1b8] sm:$0xff]
    %v170 = vld [vmem:[#allocation5 + $0x1c0] sm:$0xff]
    %v171 = vld [vmem:[#allocation5 + $0x1c8] sm:$0xff]
    %v172 = vld [vmem:[#allocation5 + $0x1d0] sm:$0xff]
    %v173 = vld [vmem:[#allocation5 + $0x1d8] sm:$0xff]
    %v174 = vld [vmem:[#allocation5 + $0x1e0] sm:$0xff]
    %v175 = vld [vmem:[#allocation5 + $0x1e8] sm:$0xff]
    %v176 = vld [vmem:[#allocation5 + $0x1f0] sm:$0xff]
    %v177 = vld [vmem:[#allocation5 + $0x1f8] sm:$0xff]
    %v178 = vld [vmem:[#allocation5 + $0x200] sm:$0xff]
    %v179 = vld [vmem:[#allocation5 + $0x208] sm:$0xff]
    %v180 = vld [vmem:[#allocation5 + $0x210] sm:$0xff]
    %v181 = vld [vmem:[#allocation5 + $0x218] sm:$0xff]
    %v182 = vld [vmem:[#allocation5 + $0x220] sm:$0xff]
    %v183 = vld [vmem:[#allocation5 + $0x228] sm:$0xff]
    %v184 = vld [vmem:[#allocation5 + $0x230] sm:$0xff]
    %v185 = vld [vmem:[#allocation5 + $0x238] sm:$0xff]
    %v186 = vld [vmem:[#allocation5 + $0x240] sm:$0xff]
    %v187 = vld [vmem:[#allocation5 + $0x248] sm:$0xff]
    %v188 = vld [vmem:[#allocation5 + $0x250] sm:$0xff]
    %v189 = vld [vmem:[#allocation5 + $0x258] sm:$0xff]
    %v190 = vld [vmem:[#allocation5 + $0x260] sm:$0xff]
    %v191 = vld [vmem:[#allocation5 + $0x268] sm:$0xff]
    %v192 = vld [vmem:[#allocation5 + $0x270] sm:$0xff]
    %v193 = vld [vmem:[#allocation5 + $0x278] sm:$0xff]
    %v194 = vld [vmem:[#allocation5 + $0x280] sm:$0xff]
    %v195 = vld [vmem:[#allocation5 + $0x288] sm:$0xff]
    %v196 = vld [vmem:[#allocation5 + $0x290] sm:$0xff]
    %v197 = vld [vmem:[#allocation5 + $0x298] sm:$0xff]
    %v198 = vld [vmem:[#allocation5 + $0x2a0] sm:$0xff]
    %v199 = vld [vmem:[#allocation5 + $0x2a8] sm:$0xff]
    %v200 = vld [vmem:[#allocation5 + $0x2b0] sm:$0xff]
    %v201 = vld [vmem:[#allocation5 + $0x2b8] sm:$0xff]
    %v202 = vld [vmem:[#allocation5 + $0x2c0] sm:$0xff]
    %v203 = vld [vmem:[#allocation5 + $0x2c8] sm:$0xff]
    %v204 = vld [vmem:[#allocation5 + $0x2d0] sm:$0xff]
    %v205 = vld [vmem:[#allocation5 + $0x2d8] sm:$0xff]
    %v206 = vld [vmem:[#allocation5 + $0x2e0] sm:$0xff]
    %v207 = vld [vmem:[#allocation5 + $0x2e8] sm:$0xff]
    %v208 = vld [vmem:[#allocation5 + $0x2f0] sm:$0xff]
    %v209 = vld [vmem:[#allocation5 + $0x2f8] sm:$0xff]
    %v210 = vld [vmem:[#allocation5 + $0x300] sm:$0xff]
    %v211 = vld [vmem:[#allocation5 + $0x308] sm:$0xff]
    %v212 = vld [vmem:[#allocation5 + $0x310] sm:$0xff]
    %v213 = vld [vmem:[#allocation5 + $0x318] sm:$0xff]
    %v214 = vld [vmem:[#allocation5 + $0x320] sm:$0xff]
    %v215 = vld [vmem:[#allocation5 + $0x328] sm:$0xff]
    %v216 = vld [vmem:[#allocation5 + $0x330] sm:$0xff]
    %v217 = vld [vmem:[#allocation5 + $0x338] sm:$0xff]
    %v218 = vld [vmem:[#allocation5 + $0x340] sm:$0xff]
    %v219 = vld [vmem:[#allocation5 + $0x348] sm:$0xff]
    %v220 = vld [vmem:[#allocation5 + $0x350] sm:$0xff]
    %v221 = vld [vmem:[#allocation5 + $0x358] sm:$0xff]
    %v222 = vld [vmem:[#allocation5 + $0x360] sm:$0xff]
    %v223 = vld [vmem:[#allocation5 + $0x368] sm:$0xff]
    %v224 = vld [vmem:[#allocation5 + $0x370] sm:$0xff]
    %v225 = vld [vmem:[#allocation5 + $0x378] sm:$0xff]
    %v226 = vld [vmem:[#allocation5 + $0x380] sm:$0xff]
    %v227 = vld [vmem:[#allocation5 + $0x388] sm:$0xff]
    %v228 = vld [vmem:[#allocation5 + $0x390] sm:$0xff]
    %v229 = vld [vmem:[#allocation5 + $0x398] sm:$0xff]
    %v230 = vld [vmem:[#allocation5 + $0x3a0] sm:$0xff]
    %v231 = vld [vmem:[#allocation5 + $0x3a8] sm:$0xff]
    %v232 = vld [vmem:[#allocation5 + $0x3b0] sm:$0xff]
    %v233 = vld [vmem:[#allocation5 + $0x3b8] sm:$0xff]
    %v234 = vld [vmem:[#allocation5 + $0x3c0] sm:$0xff]
    %v235 = vld [vmem:[#allocation5 + $0x3c8] sm:$0xff]
    %v236 = vld [vmem:[#allocation5 + $0x3d0] sm:$0xff]
    %v237 = vld [vmem:[#allocation5 + $0x3d8] sm:$0xff]
    %v238 = vld [vmem:[#allocation5 + $0x3e0] sm:$0xff]
    %v239 = vld [vmem:[#allocation5 + $0x3e8] sm:$0xff]
    %v240 = vld [vmem:[#allocation5 + $0x3f0] sm:$0xff]
    %v241 = vld [vmem:[#allocation5 + $0x3f8] sm:$0xff]
    %v242 = vld [vmem:[#allocation5 + $0x400] sm:$0xff]
    %v243 = vld [vmem:[#allocation5 + $0x408] sm:$0xff]
    %v244 = vld [vmem:[#allocation5 + $0x410] sm:$0xff]
    %v245 = vld [vmem:[#allocation5 + $0x418] sm:$0xff]
    %v246 = vld [vmem:[#allocation5 + $0x420] sm:$0xff]
    %v247 = vld [vmem:[#allocation5 + $0x428] sm:$0xff]
    %v248 = vld [vmem:[#allocation5 + $0x430] sm:$0xff]
    %v249 = vld [vmem:[#allocation5 + $0x438] sm:$0xff]
    %v250 = vld [vmem:[#allocation5 + $0x440] sm:$0xff]
    %v251 = vld [vmem:[#allocation5 + $0x448] sm:$0xff]
    %v252 = vld [vmem:[#allocation5 + $0x450] sm:$0xff]
    %v253 = vld [vmem:[#allocation5 + $0x458] sm:$0xff]
    %v254 = vld [vmem:[#allocation5 + $0x460] sm:$0xff]
    %v255 = vld [vmem:[#allocation5 + $0x468] sm:$0xff]
    %v256 = vld [vmem:[#allocation5 + $0x470] sm:$0xff]
    %v257 = vld [vmem:[#allocation5 + $0x478] sm:$0xff]
    %v258 = vld [vmem:[#allocation7] sm:$0xff]
    %v259 = vld [vmem:[#allocation7 + $0x8] sm:$0x1]
    %v262 = vperm.slane %v258, 0
    %v263 = vperm.slane %v258, 1
    %v264 = vperm.slane %v258, 2
    %v265 = vperm.slane %v258, 3
    %v266 = vperm.slane %v258, 4
    %v267 = vperm.slane %v258, 5
    %v268 = vperm.slane %v258, 6
    %v269 = vperm.slane %v258, 7
    %v270 = vperm.slane %v259, 0
    %280 = vmatpush.msra.mxu0 %v249
    %281 = vmatpush.msra.mxu0 %v240
    %282 = vmatpush.msra.mxu0 %v231
    %283 = vmatpush.msra.mxu0 %v222
    %284 = vmatpush.msra.mxu0 %v213
    %285 = vmatpush.msra.mxu0 %v204
    %286 = vmatpush.msra.mxu0 %v195
    %287 = vmatpush.msra.mxu0 %v186
    %288 = vmatpush.msra.mxu0 %v177
    %289 = vmatpush.msra.mxu0 %v168
    %290 = vmatpush.msra.mxu0 %v159
    %291 = vmatpush.msra.mxu0 %v150
    %292 = vmatpush.msra.mxu0 %v141
    %293 = vmatpush.msra.mxu0 %v132
    %294 = vmatpush.msra.mxu0 %v123
    %295 = vmatpush.msra.mxu0 %v114
    %296 = vmatmul.f32.gmra.mxu0 %v82
    %v297 = vpop.f32.mrf.mxu0
    %v298 = vadd.f32 %v262, %v297
    %299 = vmatmul.f32.gmra.mxu0 %v83
    %v300 = vpop.f32.mrf.mxu0
    %v301 = vadd.f32 %v262, %v300
    %302 = vmatmul.f32.gmra.mxu0 %v84
    %v303 = vpop.f32.mrf.mxu0
    %v304 = vadd.f32 %v262, %v303
    %305 = vmatmul.f32.gmra.mxu0 %v85
    %v306 = vpop.f32.mrf.mxu0
    %v307 = vadd.f32 %v262, %v306
    %308 = vmatmul.f32.gmra.mxu0 %v86
    %v309 = vpop.f32.mrf.mxu0
    %v310 = vadd.f32 %v262, %v309
    %311 = vmatmul.f32.gmra.mxu0 %v87
    %v312 = vpop.f32.mrf.mxu0
    %v313 = vadd.f32 %v262, %v312
    %314 = vmatmul.f32.gmra.mxu0 %v88
    %v315 = vpop.f32.mrf.mxu0
    %v316 = vadd.f32 %v262, %v315
    %317 = vmatmul.f32.gmra.mxu0 %v89
    %v318 = vpop.f32.mrf.mxu0
    %v319 = vadd.f32 %v262, %v318
    %320 = vmatmul.f32.gmra.mxu0 %v90
    %v321 = vpop.f32.mrf.mxu0
    %v322 = vadd.f32 %v262, %v321
    %323 = vmatmul.f32.gmra.mxu0 %v91
    %v324 = vpop.f32.mrf.mxu0
    %v325 = vadd.f32 %v262, %v324
    %326 = vmatmul.f32.gmra.mxu0 %v92
    %v327 = vpop.f32.mrf.mxu0
    %v328 = vadd.f32 %v262, %v327
    %329 = vmatmul.f32.gmra.mxu0 %v93
    %v330 = vpop.f32.mrf.mxu0
    %v331 = vadd.f32 %v262, %v330
    %332 = vmatmul.f32.gmra.mxu0 %v94
    %v333 = vpop.f32.mrf.mxu0
    %v334 = vadd.f32 %v262, %v333
    %335 = vmatmul.f32.gmra.mxu0 %v95
    %v336 = vpop.f32.mrf.mxu0
    %v337 = vadd.f32 %v262, %v336
    %338 = vmatmul.f32.gmra.mxu0 %v96
    %v339 = vpop.f32.mrf.mxu0
    %v340 = vadd.f32 %v262, %v339
    %341 = vmatmul.f32.gmra.mxu0 %v97
    %v342 = vpop.f32.mrf.mxu0
    %v343 = vadd.f32 %v262, %v342
    %344 = vmatmul.f32.gmra.mxu0 %v98
    %v345 = vpop.f32.mrf.mxu0
    %v346 = vadd.f32 %v262, %v345
    %347 = vmatmul.f32.gmra.mxu0 %v99
    %v348 = vpop.f32.mrf.mxu0
    %v349 = vadd.f32 %v262, %v348
    %350 = vmatmul.f32.gmra.mxu0 %v100
    %v351 = vpop.f32.mrf.mxu0
    %v352 = vadd.f32 %v262, %v351
    %353 = vmatmul.f32.gmra.mxu0 %v101
    %v354 = vpop.f32.mrf.mxu0
    %v355 = vadd.f32 %v262, %v354
    %356 = vmatmul.f32.gmra.mxu0 %v102
    %v357 = vpop.f32.mrf.mxu0
    %v358 = vadd.f32 %v262, %v357
    %359 = vmatmul.f32.gmra.mxu0 %v103
    %v360 = vpop.f32.mrf.mxu0
    %v361 = vadd.f32 %v262, %v360
    %362 = vmatmul.f32.gmra.mxu0 %v104
    %v363 = vpop.f32.mrf.mxu0
    %v364 = vadd.f32 %v262, %v363
    %365 = vmatmul.f32.gmra.mxu0 %v105
    %v366 = vpop.f32.mrf.mxu0
    %v367 = vadd.f32 %v262, %v366
    %368 = vmatmul.f32.gmra.mxu0 %v106
    %v369 = vpop.f32.mrf.mxu0
    %v370 = vadd.f32 %v262, %v369
    %371 = vmatmul.f32.gmra.mxu0 %v107
    %v372 = vpop.f32.mrf.mxu0
    %v373 = vadd.f32 %v262, %v372
    %374 = vmatmul.f32.gmra.mxu0 %v108
    %v375 = vpop.f32.mrf.mxu0
    %v376 = vadd.f32 %v262, %v375
    %377 = vmatmul.f32.gmra.mxu0 %v109
    %v378 = vpop.f32.mrf.mxu0
    %v379 = vadd.f32 %v262, %v378
    %380 = vmatmul.f32.gmra.mxu0 %v110
    %v381 = vpop.f32.mrf.mxu0
    %v382 = vadd.f32 %v262, %v381
    %383 = vmatmul.f32.gmra.mxu0 %v111
    %v384 = vpop.f32.mrf.mxu0
    %v385 = vadd.f32 %v262, %v384
    %386 = vmatmul.f32.gmra.mxu0 %v112
    %v387 = vpop.f32.mrf.mxu0
    %v388 = vadd.f32 %v262, %v387
    %389 = vmatmul.f32.gmra.mxu0 %v113
    %v390 = vpop.f32.mrf.mxu0
    %v391 = vadd.f32 %v262, %v390
    %392 = vdwg.mxu0
    %393 = vmatpush.msra.mxu0 %v250
    %394 = vmatpush.msra.mxu0 %v241
    %395 = vmatpush.msra.mxu0 %v232
    %396 = vmatpush.msra.mxu0 %v223
    %397 = vmatpush.msra.mxu0 %v214
    %398 = vmatpush.msra.mxu0 %v205
    %399 = vmatpush.msra.mxu0 %v196
    %400 = vmatpush.msra.mxu0 %v187
    %401 = vmatpush.msra.mxu0 %v178
    %402 = vmatpush.msra.mxu0 %v169
    %403 = vmatpush.msra.mxu0 %v160
    %404 = vmatpush.msra.mxu0 %v151
    %405 = vmatpush.msra.mxu0 %v142
    %406 = vmatpush.msra.mxu0 %v133
    %407 = vmatpush.msra.mxu0 %v124
    %408 = vmatpush.msra.mxu0 %v115
    %409 = vmatmul.f32.gmra.mxu0 %v82
    %v410 = vpop.f32.mrf.mxu0
    %v411 = vadd.f32 %v263, %v410
    %412 = vmatmul.f32.gmra.mxu0 %v83
    %v413 = vpop.f32.mrf.mxu0
    %v414 = vadd.f32 %v263, %v413
    %415 = vmatmul.f32.gmra.mxu0 %v84
    %v416 = vpop.f32.mrf.mxu0
    %v417 = vadd.f32 %v263, %v416
    %418 = vmatmul.f32.gmra.mxu0 %v85
    %v419 = vpop.f32.mrf.mxu0
    %v420 = vadd.f32 %v263, %v419
    %421 = vmatmul.f32.gmra.mxu0 %v86
    %v422 = vpop.f32.mrf.mxu0
    %v423 = vadd.f32 %v263, %v422
    %424 = vmatmul.f32.gmra.mxu0 %v87
    %v425 = vpop.f32.mrf.mxu0
    %v426 = vadd.f32 %v263, %v425
    %427 = vmatmul.f32.gmra.mxu0 %v88
    %v428 = vpop.f32.mrf.mxu0
    %v429 = vadd.f32 %v263, %v428
    %430 = vmatmul.f32.gmra.mxu0 %v89
    %v431 = vpop.f32.mrf.mxu0
    %v432 = vadd.f32 %v263, %v431
    %433 = vmatmul.f32.gmra.mxu0 %v90
    %v434 = vpop.f32.mrf.mxu0
    %v435 = vadd.f32 %v263, %v434
    %436 = vmatmul.f32.gmra.mxu0 %v91
    %v437 = vpop.f32.mrf.mxu0
    %v438 = vadd.f32 %v263, %v437
    %439 = vmatmul.f32.gmra.mxu0 %v92
    %v440 = vpop.f32.mrf.mxu0
    %v441 = vadd.f32 %v263, %v440
    %442 = vmatmul.f32.gmra.mxu0 %v93
    %v443 = vpop.f32.mrf.mxu0
    %v444 = vadd.f32 %v263, %v443
    %445 = vmatmul.f32.gmra.mxu0 %v94
    %v446 = vpop.f32.mrf.mxu0
    %v447 = vadd.f32 %v263, %v446
    %448 = vmatmul.f32.gmra.mxu0 %v95
    %v449 = vpop.f32.mrf.mxu0
    %v450 = vadd.f32 %v263, %v449
    %451 = vmatmul.f32.gmra.mxu0 %v96
    %v452 = vpop.f32.mrf.mxu0
    %v453 = vadd.f32 %v263, %v452
    %454 = vmatmul.f32.gmra.mxu0 %v97
    %v455 = vpop.f32.mrf.mxu0
    %v456 = vadd.f32 %v263, %v455
    %457 = vmatmul.f32.gmra.mxu0 %v98
    %v458 = vpop.f32.mrf.mxu0
    %v459 = vadd.f32 %v263, %v458
    %460 = vmatmul.f32.gmra.mxu0 %v99
    %v461 = vpop.f32.mrf.mxu0
    %v462 = vadd.f32 %v263, %v461
    %463 = vmatmul.f32.gmra.mxu0 %v100
    %v464 = vpop.f32.mrf.mxu0
    %v465 = vadd.f32 %v263, %v464
    %466 = vmatmul.f32.gmra.mxu0 %v101
    %v467 = vpop.f32.mrf.mxu0
    %v468 = vadd.f32 %v263, %v467
    %469 = vmatmul.f32.gmra.mxu0 %v102
    %v470 = vpop.f32.mrf.mxu0
    %v471 = vadd.f32 %v263, %v470
    %472 = vmatmul.f32.gmra.mxu0 %v103
    %v473 = vpop.f32.mrf.mxu0
    %v474 = vadd.f32 %v263, %v473
    %475 = vmatmul.f32.gmra.mxu0 %v104
    %v476 = vpop.f32.mrf.mxu0
    %v477 = vadd.f32 %v263, %v476
    %478 = vmatmul.f32.gmra.mxu0 %v105
    %v479 = vpop.f32.mrf.mxu0
    %v480 = vadd.f32 %v263, %v479
    %481 = vmatmul.f32.gmra.mxu0 %v106
    %v482 = vpop.f32.mrf.mxu0
    %v483 = vadd.f32 %v263, %v482
    %484 = vmatmul.f32.gmra.mxu0 %v107
    %v485 = vpop.f32.mrf.mxu0
    %v486 = vadd.f32 %v263, %v485
    %487 = vmatmul.f32.gmra.mxu0 %v108
    %v488 = vpop.f32.mrf.mxu0
    %v489 = vadd.f32 %v263, %v488
    %490 = vmatmul.f32.gmra.mxu0 %v109
    %v491 = vpop.f32.mrf.mxu0
    %v492 = vadd.f32 %v263, %v491
    %493 = vmatmul.f32.gmra.mxu0 %v110
    %v494 = vpop.f32.mrf.mxu0
    %v495 = vadd.f32 %v263, %v494
    %496 = vmatmul.f32.gmra.mxu0 %v111
    %v497 = vpop.f32.mrf.mxu0
    %v498 = vadd.f32 %v263, %v497
    %499 = vmatmul.f32.gmra.mxu0 %v112
    %v500 = vpop.f32.mrf.mxu0
    %v501 = vadd.f32 %v263, %v500
    %502 = vmatmul.f32.gmra.mxu0 %v113
    %v503 = vpop.f32.mrf.mxu0
    %v504 = vadd.f32 %v263, %v503
    %505 = vdwg.mxu0
    %506 = vmatpush.msra.mxu0 %v251
    %507 = vmatpush.msra.mxu0 %v242
    %508 = vmatpush.msra.mxu0 %v233
    %509 = vmatpush.msra.mxu0 %v224
    %510 = vmatpush.msra.mxu0 %v215
    %511 = vmatpush.msra.mxu0 %v206
    %512 = vmatpush.msra.mxu0 %v197
    %513 = vmatpush.msra.mxu0 %v188
    %514 = vmatpush.msra.mxu0 %v179
    %515 = vmatpush.msra.mxu0 %v170
    %516 = vmatpush.msra.mxu0 %v161
    %517 = vmatpush.msra.mxu0 %v152
    %518 = vmatpush.msra.mxu0 %v143
    %519 = vmatpush.msra.mxu0 %v134
    %520 = vmatpush.msra.mxu0 %v125
    %521 = vmatpush.msra.mxu0 %v116
    %522 = vmatmul.f32.gmra.mxu0 %v82
    %v523 = vpop.f32.mrf.mxu0
    %v524 = vadd.f32 %v264, %v523
    %525 = vmatmul.f32.gmra.mxu0 %v83
    %v526 = vpop.f32.mrf.mxu0
    %v527 = vadd.f32 %v264, %v526
    %528 = vmatmul.f32.gmra.mxu0 %v84
    %v529 = vpop.f32.mrf.mxu0
    %v530 = vadd.f32 %v264, %v529
    %531 = vmatmul.f32.gmra.mxu0 %v85
    %v532 = vpop.f32.mrf.mxu0
    %v533 = vadd.f32 %v264, %v532
    %534 = vmatmul.f32.gmra.mxu0 %v86
    %v535 = vpop.f32.mrf.mxu0
    %v536 = vadd.f32 %v264, %v535
    %537 = vmatmul.f32.gmra.mxu0 %v87
    %v538 = vpop.f32.mrf.mxu0
    %v539 = vadd.f32 %v264, %v538
    %540 = vmatmul.f32.gmra.mxu0 %v88
    %v541 = vpop.f32.mrf.mxu0
    %v542 = vadd.f32 %v264, %v541
    %543 = vmatmul.f32.gmra.mxu0 %v89
    %v544 = vpop.f32.mrf.mxu0
    %v545 = vadd.f32 %v264, %v544
    %546 = vmatmul.f32.gmra.mxu0 %v90
    %v547 = vpop.f32.mrf.mxu0
    %v548 = vadd.f32 %v264, %v547
    %549 = vmatmul.f32.gmra.mxu0 %v91
    %v550 = vpop.f32.mrf.mxu0
    %v551 = vadd.f32 %v264, %v550
    %552 = vmatmul.f32.gmra.mxu0 %v92
    %v553 = vpop.f32.mrf.mxu0
    %v554 = vadd.f32 %v264, %v553
    %555 = vmatmul.f32.gmra.mxu0 %v93
    %v556 = vpop.f32.mrf.mxu0
    %v557 = vadd.f32 %v264, %v556
    %558 = vmatmul.f32.gmra.mxu0 %v94
    %v559 = vpop.f32.mrf.mxu0
    %v560 = vadd.f32 %v264, %v559
    %561 = vmatmul.f32.gmra.mxu0 %v95
    %v562 = vpop.f32.mrf.mxu0
    %v563 = vadd.f32 %v264, %v562
    %564 = vmatmul.f32.gmra.mxu0 %v96
    %v565 = vpop.f32.mrf.mxu0
    %v566 = vadd.f32 %v264, %v565
    %567 = vmatmul.f32.gmra.mxu0 %v97
    %v568 = vpop.f32.mrf.mxu0
    %v569 = vadd.f32 %v264, %v568
    %570 = vmatmul.f32.gmra.mxu0 %v98
    %v571 = vpop.f32.mrf.mxu0
    %v572 = vadd.f32 %v264, %v571
    %573 = vmatmul.f32.gmra.mxu0 %v99
    %v574 = vpop.f32.mrf.mxu0
    %v575 = vadd.f32 %v264, %v574
    %576 = vmatmul.f32.gmra.mxu0 %v100
    %v577 = vpop.f32.mrf.mxu0
    %v578 = vadd.f32 %v264, %v577
    %579 = vmatmul.f32.gmra.mxu0 %v101
    %v580 = vpop.f32.mrf.mxu0
    %v581 = vadd.f32 %v264, %v580
    %582 = vmatmul.f32.gmra.mxu0 %v102
    %v583 = vpop.f32.mrf.mxu0
    %v584 = vadd.f32 %v264, %v583
    %585 = vmatmul.f32.gmra.mxu0 %v103
    %v586 = vpop.f32.mrf.mxu0
    %v587 = vadd.f32 %v264, %v586
    %588 = vmatmul.f32.gmra.mxu0 %v104
    %v589 = vpop.f32.mrf.mxu0
    %v590 = vadd.f32 %v264, %v589
    %591 = vmatmul.f32.gmra.mxu0 %v105
    %v592 = vpop.f32.mrf.mxu0
    %v593 = vadd.f32 %v264, %v592
    %594 = vmatmul.f32.gmra.mxu0 %v106
    %v595 = vpop.f32.mrf.mxu0
    %v596 = vadd.f32 %v264, %v595
    %597 = vmatmul.f32.gmra.mxu0 %v107
    %v598 = vpop.f32.mrf.mxu0
    %v599 = vadd.f32 %v264, %v598
    %600 = vmatmul.f32.gmra.mxu0 %v108
    %v601 = vpop.f32.mrf.mxu0
    %v602 = vadd.f32 %v264, %v601
    %603 = vmatmul.f32.gmra.mxu0 %v109
    %v604 = vpop.f32.mrf.mxu0
    %v605 = vadd.f32 %v264, %v604
    %606 = vmatmul.f32.gmra.mxu0 %v110
    %v607 = vpop.f32.mrf.mxu0
    %v608 = vadd.f32 %v264, %v607
    %609 = vmatmul.f32.gmra.mxu0 %v111
    %v610 = vpop.f32.mrf.mxu0
    %v611 = vadd.f32 %v264, %v610
    %612 = vmatmul.f32.gmra.mxu0 %v112
    %v613 = vpop.f32.mrf.mxu0
    %v614 = vadd.f32 %v264, %v613
    %615 = vmatmul.f32.gmra.mxu0 %v113
    %v616 = vpop.f32.mrf.mxu0
    %v617 = vadd.f32 %v264, %v616
    %618 = vdwg.mxu0
    %619 = vmatpush.msra.mxu0 %v252
    %620 = vmatpush.msra.mxu0 %v243
    %621 = vmatpush.msra.mxu0 %v234
    %622 = vmatpush.msra.mxu0 %v225
    %623 = vmatpush.msra.mxu0 %v216
    %624 = vmatpush.msra.mxu0 %v207
    %625 = vmatpush.msra.mxu0 %v198
    %626 = vmatpush.msra.mxu0 %v189
    %627 = vmatpush.msra.mxu0 %v180
    %628 = vmatpush.msra.mxu0 %v171
    %629 = vmatpush.msra.mxu0 %v162
    %630 = vmatpush.msra.mxu0 %v153
    %631 = vmatpush.msra.mxu0 %v144
    %632 = vmatpush.msra.mxu0 %v135
    %633 = vmatpush.msra.mxu0 %v126
    %634 = vmatpush.msra.mxu0 %v117
    %635 = vmatmul.f32.gmra.mxu0 %v82
    %v636 = vpop.f32.mrf.mxu0
    %v637 = vadd.f32 %v265, %v636
    %638 = vmatmul.f32.gmra.mxu0 %v83
    %v639 = vpop.f32.mrf.mxu0
    %v640 = vadd.f32 %v265, %v639
    %641 = vmatmul.f32.gmra.mxu0 %v84
    %v642 = vpop.f32.mrf.mxu0
    %v643 = vadd.f32 %v265, %v642
    %644 = vmatmul.f32.gmra.mxu0 %v85
    %v645 = vpop.f32.mrf.mxu0
    %v646 = vadd.f32 %v265, %v645
    %647 = vmatmul.f32.gmra.mxu0 %v86
    %v648 = vpop.f32.mrf.mxu0
    %v649 = vadd.f32 %v265, %v648
    %650 = vmatmul.f32.gmra.mxu0 %v87
    %v651 = vpop.f32.mrf.mxu0
    %v652 = vadd.f32 %v265, %v651
    %653 = vmatmul.f32.gmra.mxu0 %v88
    %v654 = vpop.f32.mrf.mxu0
    %v655 = vadd.f32 %v265, %v654
    %656 = vmatmul.f32.gmra.mxu0 %v89
    %v657 = vpop.f32.mrf.mxu0
    %v658 = vadd.f32 %v265, %v657
    %659 = vmatmul.f32.gmra.mxu0 %v90
    %v660 = vpop.f32.mrf.mxu0
    %v661 = vadd.f32 %v265, %v660
    %662 = vmatmul.f32.gmra.mxu0 %v91
    %v663 = vpop.f32.mrf.mxu0
    %v664 = vadd.f32 %v265, %v663
    %665 = vmatmul.f32.gmra.mxu0 %v92
    %v666 = vpop.f32.mrf.mxu0
    %v667 = vadd.f32 %v265, %v666
    %668 = vmatmul.f32.gmra.mxu0 %v93
    %v669 = vpop.f32.mrf.mxu0
    %v670 = vadd.f32 %v265, %v669
    %671 = vmatmul.f32.gmra.mxu0 %v94
    %v672 = vpop.f32.mrf.mxu0
    %v673 = vadd.f32 %v265, %v672
    %674 = vmatmul.f32.gmra.mxu0 %v95
    %v675 = vpop.f32.mrf.mxu0
    %v676 = vadd.f32 %v265, %v675
    %677 = vmatmul.f32.gmra.mxu0 %v96
    %v678 = vpop.f32.mrf.mxu0
    %v679 = vadd.f32 %v265, %v678
    %680 = vmatmul.f32.gmra.mxu0 %v97
    %v681 = vpop.f32.mrf.mxu0
    %v682 = vadd.f32 %v265, %v681
    %683 = vmatmul.f32.gmra.mxu0 %v98
    %v684 = vpop.f32.mrf.mxu0
    %v685 = vadd.f32 %v265, %v684
    %686 = vmatmul.f32.gmra.mxu0 %v99
    %v687 = vpop.f32.mrf.mxu0
    %v688 = vadd.f32 %v265, %v687
    %689 = vmatmul.f32.gmra.mxu0 %v100
    %v690 = vpop.f32.mrf.mxu0
    %v691 = vadd.f32 %v265, %v690
    %692 = vmatmul.f32.gmra.mxu0 %v101
    %v693 = vpop.f32.mrf.mxu0
    %v694 = vadd.f32 %v265, %v693
    %695 = vmatmul.f32.gmra.mxu0 %v102
    %v696 = vpop.f32.mrf.mxu0
    %v697 = vadd.f32 %v265, %v696
    %698 = vmatmul.f32.gmra.mxu0 %v103
    %v699 = vpop.f32.mrf.mxu0
    %v700 = vadd.f32 %v265, %v699
    %701 = vmatmul.f32.gmra.mxu0 %v104
    %v702 = vpop.f32.mrf.mxu0
    %v703 = vadd.f32 %v265, %v702
    %704 = vmatmul.f32.gmra.mxu0 %v105
    %v705 = vpop.f32.mrf.mxu0
    %v706 = vadd.f32 %v265, %v705
    %707 = vmatmul.f32.gmra.mxu0 %v106
    %v708 = vpop.f32.mrf.mxu0
    %v709 = vadd.f32 %v265, %v708
    %710 = vmatmul.f32.gmra.mxu0 %v107
    %v711 = vpop.f32.mrf.mxu0
    %v712 = vadd.f32 %v265, %v711
    %713 = vmatmul.f32.gmra.mxu0 %v108
    %v714 = vpop.f32.mrf.mxu0
    %v715 = vadd.f32 %v265, %v714
    %716 = vmatmul.f32.gmra.mxu0 %v109
    %v717 = vpop.f32.mrf.mxu0
    %v718 = vadd.f32 %v265, %v717
    %719 = vmatmul.f32.gmra.mxu0 %v110
    %v720 = vpop.f32.mrf.mxu0
    %v721 = vadd.f32 %v265, %v720
    %722 = vmatmul.f32.gmra.mxu0 %v111
    %v723 = vpop.f32.mrf.mxu0
    %v724 = vadd.f32 %v265, %v723
    %725 = vmatmul.f32.gmra.mxu0 %v112
    %v726 = vpop.f32.mrf.mxu0
    %v727 = vadd.f32 %v265, %v726
    %728 = vmatmul.f32.gmra.mxu0 %v113
    %v729 = vpop.f32.mrf.mxu0
    %v730 = vadd.f32 %v265, %v729
    %731 = vdwg.mxu0
    %732 = vmatpush.msra.mxu0 %v253
    %733 = vmatpush.msra.mxu0 %v244
    %734 = vmatpush.msra.mxu0 %v235
    %735 = vmatpush.msra.mxu0 %v226
    %736 = vmatpush.msra.mxu0 %v217
    %737 = vmatpush.msra.mxu0 %v208
    %738 = vmatpush.msra.mxu0 %v199
    %739 = vmatpush.msra.mxu0 %v190
    %740 = vmatpush.msra.mxu0 %v181
    %741 = vmatpush.msra.mxu0 %v172
    %742 = vmatpush.msra.mxu0 %v163
    %743 = vmatpush.msra.mxu0 %v154
    %744 = vmatpush.msra.mxu0 %v145
    %745 = vmatpush.msra.mxu0 %v136
    %746 = vmatpush.msra.mxu0 %v127
    %747 = vmatpush.msra.mxu0 %v118
    %748 = vmatmul.f32.gmra.mxu0 %v82
    %v749 = vpop.f32.mrf.mxu0
    %v750 = vadd.f32 %v266, %v749
    %751 = vmatmul.f32.gmra.mxu0 %v83
    %v752 = vpop.f32.mrf.mxu0
    %v753 = vadd.f32 %v266, %v752
    %754 = vmatmul.f32.gmra.mxu0 %v84
    %v755 = vpop.f32.mrf.mxu0
    %v756 = vadd.f32 %v266, %v755
    %757 = vmatmul.f32.gmra.mxu0 %v85
    %v758 = vpop.f32.mrf.mxu0
    %v759 = vadd.f32 %v266, %v758
    %760 = vmatmul.f32.gmra.mxu0 %v86
    %v761 = vpop.f32.mrf.mxu0
    %v762 = vadd.f32 %v266, %v761
    %763 = vmatmul.f32.gmra.mxu0 %v87
    %v764 = vpop.f32.mrf.mxu0
    %v765 = vadd.f32 %v266, %v764
    %766 = vmatmul.f32.gmra.mxu0 %v88
    %v767 = vpop.f32.mrf.mxu0
    %v768 = vadd.f32 %v266, %v767
    %769 = vmatmul.f32.gmra.mxu0 %v89
    %v770 = vpop.f32.mrf.mxu0
    %v771 = vadd.f32 %v266, %v770
    %772 = vmatmul.f32.gmra.mxu0 %v90
    %v773 = vpop.f32.mrf.mxu0
    %v774 = vadd.f32 %v266, %v773
    %775 = vmatmul.f32.gmra.mxu0 %v91
    %v776 = vpop.f32.mrf.mxu0
    %v777 = vadd.f32 %v266, %v776
    %778 = vmatmul.f32.gmra.mxu0 %v92
    %v779 = vpop.f32.mrf.mxu0
    %v780 = vadd.f32 %v266, %v779
    %781 = vmatmul.f32.gmra.mxu0 %v93
    %v782 = vpop.f32.mrf.mxu0
    %v783 = vadd.f32 %v266, %v782
    %784 = vmatmul.f32.gmra.mxu0 %v94
    %v785 = vpop.f32.mrf.mxu0
    %v786 = vadd.f32 %v266, %v785
    %787 = vmatmul.f32.gmra.mxu0 %v95
    %v788 = vpop.f32.mrf.mxu0
    %v789 = vadd.f32 %v266, %v788
    %790 = vmatmul.f32.gmra.mxu0 %v96
    %v791 = vpop.f32.mrf.mxu0
    %v792 = vadd.f32 %v266, %v791
    %793 = vmatmul.f32.gmra.mxu0 %v97
    %v794 = vpop.f32.mrf.mxu0
    %v795 = vadd.f32 %v266, %v794
    %796 = vmatmul.f32.gmra.mxu0 %v98
    %v797 = vpop.f32.mrf.mxu0
    %v798 = vadd.f32 %v266, %v797
    %799 = vmatmul.f32.gmra.mxu0 %v99
    %v800 = vpop.f32.mrf.mxu0
    %v801 = vadd.f32 %v266, %v800
    %802 = vmatmul.f32.gmra.mxu0 %v100
    %v803 = vpop.f32.mrf.mxu0
    %v804 = vadd.f32 %v266, %v803
    %805 = vmatmul.f32.gmra.mxu0 %v101
    %v806 = vpop.f32.mrf.mxu0
    %v807 = vadd.f32 %v266, %v806
    %808 = vmatmul.f32.gmra.mxu0 %v102
    %v809 = vpop.f32.mrf.mxu0
    %v810 = vadd.f32 %v266, %v809
    %811 = vmatmul.f32.gmra.mxu0 %v103
    %v812 = vpop.f32.mrf.mxu0
    %v813 = vadd.f32 %v266, %v812
    %814 = vmatmul.f32.gmra.mxu0 %v104
    %v815 = vpop.f32.mrf.mxu0
    %v816 = vadd.f32 %v266, %v815
    %817 = vmatmul.f32.gmra.mxu0 %v105
    %v818 = vpop.f32.mrf.mxu0
    %v819 = vadd.f32 %v266, %v818
    %820 = vmatmul.f32.gmra.mxu0 %v106
    %v821 = vpop.f32.mrf.mxu0
    %v822 = vadd.f32 %v266, %v821
    %823 = vmatmul.f32.gmra.mxu0 %v107
    %v824 = vpop.f32.mrf.mxu0
    %v825 = vadd.f32 %v266, %v824
    %826 = vmatmul.f32.gmra.mxu0 %v108
    %v827 = vpop.f32.mrf.mxu0
    %v828 = vadd.f32 %v266, %v827
    %829 = vmatmul.f32.gmra.mxu0 %v109
    %v830 = vpop.f32.mrf.mxu0
    %v831 = vadd.f32 %v266, %v830
    %832 = vmatmul.f32.gmra.mxu0 %v110
    %v833 = vpop.f32.mrf.mxu0
    %v834 = vadd.f32 %v266, %v833
    %835 = vmatmul.f32.gmra.mxu0 %v111
    %v836 = vpop.f32.mrf.mxu0
    %v837 = vadd.f32 %v266, %v836
    %838 = vmatmul.f32.gmra.mxu0 %v112
    %v839 = vpop.f32.mrf.mxu0
    %v840 = vadd.f32 %v266, %v839
    %841 = vmatmul.f32.gmra.mxu0 %v113
    %v842 = vpop.f32.mrf.mxu0
    %v843 = vadd.f32 %v266, %v842
    %844 = vdwg.mxu0
    %845 = vmatpush.msra.mxu0 %v254
    %846 = vmatpush.msra.mxu0 %v245
    %847 = vmatpush.msra.mxu0 %v236
    %848 = vmatpush.msra.mxu0 %v227
    %849 = vmatpush.msra.mxu0 %v218
    %850 = vmatpush.msra.mxu0 %v209
    %851 = vmatpush.msra.mxu0 %v200
    %852 = vmatpush.msra.mxu0 %v191
    %853 = vmatpush.msra.mxu0 %v182
    %854 = vmatpush.msra.mxu0 %v173
    %855 = vmatpush.msra.mxu0 %v164
    %856 = vmatpush.msra.mxu0 %v155
    %857 = vmatpush.msra.mxu0 %v146
    %858 = vmatpush.msra.mxu0 %v137
    %859 = vmatpush.msra.mxu0 %v128
    %860 = vmatpush.msra.mxu0 %v119
    %861 = vmatmul.f32.gmra.mxu0 %v82
    %v862 = vpop.f32.mrf.mxu0
    %v863 = vadd.f32 %v267, %v862
    %864 = vmatmul.f32.gmra.mxu0 %v83
    %v865 = vpop.f32.mrf.mxu0
    %v866 = vadd.f32 %v267, %v865
    %867 = vmatmul.f32.gmra.mxu0 %v84
    %v868 = vpop.f32.mrf.mxu0
    %v869 = vadd.f32 %v267, %v868
    %870 = vmatmul.f32.gmra.mxu0 %v85
    %v871 = vpop.f32.mrf.mxu0
    %v872 = vadd.f32 %v267, %v871
    %873 = vmatmul.f32.gmra.mxu0 %v86
    %v874 = vpop.f32.mrf.mxu0
    %v875 = vadd.f32 %v267, %v874
    %876 = vmatmul.f32.gmra.mxu0 %v87
    %v877 = vpop.f32.mrf.mxu0
    %v878 = vadd.f32 %v267, %v877
    %879 = vmatmul.f32.gmra.mxu0 %v88
    %v880 = vpop.f32.mrf.mxu0
    %v881 = vadd.f32 %v267, %v880
    %882 = vmatmul.f32.gmra.mxu0 %v89
    %v883 = vpop.f32.mrf.mxu0
    %v884 = vadd.f32 %v267, %v883
    %885 = vmatmul.f32.gmra.mxu0 %v90
    %v886 = vpop.f32.mrf.mxu0
    %v887 = vadd.f32 %v267, %v886
    %888 = vmatmul.f32.gmra.mxu0 %v91
    %v889 = vpop.f32.mrf.mxu0
    %v890 = vadd.f32 %v267, %v889
    %891 = vmatmul.f32.gmra.mxu0 %v92
    %v892 = vpop.f32.mrf.mxu0
    %v893 = vadd.f32 %v267, %v892
    %894 = vmatmul.f32.gmra.mxu0 %v93
    %v895 = vpop.f32.mrf.mxu0
    %v896 = vadd.f32 %v267, %v895
    %897 = vmatmul.f32.gmra.mxu0 %v94
    %v898 = vpop.f32.mrf.mxu0
    %v899 = vadd.f32 %v267, %v898
    %900 = vmatmul.f32.gmra.mxu0 %v95
    %v901 = vpop.f32.mrf.mxu0
    %v902 = vadd.f32 %v267, %v901
    %903 = vmatmul.f32.gmra.mxu0 %v96
    %v904 = vpop.f32.mrf.mxu0
    %v905 = vadd.f32 %v267, %v904
    %906 = vmatmul.f32.gmra.mxu0 %v97
    %v907 = vpop.f32.mrf.mxu0
    %v908 = vadd.f32 %v267, %v907
    %909 = vmatmul.f32.gmra.mxu0 %v98
    %v910 = vpop.f32.mrf.mxu0
    %v911 = vadd.f32 %v267, %v910
    %912 = vmatmul.f32.gmra.mxu0 %v99
    %v913 = vpop.f32.mrf.mxu0
    %v914 = vadd.f32 %v267, %v913
    %915 = vmatmul.f32.gmra.mxu0 %v100
    %v916 = vpop.f32.mrf.mxu0
    %v917 = vadd.f32 %v267, %v916
    %918 = vmatmul.f32.gmra.mxu0 %v101
    %v919 = vpop.f32.mrf.mxu0
    %v920 = vadd.f32 %v267, %v919
    %921 = vmatmul.f32.gmra.mxu0 %v102
    %v922 = vpop.f32.mrf.mxu0
    %v923 = vadd.f32 %v267, %v922
    %924 = vmatmul.f32.gmra.mxu0 %v103
    %v925 = vpop.f32.mrf.mxu0
    %v926 = vadd.f32 %v267, %v925
    %927 = vmatmul.f32.gmra.mxu0 %v104
    %v928 = vpop.f32.mrf.mxu0
    %v929 = vadd.f32 %v267, %v928
    %930 = vmatmul.f32.gmra.mxu0 %v105
    %v931 = vpop.f32.mrf.mxu0
    %v932 = vadd.f32 %v267, %v931
    %933 = vmatmul.f32.gmra.mxu0 %v106
    %v934 = vpop.f32.mrf.mxu0
    %v935 = vadd.f32 %v267, %v934
    %936 = vmatmul.f32.gmra.mxu0 %v107
    %v937 = vpop.f32.mrf.mxu0
    %v938 = vadd.f32 %v267, %v937
    %939 = vmatmul.f32.gmra.mxu0 %v108
    %v940 = vpop.f32.mrf.mxu0
    %v941 = vadd.f32 %v267, %v940
    %942 = vmatmul.f32.gmra.mxu0 %v109
    %v943 = vpop.f32.mrf.mxu0
    %v944 = vadd.f32 %v267, %v943
    %945 = vmatmul.f32.gmra.mxu0 %v110
    %v946 = vpop.f32.mrf.mxu0
    %v947 = vadd.f32 %v267, %v946
    %948 = vmatmul.f32.gmra.mxu0 %v111
    %v949 = vpop.f32.mrf.mxu0
    %v950 = vadd.f32 %v267, %v949
    %951 = vmatmul.f32.gmra.mxu0 %v112
    %v952 = vpop.f32.mrf.mxu0
    %v953 = vadd.f32 %v267, %v952
    %954 = vmatmul.f32.gmra.mxu0 %v113
    %v955 = vpop.f32.mrf.mxu0
    %v956 = vadd.f32 %v267, %v955
    %957 = vdwg.mxu0
    %958 = vmatpush.msra.mxu0 %v255
    %959 = vmatpush.msra.mxu0 %v246
    %960 = vmatpush.msra.mxu0 %v237
    %961 = vmatpush.msra.mxu0 %v228
    %962 = vmatpush.msra.mxu0 %v219
    %963 = vmatpush.msra.mxu0 %v210
    %964 = vmatpush.msra.mxu0 %v201
    %965 = vmatpush.msra.mxu0 %v192
    %966 = vmatpush.msra.mxu0 %v183
    %967 = vmatpush.msra.mxu0 %v174
    %968 = vmatpush.msra.mxu0 %v165
    %969 = vmatpush.msra.mxu0 %v156
    %970 = vmatpush.msra.mxu0 %v147
    %971 = vmatpush.msra.mxu0 %v138
    %972 = vmatpush.msra.mxu0 %v129
    %973 = vmatpush.msra.mxu0 %v120
    %974 = vmatmul.f32.gmra.mxu0 %v82
    %v975 = vpop.f32.mrf.mxu0
    %v976 = vadd.f32 %v268, %v975
    %977 = vmatmul.f32.gmra.mxu0 %v83
    %v978 = vpop.f32.mrf.mxu0
    %v979 = vadd.f32 %v268, %v978
    %980 = vmatmul.f32.gmra.mxu0 %v84
    %v981 = vpop.f32.mrf.mxu0
    %v982 = vadd.f32 %v268, %v981
    %983 = vmatmul.f32.gmra.mxu0 %v85
    %v984 = vpop.f32.mrf.mxu0
    %v985 = vadd.f32 %v268, %v984
    %986 = vmatmul.f32.gmra.mxu0 %v86
    %v987 = vpop.f32.mrf.mxu0
    %v988 = vadd.f32 %v268, %v987
    %989 = vmatmul.f32.gmra.mxu0 %v87
    %v990 = vpop.f32.mrf.mxu0
    %v991 = vadd.f32 %v268, %v990
    %992 = vmatmul.f32.gmra.mxu0 %v88
    %v993 = vpop.f32.mrf.mxu0
    %v994 = vadd.f32 %v268, %v993
    %995 = vmatmul.f32.gmra.mxu0 %v89
    %v996 = vpop.f32.mrf.mxu0
    %v997 = vadd.f32 %v268, %v996
    %998 = vmatmul.f32.gmra.mxu0 %v90
    %v999 = vpop.f32.mrf.mxu0
    %v1000 = vadd.f32 %v268, %v999
    %1001 = vmatmul.f32.gmra.mxu0 %v91
    %v1002 = vpop.f32.mrf.mxu0
    %v1003 = vadd.f32 %v268, %v1002
    %1004 = vmatmul.f32.gmra.mxu0 %v92
    %v1005 = vpop.f32.mrf.mxu0
    %v1006 = vadd.f32 %v268, %v1005
    %1007 = vmatmul.f32.gmra.mxu0 %v93
    %v1008 = vpop.f32.mrf.mxu0
    %v1009 = vadd.f32 %v268, %v1008
    %1010 = vmatmul.f32.gmra.mxu0 %v94
    %v1011 = vpop.f32.mrf.mxu0
    %v1012 = vadd.f32 %v268, %v1011
    %1013 = vmatmul.f32.gmra.mxu0 %v95
    %v1014 = vpop.f32.mrf.mxu0
    %v1015 = vadd.f32 %v268, %v1014
    %1016 = vmatmul.f32.gmra.mxu0 %v96
    %v1017 = vpop.f32.mrf.mxu0
    %v1018 = vadd.f32 %v268, %v1017
    %1019 = vmatmul.f32.gmra.mxu0 %v97
    %v1020 = vpop.f32.mrf.mxu0
    %v1021 = vadd.f32 %v268, %v1020
    %1022 = vmatmul.f32.gmra.mxu0 %v98
    %v1023 = vpop.f32.mrf.mxu0
    %v1024 = vadd.f32 %v268, %v1023
    %1025 = vmatmul.f32.gmra.mxu0 %v99
    %v1026 = vpop.f32.mrf.mxu0
    %v1027 = vadd.f32 %v268, %v1026
    %1028 = vmatmul.f32.gmra.mxu0 %v100
    %v1029 = vpop.f32.mrf.mxu0
    %v1030 = vadd.f32 %v268, %v1029
    %1031 = vmatmul.f32.gmra.mxu0 %v101
    %v1032 = vpop.f32.mrf.mxu0
    %v1033 = vadd.f32 %v268, %v1032
    %1034 = vmatmul.f32.gmra.mxu0 %v102
    %v1035 = vpop.f32.mrf.mxu0
    %v1036 = vadd.f32 %v268, %v1035
    %1037 = vmatmul.f32.gmra.mxu0 %v103
    %v1038 = vpop.f32.mrf.mxu0
    %v1039 = vadd.f32 %v268, %v1038
    %1040 = vmatmul.f32.gmra.mxu0 %v104
    %v1041 = vpop.f32.mrf.mxu0
    %v1042 = vadd.f32 %v268, %v1041
    %1043 = vmatmul.f32.gmra.mxu0 %v105
    %v1044 = vpop.f32.mrf.mxu0
    %v1045 = vadd.f32 %v268, %v1044
    %1046 = vmatmul.f32.gmra.mxu0 %v106
    %v1047 = vpop.f32.mrf.mxu0
    %v1048 = vadd.f32 %v268, %v1047
    %1049 = vmatmul.f32.gmra.mxu0 %v107
    %v1050 = vpop.f32.mrf.mxu0
    %v1051 = vadd.f32 %v268, %v1050
    %1052 = vmatmul.f32.gmra.mxu0 %v108
    %v1053 = vpop.f32.mrf.mxu0
    %v1054 = vadd.f32 %v268, %v1053
    %1055 = vmatmul.f32.gmra.mxu0 %v109
    %v1056 = vpop.f32.mrf.mxu0
    %v1057 = vadd.f32 %v268, %v1056
    %1058 = vmatmul.f32.gmra.mxu0 %v110
    %v1059 = vpop.f32.mrf.mxu0
    %v1060 = vadd.f32 %v268, %v1059
    %1061 = vmatmul.f32.gmra.mxu0 %v111
    %v1062 = vpop.f32.mrf.mxu0
    %v1063 = vadd.f32 %v268, %v1062
    %1064 = vmatmul.f32.gmra.mxu0 %v112
    %v1065 = vpop.f32.mrf.mxu0
    %v1066 = vadd.f32 %v268, %v1065
    %1067 = vmatmul.f32.gmra.mxu0 %v113
    %v1068 = vpop.f32.mrf.mxu0
    %v1069 = vadd.f32 %v268, %v1068
    %1070 = vdwg.mxu0
    %1071 = vmatpush.msra.mxu0 %v256
    %1072 = vmatpush.msra.mxu0 %v247
    %1073 = vmatpush.msra.mxu0 %v238
    %1074 = vmatpush.msra.mxu0 %v229
    %1075 = vmatpush.msra.mxu0 %v220
    %1076 = vmatpush.msra.mxu0 %v211
    %1077 = vmatpush.msra.mxu0 %v202
    %1078 = vmatpush.msra.mxu0 %v193
    %1079 = vmatpush.msra.mxu0 %v184
    %1080 = vmatpush.msra.mxu0 %v175
    %1081 = vmatpush.msra.mxu0 %v166
    %1082 = vmatpush.msra.mxu0 %v157
    %1083 = vmatpush.msra.mxu0 %v148
    %1084 = vmatpush.msra.mxu0 %v139
    %1085 = vmatpush.msra.mxu0 %v130
    %1086 = vmatpush.msra.mxu0 %v121
    %1087 = vmatmul.f32.gmra.mxu0 %v82
    %v1088 = vpop.f32.mrf.mxu0
    %v1089 = vadd.f32 %v269, %v1088
    %1090 = vmatmul.f32.gmra.mxu0 %v83
    %v1091 = vpop.f32.mrf.mxu0
    %v1092 = vadd.f32 %v269, %v1091
    %1093 = vmatmul.f32.gmra.mxu0 %v84
    %v1094 = vpop.f32.mrf.mxu0
    %v1095 = vadd.f32 %v269, %v1094
    %1096 = vmatmul.f32.gmra.mxu0 %v85
    %v1097 = vpop.f32.mrf.mxu0
    %v1098 = vadd.f32 %v269, %v1097
    %1099 = vmatmul.f32.gmra.mxu0 %v86
    %v1100 = vpop.f32.mrf.mxu0
    %v1101 = vadd.f32 %v269, %v1100
    %1102 = vmatmul.f32.gmra.mxu0 %v87
    %v1103 = vpop.f32.mrf.mxu0
    %v1104 = vadd.f32 %v269, %v1103
    %1105 = vmatmul.f32.gmra.mxu0 %v88
    %v1106 = vpop.f32.mrf.mxu0
    %v1107 = vadd.f32 %v269, %v1106
    %1108 = vmatmul.f32.gmra.mxu0 %v89
    %v1109 = vpop.f32.mrf.mxu0
    %v1110 = vadd.f32 %v269, %v1109
    %1111 = vmatmul.f32.gmra.mxu0 %v90
    %v1112 = vpop.f32.mrf.mxu0
    %v1113 = vadd.f32 %v269, %v1112
    %1114 = vmatmul.f32.gmra.mxu0 %v91
    %v1115 = vpop.f32.mrf.mxu0
    %v1116 = vadd.f32 %v269, %v1115
    %1117 = vmatmul.f32.gmra.mxu0 %v92
    %v1118 = vpop.f32.mrf.mxu0
    %v1119 = vadd.f32 %v269, %v1118
    %1120 = vmatmul.f32.gmra.mxu0 %v93
    %v1121 = vpop.f32.mrf.mxu0
    %v1122 = vadd.f32 %v269, %v1121
    %1123 = vmatmul.f32.gmra.mxu0 %v94
    %v1124 = vpop.f32.mrf.mxu0
    %v1125 = vadd.f32 %v269, %v1124
    %1126 = vmatmul.f32.gmra.mxu0 %v95
    %v1127 = vpop.f32.mrf.mxu0
    %v1128 = vadd.f32 %v269, %v1127
    %1129 = vmatmul.f32.gmra.mxu0 %v96
    %v1130 = vpop.f32.mrf.mxu0
    %v1131 = vadd.f32 %v269, %v1130
    %1132 = vmatmul.f32.gmra.mxu0 %v97
    %v1133 = vpop.f32.mrf.mxu0
    %v1134 = vadd.f32 %v269, %v1133
    %1135 = vmatmul.f32.gmra.mxu0 %v98
    %v1136 = vpop.f32.mrf.mxu0
    %v1137 = vadd.f32 %v269, %v1136
    %1138 = vmatmul.f32.gmra.mxu0 %v99
    %v1139 = vpop.f32.mrf.mxu0
    %v1140 = vadd.f32 %v269, %v1139
    %1141 = vmatmul.f32.gmra.mxu0 %v100
    %v1142 = vpop.f32.mrf.mxu0
    %v1143 = vadd.f32 %v269, %v1142
    %1144 = vmatmul.f32.gmra.mxu0 %v101
    %v1145 = vpop.f32.mrf.mxu0
    %v1146 = vadd.f32 %v269, %v1145
    %1147 = vmatmul.f32.gmra.mxu0 %v102
    %v1148 = vpop.f32.mrf.mxu0
    %v1149 = vadd.f32 %v269, %v1148
    %1150 = vmatmul.f32.gmra.mxu0 %v103
    %v1151 = vpop.f32.mrf.mxu0
    %v1152 = vadd.f32 %v269, %v1151
    %1153 = vmatmul.f32.gmra.mxu0 %v104
    %v1154 = vpop.f32.mrf.mxu0
    %v1155 = vadd.f32 %v269, %v1154
    %1156 = vmatmul.f32.gmra.mxu0 %v105
    %v1157 = vpop.f32.mrf.mxu0
    %v1158 = vadd.f32 %v269, %v1157
    %1159 = vmatmul.f32.gmra.mxu0 %v106
    %v1160 = vpop.f32.mrf.mxu0
    %v1161 = vadd.f32 %v269, %v1160
    %1162 = vmatmul.f32.gmra.mxu0 %v107
    %v1163 = vpop.f32.mrf.mxu0
    %v1164 = vadd.f32 %v269, %v1163
    %1165 = vmatmul.f32.gmra.mxu0 %v108
    %v1166 = vpop.f32.mrf.mxu0
    %v1167 = vadd.f32 %v269, %v1166
    %1168 = vmatmul.f32.gmra.mxu0 %v109
    %v1169 = vpop.f32.mrf.mxu0
    %v1170 = vadd.f32 %v269, %v1169
    %1171 = vmatmul.f32.gmra.mxu0 %v110
    %v1172 = vpop.f32.mrf.mxu0
    %v1173 = vadd.f32 %v269, %v1172
    %1174 = vmatmul.f32.gmra.mxu0 %v111
    %v1175 = vpop.f32.mrf.mxu0
    %v1176 = vadd.f32 %v269, %v1175
    %1177 = vmatmul.f32.gmra.mxu0 %v112
    %v1178 = vpop.f32.mrf.mxu0
    %v1179 = vadd.f32 %v269, %v1178
    %1180 = vmatmul.f32.gmra.mxu0 %v113
    %v1181 = vpop.f32.mrf.mxu0
    %v1182 = vadd.f32 %v269, %v1181
    %1183 = vdwg.mxu0
    %1184 = vmatpush.msra.mxu0 %v257
    %1185 = vmatpush.msra.mxu0 %v248
    %1186 = vmatpush.msra.mxu0 %v239
    %1187 = vmatpush.msra.mxu0 %v230
    %1188 = vmatpush.msra.mxu0 %v221
    %1189 = vmatpush.msra.mxu0 %v212
    %1190 = vmatpush.msra.mxu0 %v203
    %1191 = vmatpush.msra.mxu0 %v194
    %1192 = vmatpush.msra.mxu0 %v185
    %1193 = vmatpush.msra.mxu0 %v176
    %1194 = vmatpush.msra.mxu0 %v167
    %1195 = vmatpush.msra.mxu0 %v158
    %1196 = vmatpush.msra.mxu0 %v149
    %1197 = vmatpush.msra.mxu0 %v140
    %1198 = vmatpush.msra.mxu0 %v131
    %1199 = vmatpush.msra.mxu0 %v122
    %1200 = vmatmul.f32.gmra.mxu0 %v82
    %v1201 = vpop.f32.mrf.mxu0
    %v1202 = vadd.f32 %v270, %v1201
    %1203 = vmatmul.f32.gmra.mxu0 %v83
    %v1204 = vpop.f32.mrf.mxu0
    %v1205 = vadd.f32 %v270, %v1204
    %1206 = vmatmul.f32.gmra.mxu0 %v84
    %v1207 = vpop.f32.mrf.mxu0
    %v1208 = vadd.f32 %v270, %v1207
    %1209 = vmatmul.f32.gmra.mxu0 %v85
    %v1210 = vpop.f32.mrf.mxu0
    %v1211 = vadd.f32 %v270, %v1210
    %1212 = vmatmul.f32.gmra.mxu0 %v86
    %v1213 = vpop.f32.mrf.mxu0
    %v1214 = vadd.f32 %v270, %v1213
    %1215 = vmatmul.f32.gmra.mxu0 %v87
    %v1216 = vpop.f32.mrf.mxu0
    %v1217 = vadd.f32 %v270, %v1216
    %1218 = vmatmul.f32.gmra.mxu0 %v88
    %v1219 = vpop.f32.mrf.mxu0
    %v1220 = vadd.f32 %v270, %v1219
    %1221 = vmatmul.f32.gmra.mxu0 %v89
    %v1222 = vpop.f32.mrf.mxu0
    %v1223 = vadd.f32 %v270, %v1222
    %1224 = vmatmul.f32.gmra.mxu0 %v90
    %v1225 = vpop.f32.mrf.mxu0
    %v1226 = vadd.f32 %v270, %v1225
    %1227 = vmatmul.f32.gmra.mxu0 %v91
    %v1228 = vpop.f32.mrf.mxu0
    %v1229 = vadd.f32 %v270, %v1228
    %1230 = vmatmul.f32.gmra.mxu0 %v92
    %v1231 = vpop.f32.mrf.mxu0
    %v1232 = vadd.f32 %v270, %v1231
    %1233 = vmatmul.f32.gmra.mxu0 %v93
    %v1234 = vpop.f32.mrf.mxu0
    %v1235 = vadd.f32 %v270, %v1234
    %1236 = vmatmul.f32.gmra.mxu0 %v94
    %v1237 = vpop.f32.mrf.mxu0
    %v1238 = vadd.f32 %v270, %v1237
    %1239 = vmatmul.f32.gmra.mxu0 %v95
    %v1240 = vpop.f32.mrf.mxu0
    %v1241 = vadd.f32 %v270, %v1240
    %1242 = vmatmul.f32.gmra.mxu0 %v96
    %v1243 = vpop.f32.mrf.mxu0
    %v1244 = vadd.f32 %v270, %v1243
    %1245 = vmatmul.f32.gmra.mxu0 %v97
    %v1246 = vpop.f32.mrf.mxu0
    %v1247 = vadd.f32 %v270, %v1246
    %1248 = vmatmul.f32.gmra.mxu0 %v98
    %v1249 = vpop.f32.mrf.mxu0
    %v1250 = vadd.f32 %v270, %v1249
    %1251 = vmatmul.f32.gmra.mxu0 %v99
    %v1252 = vpop.f32.mrf.mxu0
    %v1253 = vadd.f32 %v270, %v1252
    %1254 = vmatmul.f32.gmra.mxu0 %v100
    %v1255 = vpop.f32.mrf.mxu0
    %v1256 = vadd.f32 %v270, %v1255
    %1257 = vmatmul.f32.gmra.mxu0 %v101
    %v1258 = vpop.f32.mrf.mxu0
    %v1259 = vadd.f32 %v270, %v1258
    %1260 = vmatmul.f32.gmra.mxu0 %v102
    %v1261 = vpop.f32.mrf.mxu0
    %v1262 = vadd.f32 %v270, %v1261
    %1263 = vmatmul.f32.gmra.mxu0 %v103
    %v1264 = vpop.f32.mrf.mxu0
    %v1265 = vadd.f32 %v270, %v1264
    %1266 = vmatmul.f32.gmra.mxu0 %v104
    %v1267 = vpop.f32.mrf.mxu0
    %v1268 = vadd.f32 %v270, %v1267
    %1269 = vmatmul.f32.gmra.mxu0 %v105
    %v1270 = vpop.f32.mrf.mxu0
    %v1271 = vadd.f32 %v270, %v1270
    %1272 = vmatmul.f32.gmra.mxu0 %v106
    %v1273 = vpop.f32.mrf.mxu0
    %v1274 = vadd.f32 %v270, %v1273
    %1275 = vmatmul.f32.gmra.mxu0 %v107
    %v1276 = vpop.f32.mrf.mxu0
    %v1277 = vadd.f32 %v270, %v1276
    %1278 = vmatmul.f32.gmra.mxu0 %v108
    %v1279 = vpop.f32.mrf.mxu0
    %v1280 = vadd.f32 %v270, %v1279
    %1281 = vmatmul.f32.gmra.mxu0 %v109
    %v1282 = vpop.f32.mrf.mxu0
    %v1283 = vadd.f32 %v270, %v1282
    %1284 = vmatmul.f32.gmra.mxu0 %v110
    %v1285 = vpop.f32.mrf.mxu0
    %v1286 = vadd.f32 %v270, %v1285
    %1287 = vmatmul.f32.gmra.mxu0 %v111
    %v1288 = vpop.f32.mrf.mxu0
    %v1289 = vadd.f32 %v270, %v1288
    %1290 = vmatmul.f32.gmra.mxu0 %v112
    %v1291 = vpop.f32.mrf.mxu0
    %v1292 = vadd.f32 %v270, %v1291
    %1293 = vmatmul.f32.gmra.mxu0 %v113
    %v1294 = vpop.f32.mrf.mxu0
    %v1295 = vadd.f32 %v270, %v1294
    %1296 = vdwg.mxu0
    %v1297 = vmul.f32 %v298, %v298
    %v1298 = vmul.f32 %v411, %v411
    %v1299 = vmul.f32 %v524, %v524
    %v1300 = vmul.f32 %v637, %v637
    %v1301 = vmul.f32 %v301, %v301
    %v1302 = vmul.f32 %v414, %v414
    %v1303 = vmul.f32 %v527, %v527
    %v1304 = vmul.f32 %v640, %v640
    %v1305 = vmul.f32 %v304, %v304
    %v1306 = vmul.f32 %v417, %v417
    %v1307 = vmul.f32 %v530, %v530
    %v1308 = vmul.f32 %v643, %v643
    %v1309 = vmul.f32 %v307, %v307
    %v1310 = vmul.f32 %v420, %v420
    %v1311 = vmul.f32 %v533, %v533
    %v1312 = vmul.f32 %v646, %v646
    %v1313 = vmul.f32 %v310, %v310
    %v1314 = vmul.f32 %v423, %v423
    %v1315 = vmul.f32 %v536, %v536
    %v1316 = vmul.f32 %v649, %v649
    %v1317 = vmul.f32 %v313, %v313
    %v1318 = vmul.f32 %v426, %v426
    %v1319 = vmul.f32 %v539, %v539
    %v1320 = vmul.f32 %v652, %v652
    %v1321 = vmul.f32 %v316, %v316
    %v1322 = vmul.f32 %v429, %v429
    %v1323 = vmul.f32 %v542, %v542
    %v1324 = vmul.f32 %v655, %v655
    %v1325 = vmul.f32 %v319, %v319
    %v1326 = vmul.f32 %v432, %v432
    %v1327 = vmul.f32 %v545, %v545
    %v1328 = vmul.f32 %v658, %v658
    %v1329 = vmul.f32 %v322, %v322
    %v1330 = vmul.f32 %v435, %v435
    %v1331 = vmul.f32 %v548, %v548
    %v1332 = vmul.f32 %v661, %v661
    %v1333 = vmul.f32 %v325, %v325
    %v1334 = vmul.f32 %v438, %v438
    %v1335 = vmul.f32 %v551, %v551
    %v1336 = vmul.f32 %v664, %v664
    %v1337 = vmul.f32 %v328, %v328
    %v1338 = vmul.f32 %v441, %v441
    %v1339 = vmul.f32 %v554, %v554
    %v1340 = vmul.f32 %v667, %v667
    %v1341 = vmul.f32 %v331, %v331
    %v1342 = vmul.f32 %v444, %v444
    %v1343 = vmul.f32 %v557, %v557
    %v1344 = vmul.f32 %v670, %v670
    %v1345 = vmul.f32 %v334, %v334
    %v1346 = vmul.f32 %v447, %v447
    %v1347 = vmul.f32 %v560, %v560
    %v1348 = vmul.f32 %v673, %v673
    %v1349 = vmul.f32 %v337, %v337
    %v1350 = vmul.f32 %v450, %v450
    %v1351 = vmul.f32 %v563, %v563
    %v1352 = vmul.f32 %v676, %v676
    %v1353 = vmul.f32 %v340, %v340
    %v1354 = vmul.f32 %v453, %v453
    %v1355 = vmul.f32 %v566, %v566
    %v1356 = vmul.f32 %v679, %v679
    %v1357 = vmul.f32 %v343, %v343
    %v1358 = vmul.f32 %v456, %v456
    %v1359 = vmul.f32 %v569, %v569
    %v1360 = vmul.f32 %v682, %v682
    %v1361 = vmul.f32 %v346, %v346
    %v1362 = vmul.f32 %v459, %v459
    %v1363 = vmul.f32 %v572, %v572
    %v1364 = vmul.f32 %v685, %v685
    %v1365 = vmul.f32 %v349, %v349
    %v1366 = vmul.f32 %v462, %v462
    %v1367 = vmul.f32 %v575, %v575
    %v1368 = vmul.f32 %v688, %v688
    %v1369 = vmul.f32 %v352, %v352
    %v1370 = vmul.f32 %v465, %v465
    %v1371 = vmul.f32 %v578, %v578
    %v1372 = vmul.f32 %v691, %v691
    %v1373 = vmul.f32 %v355, %v355
    %v1374 = vmul.f32 %v468, %v468
    %v1375 = vmul.f32 %v581, %v581
    %v1376 = vmul.f32 %v694, %v694
    %v1377 = vmul.f32 %v358, %v358
    %v1378 = vmul.f32 %v471, %v471
    %v1379 = vmul.f32 %v584, %v584
    %v1380 = vmul.f32 %v697, %v697
    %v1381 = vmul.f32 %v361, %v361
    %v1382 = vmul.f32 %v474, %v474
    %v1383 = vmul.f32 %v587, %v587
    %v1384 = vmul.f32 %v700, %v700
    %v1385 = vmul.f32 %v364, %v364
    %v1386 = vmul.f32 %v477, %v477
    %v1387 = vmul.f32 %v590, %v590
    %v1388 = vmul.f32 %v703, %v703
    %v1389 = vmul.f32 %v367, %v367
    %v1390 = vmul.f32 %v480, %v480
    %v1391 = vmul.f32 %v593, %v593
    %v1392 = vmul.f32 %v706, %v706
    %v1393 = vmul.f32 %v370, %v370
    %v1394 = vmul.f32 %v483, %v483
    %v1395 = vmul.f32 %v596, %v596
    %v1396 = vmul.f32 %v709, %v709
    %v1397 = vmul.f32 %v373, %v373
    %v1398 = vmul.f32 %v486, %v486
    %v1399 = vmul.f32 %v599, %v599
    %v1400 = vmul.f32 %v712, %v712
    %v1401 = vmul.f32 %v376, %v376
    %v1402 = vmul.f32 %v489, %v489
    %v1403 = vmul.f32 %v602, %v602
    %v1404 = vmul.f32 %v715, %v715
    %v1405 = vmul.f32 %v379, %v379
    %v1406 = vmul.f32 %v492, %v492
    %v1407 = vmul.f32 %v605, %v605
    %v1408 = vmul.f32 %v718, %v718
    %v1409 = vmul.f32 %v382, %v382
    %v1410 = vmul.f32 %v495, %v495
    %v1411 = vmul.f32 %v608, %v608
    %v1412 = vmul.f32 %v721, %v721
    %v1413 = vmul.f32 %v385, %v385
    %v1414 = vmul.f32 %v498, %v498
    %v1415 = vmul.f32 %v611, %v611
    %v1416 = vmul.f32 %v724, %v724
    %v1417 = vmul.f32 %v388, %v388
    %v1418 = vmul.f32 %v501, %v501
    %v1419 = vmul.f32 %v614, %v614
    %v1420 = vmul.f32 %v727, %v727
    %v1421 = vmul.f32 %v391, %v391
    %v1422 = vmul.f32 %v504, %v504
    %v1423 = vmul.f32 %v617, %v617
    %v1424 = vmul.f32 %v730, %v730
    %v1425 = vadd.f32 %v1297, %v1298
    %v1426 = vadd.f32 %v1425, %v1299
    %v1427 = vadd.f32 %v1426, %v1300
    %1428 = vadd.xlane.f32.xlu0 %v1427
    %v1429 = vpop.xlane.xlu0 %1428
    %v1430 = vadd.f32 %v1301, %v1302
    %v1431 = vadd.f32 %v1430, %v1303
    %v1432 = vadd.f32 %v1431, %v1304
    %1433 = vadd.xlane.f32.xlu0 %v1432
    %v1434 = vpop.xlane.xlu0 %1433
    %v1435 = vadd.f32 %v1305, %v1306
    %v1436 = vadd.f32 %v1435, %v1307
    %v1437 = vadd.f32 %v1436, %v1308
    %1438 = vadd.xlane.f32.xlu0 %v1437
    %v1439 = vpop.xlane.xlu0 %1438
    %v1440 = vadd.f32 %v1309, %v1310
    %v1441 = vadd.f32 %v1440, %v1311
    %v1442 = vadd.f32 %v1441, %v1312
    %1443 = vadd.xlane.f32.xlu0 %v1442
    %v1444 = vpop.xlane.xlu0 %1443
    %v1445 = vadd.f32 %v1313, %v1314
    %v1446 = vadd.f32 %v1445, %v1315
    %v1447 = vadd.f32 %v1446, %v1316
    %1448 = vadd.xlane.f32.xlu0 %v1447
    %v1449 = vpop.xlane.xlu0 %1448
    %v1450 = vadd.f32 %v1317, %v1318
    %v1451 = vadd.f32 %v1450, %v1319
    %v1452 = vadd.f32 %v1451, %v1320
    %1453 = vadd.xlane.f32.xlu0 %v1452
    %v1454 = vpop.xlane.xlu0 %1453
    %v1455 = vadd.f32 %v1321, %v1322
    %v1456 = vadd.f32 %v1455, %v1323
    %v1457 = vadd.f32 %v1456, %v1324
    %1458 = vadd.xlane.f32.xlu0 %v1457
    %v1459 = vpop.xlane.xlu0 %1458
    %v1460 = vadd.f32 %v1325, %v1326
    %v1461 = vadd.f32 %v1460, %v1327
    %v1462 = vadd.f32 %v1461, %v1328
    %1463 = vadd.xlane.f32.xlu0 %v1462
    %v1464 = vpop.xlane.xlu0 %1463
    %v1465 = vadd.f32 %v1329, %v1330
    %v1466 = vadd.f32 %v1465, %v1331
    %v1467 = vadd.f32 %v1466, %v1332
    %1468 = vadd.xlane.f32.xlu0 %v1467
    %v1469 = vpop.xlane.xlu0 %1468
    %v1470 = vadd.f32 %v1333, %v1334
    %v1471 = vadd.f32 %v1470, %v1335
    %v1472 = vadd.f32 %v1471, %v1336
    %1473 = vadd.xlane.f32.xlu0 %v1472
    %v1474 = vpop.xlane.xlu0 %1473
    %v1475 = vadd.f32 %v1337, %v1338
    %v1476 = vadd.f32 %v1475, %v1339
    %v1477 = vadd.f32 %v1476, %v1340
    %1478 = vadd.xlane.f32.xlu0 %v1477
    %v1479 = vpop.xlane.xlu0 %1478
    %v1480 = vadd.f32 %v1341, %v1342
    %v1481 = vadd.f32 %v1480, %v1343
    %v1482 = vadd.f32 %v1481, %v1344
    %1483 = vadd.xlane.f32.xlu0 %v1482
    %v1484 = vpop.xlane.xlu0 %1483
    %v1485 = vadd.f32 %v1345, %v1346
    %v1486 = vadd.f32 %v1485, %v1347
    %v1487 = vadd.f32 %v1486, %v1348
    %1488 = vadd.xlane.f32.xlu0 %v1487
    %v1489 = vpop.xlane.xlu0 %1488
    %v1490 = vadd.f32 %v1349, %v1350
    %v1491 = vadd.f32 %v1490, %v1351
    %v1492 = vadd.f32 %v1491, %v1352
    %1493 = vadd.xlane.f32.xlu0 %v1492
    %v1494 = vpop.xlane.xlu0 %1493
    %v1495 = vadd.f32 %v1353, %v1354
    %v1496 = vadd.f32 %v1495, %v1355
    %v1497 = vadd.f32 %v1496, %v1356
    %1498 = vadd.xlane.f32.xlu0 %v1497
    %v1499 = vpop.xlane.xlu0 %1498
    %v1500 = vadd.f32 %v1357, %v1358
    %v1501 = vadd.f32 %v1500, %v1359
    %v1502 = vadd.f32 %v1501, %v1360
    %1503 = vadd.xlane.f32.xlu0 %v1502
    %v1504 = vpop.xlane.xlu0 %1503
    %v1505 = vadd.f32 %v1361, %v1362
    %v1506 = vadd.f32 %v1505, %v1363
    %v1507 = vadd.f32 %v1506, %v1364
    %1508 = vadd.xlane.f32.xlu0 %v1507
    %v1509 = vpop.xlane.xlu0 %1508
    %v1510 = vadd.f32 %v1365, %v1366
    %v1511 = vadd.f32 %v1510, %v1367
    %v1512 = vadd.f32 %v1511, %v1368
    %1513 = vadd.xlane.f32.xlu0 %v1512
    %v1514 = vpop.xlane.xlu0 %1513
    %v1515 = vadd.f32 %v1369, %v1370
    %v1516 = vadd.f32 %v1515, %v1371
    %v1517 = vadd.f32 %v1516, %v1372
    %1518 = vadd.xlane.f32.xlu0 %v1517
    %v1519 = vpop.xlane.xlu0 %1518
    %v1520 = vadd.f32 %v1373, %v1374
    %v1521 = vadd.f32 %v1520, %v1375
    %v1522 = vadd.f32 %v1521, %v1376
    %1523 = vadd.xlane.f32.xlu0 %v1522
    %v1524 = vpop.xlane.xlu0 %1523
    %v1525 = vadd.f32 %v1377, %v1378
    %v1526 = vadd.f32 %v1525, %v1379
    %v1527 = vadd.f32 %v1526, %v1380
    %1528 = vadd.xlane.f32.xlu0 %v1527
    %v1529 = vpop.xlane.xlu0 %1528
    %v1530 = vadd.f32 %v1381, %v1382
    %v1531 = vadd.f32 %v1530, %v1383
    %v1532 = vadd.f32 %v1531, %v1384
    %1533 = vadd.xlane.f32.xlu0 %v1532
    %v1534 = vpop.xlane.xlu0 %1533
    %v1535 = vadd.f32 %v1385, %v1386
    %v1536 = vadd.f32 %v1535, %v1387
    %v1537 = vadd.f32 %v1536, %v1388
    %1538 = vadd.xlane.f32.xlu0 %v1537
    %v1539 = vpop.xlane.xlu0 %1538
    %v1540 = vadd.f32 %v1389, %v1390
    %v1541 = vadd.f32 %v1540, %v1391
    %v1542 = vadd.f32 %v1541, %v1392
    %1543 = vadd.xlane.f32.xlu0 %v1542
    %v1544 = vpop.xlane.xlu0 %1543
    %v1545 = vadd.f32 %v1393, %v1394
    %v1546 = vadd.f32 %v1545, %v1395
    %v1547 = vadd.f32 %v1546, %v1396
    %1548 = vadd.xlane.f32.xlu0 %v1547
    %v1549 = vpop.xlane.xlu0 %1548
    %v1550 = vadd.f32 %v1397, %v1398
    %v1551 = vadd.f32 %v1550, %v1399
    %v1552 = vadd.f32 %v1551, %v1400
    %1553 = vadd.xlane.f32.xlu0 %v1552
    %v1554 = vpop.xlane.xlu0 %1553
    %v1555 = vadd.f32 %v1401, %v1402
    %v1556 = vadd.f32 %v1555, %v1403
    %v1557 = vadd.f32 %v1556, %v1404
    %1558 = vadd.xlane.f32.xlu0 %v1557
    %v1559 = vpop.xlane.xlu0 %1558
    %v1560 = vadd.f32 %v1405, %v1406
    %v1561 = vadd.f32 %v1560, %v1407
    %v1562 = vadd.f32 %v1561, %v1408
    %1563 = vadd.xlane.f32.xlu0 %v1562
    %v1564 = vpop.xlane.xlu0 %1563
    %v1565 = vadd.f32 %v1409, %v1410
    %v1566 = vadd.f32 %v1565, %v1411
    %v1567 = vadd.f32 %v1566, %v1412
    %1568 = vadd.xlane.f32.xlu0 %v1567
    %v1569 = vpop.xlane.xlu0 %1568
    %v1570 = vadd.f32 %v1413, %v1414
    %v1571 = vadd.f32 %v1570, %v1415
    %v1572 = vadd.f32 %v1571, %v1416
    %1573 = vadd.xlane.f32.xlu0 %v1572
    %v1574 = vpop.xlane.xlu0 %1573
    %v1575 = vadd.f32 %v1417, %v1418
    %v1576 = vadd.f32 %v1575, %v1419
    %v1577 = vadd.f32 %v1576, %v1420
    %1578 = vadd.xlane.f32.xlu0 %v1577
    %v1579 = vpop.xlane.xlu0 %1578
    %v1580 = vadd.f32 %v1421, %v1422
    %v1581 = vadd.f32 %v1580, %v1423
    %v1582 = vadd.f32 %v1581, %v1424
    %1583 = vadd.xlane.f32.xlu0 %v1582
    %v1584 = vpop.xlane.xlu0 %1583
    %v1585 = vmax.f32 %v1429, 1e-24
    %v1586 = vmax.f32 %v1434, 1e-24
    %v1587 = vmax.f32 %v1439, 1e-24
    %v1588 = vmax.f32 %v1444, 1e-24
    %v1589 = vmax.f32 %v1449, 1e-24
    %v1590 = vmax.f32 %v1454, 1e-24
    %v1591 = vmax.f32 %v1459, 1e-24
    %v1592 = vmax.f32 %v1464, 1e-24
    %v1593 = vmax.f32 %v1469, 1e-24
    %v1594 = vmax.f32 %v1474, 1e-24
    %v1595 = vmax.f32 %v1479, 1e-24
    %v1596 = vmax.f32 %v1484, 1e-24
    %v1597 = vmax.f32 %v1489, 1e-24
    %v1598 = vmax.f32 %v1494, 1e-24
    %v1599 = vmax.f32 %v1499, 1e-24
    %v1600 = vmax.f32 %v1504, 1e-24
    %v1601 = vmax.f32 %v1509, 1e-24
    %v1602 = vmax.f32 %v1514, 1e-24
    %v1603 = vmax.f32 %v1519, 1e-24
    %v1604 = vmax.f32 %v1524, 1e-24
    %v1605 = vmax.f32 %v1529, 1e-24
    %v1606 = vmax.f32 %v1534, 1e-24
    %v1607 = vmax.f32 %v1539, 1e-24
    %v1608 = vmax.f32 %v1544, 1e-24
    %v1609 = vmax.f32 %v1549, 1e-24
    %v1610 = vmax.f32 %v1554, 1e-24
    %v1611 = vmax.f32 %v1559, 1e-24
    %v1612 = vmax.f32 %v1564, 1e-24
    %v1613 = vmax.f32 %v1569, 1e-24
    %v1614 = vmax.f32 %v1574, 1e-24
    %v1615 = vmax.f32 %v1579, 1e-24
    %v1616 = vmax.f32 %v1584, 1e-24
    %v1617 = vrsqrt.pop %v1585
    %v1618 = vmul.f32 %v1617, %v1585
    %v1619 = vmul.f32 %v1618, %v1617
    %v1620 = vmul.f32 0.5, %v1619
    %v1621 = vsub.f32 1.5, %v1620
    %v1622 = vmul.f32 %v1617, %v1621
    %vm1623 = vweird.f32 %v1585
    %vm1624 = vweird.f32 %v1617
    %vm1625 = vmor %vm1623, %vm1624
    %v1626 = vsel %vm1625, %v1617, %v1622
    %v1627 = vrsqrt.pop %v1586
    %v1628 = vmul.f32 %v1627, %v1586
    %v1629 = vmul.f32 %v1628, %v1627
    %v1630 = vmul.f32 0.5, %v1629
    %v1631 = vsub.f32 1.5, %v1630
    %v1632 = vmul.f32 %v1627, %v1631
    %vm1633 = vweird.f32 %v1586
    %vm1634 = vweird.f32 %v1627
    %vm1635 = vmor %vm1633, %vm1634
    %v1636 = vsel %vm1635, %v1627, %v1632
    %v1637 = vrsqrt.pop %v1587
    %v1638 = vmul.f32 %v1637, %v1587
    %v1639 = vmul.f32 %v1638, %v1637
    %v1640 = vmul.f32 0.5, %v1639
    %v1641 = vsub.f32 1.5, %v1640
    %v1642 = vmul.f32 %v1637, %v1641
    %vm1643 = vweird.f32 %v1587
    %vm1644 = vweird.f32 %v1637
    %vm1645 = vmor %vm1643, %vm1644
    %v1646 = vsel %vm1645, %v1637, %v1642
    %v1647 = vrsqrt.pop %v1588
    %v1648 = vmul.f32 %v1647, %v1588
    %v1649 = vmul.f32 %v1648, %v1647
    %v1650 = vmul.f32 0.5, %v1649
    %v1651 = vsub.f32 1.5, %v1650
    %v1652 = vmul.f32 %v1647, %v1651
    %vm1653 = vweird.f32 %v1588
    %vm1654 = vweird.f32 %v1647
    %vm1655 = vmor %vm1653, %vm1654
    %v1656 = vsel %vm1655, %v1647, %v1652
    %v1657 = vrsqrt.pop %v1589
    %v1658 = vmul.f32 %v1657, %v1589
    %v1659 = vmul.f32 %v1658, %v1657
    %v1660 = vmul.f32 0.5, %v1659
    %v1661 = vsub.f32 1.5, %v1660
    %v1662 = vmul.f32 %v1657, %v1661
    %vm1663 = vweird.f32 %v1589
    %vm1664 = vweird.f32 %v1657
    %vm1665 = vmor %vm1663, %vm1664
    %v1666 = vsel %vm1665, %v1657, %v1662
    %v1667 = vrsqrt.pop %v1590
    %v1668 = vmul.f32 %v1667, %v1590
    %v1669 = vmul.f32 %v1668, %v1667
    %v1670 = vmul.f32 0.5, %v1669
    %v1671 = vsub.f32 1.5, %v1670
    %v1672 = vmul.f32 %v1667, %v1671
    %vm1673 = vweird.f32 %v1590
    %vm1674 = vweird.f32 %v1667
    %vm1675 = vmor %vm1673, %vm1674
    %v1676 = vsel %vm1675, %v1667, %v1672
    %v1677 = vrsqrt.pop %v1591
    %v1678 = vmul.f32 %v1677, %v1591
    %v1679 = vmul.f32 %v1678, %v1677
    %v1680 = vmul.f32 0.5, %v1679
    %v1681 = vsub.f32 1.5, %v1680
    %v1682 = vmul.f32 %v1677, %v1681
    %vm1683 = vweird.f32 %v1591
    %vm1684 = vweird.f32 %v1677
    %vm1685 = vmor %vm1683, %vm1684
    %v1686 = vsel %vm1685, %v1677, %v1682
    %v1687 = vrsqrt.pop %v1592
    %v1688 = vmul.f32 %v1687, %v1592
    %v1689 = vmul.f32 %v1688, %v1687
    %v1690 = vmul.f32 0.5, %v1689
    %v1691 = vsub.f32 1.5, %v1690
    %v1692 = vmul.f32 %v1687, %v1691
    %vm1693 = vweird.f32 %v1592
    %vm1694 = vweird.f32 %v1687
    %vm1695 = vmor %vm1693, %vm1694
    %v1696 = vsel %vm1695, %v1687, %v1692
    %v1697 = vrsqrt.pop %v1593
    %v1698 = vmul.f32 %v1697, %v1593
    %v1699 = vmul.f32 %v1698, %v1697
    %v1700 = vmul.f32 0.5, %v1699
    %v1701 = vsub.f32 1.5, %v1700
    %v1702 = vmul.f32 %v1697, %v1701
    %vm1703 = vweird.f32 %v1593
    %vm1704 = vweird.f32 %v1697
    %vm1705 = vmor %vm1703, %vm1704
    %v1706 = vsel %vm1705, %v1697, %v1702
    %v1707 = vrsqrt.pop %v1594
    %v1708 = vmul.f32 %v1707, %v1594
    %v1709 = vmul.f32 %v1708, %v1707
    %v1710 = vmul.f32 0.5, %v1709
    %v1711 = vsub.f32 1.5, %v1710
    %v1712 = vmul.f32 %v1707, %v1711
    %vm1713 = vweird.f32 %v1594
    %vm1714 = vweird.f32 %v1707
    %vm1715 = vmor %vm1713, %vm1714
    %v1716 = vsel %vm1715, %v1707, %v1712
    %v1717 = vrsqrt.pop %v1595
    %v1718 = vmul.f32 %v1717, %v1595
    %v1719 = vmul.f32 %v1718, %v1717
    %v1720 = vmul.f32 0.5, %v1719
    %v1721 = vsub.f32 1.5, %v1720
    %v1722 = vmul.f32 %v1717, %v1721
    %vm1723 = vweird.f32 %v1595
    %vm1724 = vweird.f32 %v1717
    %vm1725 = vmor %vm1723, %vm1724
    %v1726 = vsel %vm1725, %v1717, %v1722
    %v1727 = vrsqrt.pop %v1596
    %v1728 = vmul.f32 %v1727, %v1596
    %v1729 = vmul.f32 %v1728, %v1727
    %v1730 = vmul.f32 0.5, %v1729
    %v1731 = vsub.f32 1.5, %v1730
    %v1732 = vmul.f32 %v1727, %v1731
    %vm1733 = vweird.f32 %v1596
    %vm1734 = vweird.f32 %v1727
    %vm1735 = vmor %vm1733, %vm1734
    %v1736 = vsel %vm1735, %v1727, %v1732
    %v1737 = vrsqrt.pop %v1597
    %v1738 = vmul.f32 %v1737, %v1597
    %v1739 = vmul.f32 %v1738, %v1737
    %v1740 = vmul.f32 0.5, %v1739
    %v1741 = vsub.f32 1.5, %v1740
    %v1742 = vmul.f32 %v1737, %v1741
    %vm1743 = vweird.f32 %v1597
    %vm1744 = vweird.f32 %v1737
    %vm1745 = vmor %vm1743, %vm1744
    %v1746 = vsel %vm1745, %v1737, %v1742
    %v1747 = vrsqrt.pop %v1598
    %v1748 = vmul.f32 %v1747, %v1598
    %v1749 = vmul.f32 %v1748, %v1747
    %v1750 = vmul.f32 0.5, %v1749
    %v1751 = vsub.f32 1.5, %v1750
    %v1752 = vmul.f32 %v1747, %v1751
    %vm1753 = vweird.f32 %v1598
    %vm1754 = vweird.f32 %v1747
    %vm1755 = vmor %vm1753, %vm1754
    %v1756 = vsel %vm1755, %v1747, %v1752
    %v1757 = vrsqrt.pop %v1599
    %v1758 = vmul.f32 %v1757, %v1599
    %v1759 = vmul.f32 %v1758, %v1757
    %v1760 = vmul.f32 0.5, %v1759
    %v1761 = vsub.f32 1.5, %v1760
    %v1762 = vmul.f32 %v1757, %v1761
    %vm1763 = vweird.f32 %v1599
    %vm1764 = vweird.f32 %v1757
    %vm1765 = vmor %vm1763, %vm1764
    %v1766 = vsel %vm1765, %v1757, %v1762
    %v1767 = vrsqrt.pop %v1600
    %v1768 = vmul.f32 %v1767, %v1600
    %v1769 = vmul.f32 %v1768, %v1767
    %v1770 = vmul.f32 0.5, %v1769
    %v1771 = vsub.f32 1.5, %v1770
    %v1772 = vmul.f32 %v1767, %v1771
    %vm1773 = vweird.f32 %v1600
    %vm1774 = vweird.f32 %v1767
    %vm1775 = vmor %vm1773, %vm1774
    %v1776 = vsel %vm1775, %v1767, %v1772
    %v1777 = vrsqrt.pop %v1601
    %v1778 = vmul.f32 %v1777, %v1601
    %v1779 = vmul.f32 %v1778, %v1777
    %v1780 = vmul.f32 0.5, %v1779
    %v1781 = vsub.f32 1.5, %v1780
    %v1782 = vmul.f32 %v1777, %v1781
    %vm1783 = vweird.f32 %v1601
    %vm1784 = vweird.f32 %v1777
    %vm1785 = vmor %vm1783, %vm1784
    %v1786 = vsel %vm1785, %v1777, %v1782
    %v1787 = vrsqrt.pop %v1602
    %v1788 = vmul.f32 %v1787, %v1602
    %v1789 = vmul.f32 %v1788, %v1787
    %v1790 = vmul.f32 0.5, %v1789
    %v1791 = vsub.f32 1.5, %v1790
    %v1792 = vmul.f32 %v1787, %v1791
    %vm1793 = vweird.f32 %v1602
    %vm1794 = vweird.f32 %v1787
    %vm1795 = vmor %vm1793, %vm1794
    %v1796 = vsel %vm1795, %v1787, %v1792
    %v1797 = vrsqrt.pop %v1603
    %v1798 = vmul.f32 %v1797, %v1603
    %v1799 = vmul.f32 %v1798, %v1797
    %v1800 = vmul.f32 0.5, %v1799
    %v1801 = vsub.f32 1.5, %v1800
    %v1802 = vmul.f32 %v1797, %v1801
    %vm1803 = vweird.f32 %v1603
    %vm1804 = vweird.f32 %v1797
    %vm1805 = vmor %vm1803, %vm1804
    %v1806 = vsel %vm1805, %v1797, %v1802
    %v1807 = vrsqrt.pop %v1604
    %v1808 = vmul.f32 %v1807, %v1604
    %v1809 = vmul.f32 %v1808, %v1807
    %v1810 = vmul.f32 0.5, %v1809
    %v1811 = vsub.f32 1.5, %v1810
    %v1812 = vmul.f32 %v1807, %v1811
    %vm1813 = vweird.f32 %v1604
    %vm1814 = vweird.f32 %v1807
    %vm1815 = vmor %vm1813, %vm1814
    %v1816 = vsel %vm1815, %v1807, %v1812
    %v1817 = vrsqrt.pop %v1605
    %v1818 = vmul.f32 %v1817, %v1605
    %v1819 = vmul.f32 %v1818, %v1817
    %v1820 = vmul.f32 0.5, %v1819
    %v1821 = vsub.f32 1.5, %v1820
    %v1822 = vmul.f32 %v1817, %v1821
    %vm1823 = vweird.f32 %v1605
    %vm1824 = vweird.f32 %v1817
    %vm1825 = vmor %vm1823, %vm1824
    %v1826 = vsel %vm1825, %v1817, %v1822
    %v1827 = vrsqrt.pop %v1606
    %v1828 = vmul.f32 %v1827, %v1606
    %v1829 = vmul.f32 %v1828, %v1827
    %v1830 = vmul.f32 0.5, %v1829
    %v1831 = vsub.f32 1.5, %v1830
    %v1832 = vmul.f32 %v1827, %v1831
    %vm1833 = vweird.f32 %v1606
    %vm1834 = vweird.f32 %v1827
    %vm1835 = vmor %vm1833, %vm1834
    %v1836 = vsel %vm1835, %v1827, %v1832
    %v1837 = vrsqrt.pop %v1607
    %v1838 = vmul.f32 %v1837, %v1607
    %v1839 = vmul.f32 %v1838, %v1837
    %v1840 = vmul.f32 0.5, %v1839
    %v1841 = vsub.f32 1.5, %v1840
    %v1842 = vmul.f32 %v1837, %v1841
    %vm1843 = vweird.f32 %v1607
    %vm1844 = vweird.f32 %v1837
    %vm1845 = vmor %vm1843, %vm1844
    %v1846 = vsel %vm1845, %v1837, %v1842
    %v1847 = vrsqrt.pop %v1608
    %v1848 = vmul.f32 %v1847, %v1608
    %v1849 = vmul.f32 %v1848, %v1847
    %v1850 = vmul.f32 0.5, %v1849
    %v1851 = vsub.f32 1.5, %v1850
    %v1852 = vmul.f32 %v1847, %v1851
    %vm1853 = vweird.f32 %v1608
    %vm1854 = vweird.f32 %v1847
    %vm1855 = vmor %vm1853, %vm1854
    %v1856 = vsel %vm1855, %v1847, %v1852
    %v1857 = vrsqrt.pop %v1609
    %v1858 = vmul.f32 %v1857, %v1609
    %v1859 = vmul.f32 %v1858, %v1857
    %v1860 = vmul.f32 0.5, %v1859
    %v1861 = vsub.f32 1.5, %v1860
    %v1862 = vmul.f32 %v1857, %v1861
    %vm1863 = vweird.f32 %v1609
    %vm1864 = vweird.f32 %v1857
    %vm1865 = vmor %vm1863, %vm1864
    %v1866 = vsel %vm1865, %v1857, %v1862
    %v1867 = vrsqrt.pop %v1610
    %v1868 = vmul.f32 %v1867, %v1610
    %v1869 = vmul.f32 %v1868, %v1867
    %v1870 = vmul.f32 0.5, %v1869
    %v1871 = vsub.f32 1.5, %v1870
    %v1872 = vmul.f32 %v1867, %v1871
    %vm1873 = vweird.f32 %v1610
    %vm1874 = vweird.f32 %v1867
    %vm1875 = vmor %vm1873, %vm1874
    %v1876 = vsel %vm1875, %v1867, %v1872
    %v1877 = vrsqrt.pop %v1611
    %v1878 = vmul.f32 %v1877, %v1611
    %v1879 = vmul.f32 %v1878, %v1877
    %v1880 = vmul.f32 0.5, %v1879
    %v1881 = vsub.f32 1.5, %v1880
    %v1882 = vmul.f32 %v1877, %v1881
    %vm1883 = vweird.f32 %v1611
    %vm1884 = vweird.f32 %v1877
    %vm1885 = vmor %vm1883, %vm1884
    %v1886 = vsel %vm1885, %v1877, %v1882
    %v1887 = vrsqrt.pop %v1612
    %v1888 = vmul.f32 %v1887, %v1612
    %v1889 = vmul.f32 %v1888, %v1887
    %v1890 = vmul.f32 0.5, %v1889
    %v1891 = vsub.f32 1.5, %v1890
    %v1892 = vmul.f32 %v1887, %v1891
    %vm1893 = vweird.f32 %v1612
    %vm1894 = vweird.f32 %v1887
    %vm1895 = vmor %vm1893, %vm1894
    %v1896 = vsel %vm1895, %v1887, %v1892
    %v1897 = vrsqrt.pop %v1613
    %v1898 = vmul.f32 %v1897, %v1613
    %v1899 = vmul.f32 %v1898, %v1897
    %v1900 = vmul.f32 0.5, %v1899
    %v1901 = vsub.f32 1.5, %v1900
    %v1902 = vmul.f32 %v1897, %v1901
    %vm1903 = vweird.f32 %v1613
    %vm1904 = vweird.f32 %v1897
    %vm1905 = vmor %vm1903, %vm1904
    %v1906 = vsel %vm1905, %v1897, %v1902
    %v1907 = vrsqrt.pop %v1614
    %v1908 = vmul.f32 %v1907, %v1614
    %v1909 = vmul.f32 %v1908, %v1907
    %v1910 = vmul.f32 0.5, %v1909
    %v1911 = vsub.f32 1.5, %v1910
    %v1912 = vmul.f32 %v1907, %v1911
    %vm1913 = vweird.f32 %v1614
    %vm1914 = vweird.f32 %v1907
    %vm1915 = vmor %vm1913, %vm1914
    %v1916 = vsel %vm1915, %v1907, %v1912
    %v1917 = vrsqrt.pop %v1615
    %v1918 = vmul.f32 %v1917, %v1615
    %v1919 = vmul.f32 %v1918, %v1917
    %v1920 = vmul.f32 0.5, %v1919
    %v1921 = vsub.f32 1.5, %v1920
    %v1922 = vmul.f32 %v1917, %v1921
    %vm1923 = vweird.f32 %v1615
    %vm1924 = vweird.f32 %v1917
    %vm1925 = vmor %vm1923, %vm1924
    %v1926 = vsel %vm1925, %v1917, %v1922
    %v1927 = vrsqrt.pop %v1616
    %v1928 = vmul.f32 %v1927, %v1616
    %v1929 = vmul.f32 %v1928, %v1927
    %v1930 = vmul.f32 0.5, %v1929
    %v1931 = vsub.f32 1.5, %v1930
    %v1932 = vmul.f32 %v1927, %v1931
    %vm1933 = vweird.f32 %v1616
    %vm1934 = vweird.f32 %v1927
    %vm1935 = vmor %vm1933, %vm1934
    %v1936 = vsel %vm1935, %v1927, %v1932
    %v1937 = vmul.f32 %v750, %v750
    %v1938 = vmul.f32 %v863, %v863
    %v1939 = vmul.f32 %v976, %v976
    %v1940 = vmul.f32 %v1089, %v1089
    %v1941 = vmul.f32 %v753, %v753
    %v1942 = vmul.f32 %v866, %v866
    %v1943 = vmul.f32 %v979, %v979
    %v1944 = vmul.f32 %v1092, %v1092
    %v1945 = vmul.f32 %v756, %v756
    %v1946 = vmul.f32 %v869, %v869
    %v1947 = vmul.f32 %v982, %v982
    %v1948 = vmul.f32 %v1095, %v1095
    %v1949 = vmul.f32 %v759, %v759
    %v1950 = vmul.f32 %v872, %v872
    %v1951 = vmul.f32 %v985, %v985
    %v1952 = vmul.f32 %v1098, %v1098
    %v1953 = vmul.f32 %v762, %v762
    %v1954 = vmul.f32 %v875, %v875
    %v1955 = vmul.f32 %v988, %v988
    %v1956 = vmul.f32 %v1101, %v1101
    %v1957 = vmul.f32 %v765, %v765
    %v1958 = vmul.f32 %v878, %v878
    %v1959 = vmul.f32 %v991, %v991
    %v1960 = vmul.f32 %v1104, %v1104
    %v1961 = vmul.f32 %v768, %v768
    %v1962 = vmul.f32 %v881, %v881
    %v1963 = vmul.f32 %v994, %v994
    %v1964 = vmul.f32 %v1107, %v1107
    %v1965 = vmul.f32 %v771, %v771
    %v1966 = vmul.f32 %v884, %v884
    %v1967 = vmul.f32 %v997, %v997
    %v1968 = vmul.f32 %v1110, %v1110
    %v1969 = vmul.f32 %v774, %v774
    %v1970 = vmul.f32 %v887, %v887
    %v1971 = vmul.f32 %v1000, %v1000
    %v1972 = vmul.f32 %v1113, %v1113
    %v1973 = vmul.f32 %v777, %v777
    %v1974 = vmul.f32 %v890, %v890
    %v1975 = vmul.f32 %v1003, %v1003
    %v1976 = vmul.f32 %v1116, %v1116
    %v1977 = vmul.f32 %v780, %v780
    %v1978 = vmul.f32 %v893, %v893
    %v1979 = vmul.f32 %v1006, %v1006
    %v1980 = vmul.f32 %v1119, %v1119
    %v1981 = vmul.f32 %v783, %v783
    %v1982 = vmul.f32 %v896, %v896
    %v1983 = vmul.f32 %v1009, %v1009
    %v1984 = vmul.f32 %v1122, %v1122
    %v1985 = vmul.f32 %v786, %v786
    %v1986 = vmul.f32 %v899, %v899
    %v1987 = vmul.f32 %v1012, %v1012
    %v1988 = vmul.f32 %v1125, %v1125
    %v1989 = vmul.f32 %v789, %v789
    %v1990 = vmul.f32 %v902, %v902
    %v1991 = vmul.f32 %v1015, %v1015
    %v1992 = vmul.f32 %v1128, %v1128
    %v1993 = vmul.f32 %v792, %v792
    %v1994 = vmul.f32 %v905, %v905
    %v1995 = vmul.f32 %v1018, %v1018
    %v1996 = vmul.f32 %v1131, %v1131
    %v1997 = vmul.f32 %v795, %v795
    %v1998 = vmul.f32 %v908, %v908
    %v1999 = vmul.f32 %v1021, %v1021
    %v2000 = vmul.f32 %v1134, %v1134
    %v2001 = vmul.f32 %v798, %v798
    %v2002 = vmul.f32 %v911, %v911
    %v2003 = vmul.f32 %v1024, %v1024
    %v2004 = vmul.f32 %v1137, %v1137
    %v2005 = vmul.f32 %v801, %v801
    %v2006 = vmul.f32 %v914, %v914
    %v2007 = vmul.f32 %v1027, %v1027
    %v2008 = vmul.f32 %v1140, %v1140
    %v2009 = vmul.f32 %v804, %v804
    %v2010 = vmul.f32 %v917, %v917
    %v2011 = vmul.f32 %v1030, %v1030
    %v2012 = vmul.f32 %v1143, %v1143
    %v2013 = vmul.f32 %v807, %v807
    %v2014 = vmul.f32 %v920, %v920
    %v2015 = vmul.f32 %v1033, %v1033
    %v2016 = vmul.f32 %v1146, %v1146
    %v2017 = vmul.f32 %v810, %v810
    %v2018 = vmul.f32 %v923, %v923
    %v2019 = vmul.f32 %v1036, %v1036
    %v2020 = vmul.f32 %v1149, %v1149
    %v2021 = vmul.f32 %v813, %v813
    %v2022 = vmul.f32 %v926, %v926
    %v2023 = vmul.f32 %v1039, %v1039
    %v2024 = vmul.f32 %v1152, %v1152
    %v2025 = vmul.f32 %v816, %v816
    %v2026 = vmul.f32 %v929, %v929
    %v2027 = vmul.f32 %v1042, %v1042
    %v2028 = vmul.f32 %v1155, %v1155
    %v2029 = vmul.f32 %v819, %v819
    %v2030 = vmul.f32 %v932, %v932
    %v2031 = vmul.f32 %v1045, %v1045
    %v2032 = vmul.f32 %v1158, %v1158
    %v2033 = vmul.f32 %v822, %v822
    %v2034 = vmul.f32 %v935, %v935
    %v2035 = vmul.f32 %v1048, %v1048
    %v2036 = vmul.f32 %v1161, %v1161
    %v2037 = vmul.f32 %v825, %v825
    %v2038 = vmul.f32 %v938, %v938
    %v2039 = vmul.f32 %v1051, %v1051
    %v2040 = vmul.f32 %v1164, %v1164
    %v2041 = vmul.f32 %v828, %v828
    %v2042 = vmul.f32 %v941, %v941
    %v2043 = vmul.f32 %v1054, %v1054
    %v2044 = vmul.f32 %v1167, %v1167
    %v2045 = vmul.f32 %v831, %v831
    %v2046 = vmul.f32 %v944, %v944
    %v2047 = vmul.f32 %v1057, %v1057
    %v2048 = vmul.f32 %v1170, %v1170
    %v2049 = vmul.f32 %v834, %v834
    %v2050 = vmul.f32 %v947, %v947
    %v2051 = vmul.f32 %v1060, %v1060
    %v2052 = vmul.f32 %v1173, %v1173
    %v2053 = vmul.f32 %v837, %v837
    %v2054 = vmul.f32 %v950, %v950
    %v2055 = vmul.f32 %v1063, %v1063
    %v2056 = vmul.f32 %v1176, %v1176
    %v2057 = vmul.f32 %v840, %v840
    %v2058 = vmul.f32 %v953, %v953
    %v2059 = vmul.f32 %v1066, %v1066
    %v2060 = vmul.f32 %v1179, %v1179
    %v2061 = vmul.f32 %v843, %v843
    %v2062 = vmul.f32 %v956, %v956
    %v2063 = vmul.f32 %v1069, %v1069
    %v2064 = vmul.f32 %v1182, %v1182
    %v2065 = vadd.f32 %v1937, %v1938
    %v2066 = vadd.f32 %v2065, %v1939
    %v2067 = vadd.f32 %v2066, %v1940
    %2068 = vadd.xlane.f32.xlu0 %v2067
    %v2069 = vpop.xlane.xlu0 %2068
    %v2070 = vadd.f32 %v1941, %v1942
    %v2071 = vadd.f32 %v2070, %v1943
    %v2072 = vadd.f32 %v2071, %v1944
    %2073 = vadd.xlane.f32.xlu0 %v2072
    %v2074 = vpop.xlane.xlu0 %2073
    %v2075 = vadd.f32 %v1945, %v1946
    %v2076 = vadd.f32 %v2075, %v1947
    %v2077 = vadd.f32 %v2076, %v1948
    %2078 = vadd.xlane.f32.xlu0 %v2077
    %v2079 = vpop.xlane.xlu0 %2078
    %v2080 = vadd.f32 %v1949, %v1950
    %v2081 = vadd.f32 %v2080, %v1951
    %v2082 = vadd.f32 %v2081, %v1952
    %2083 = vadd.xlane.f32.xlu0 %v2082
    %v2084 = vpop.xlane.xlu0 %2083
    %v2085 = vadd.f32 %v1953, %v1954
    %v2086 = vadd.f32 %v2085, %v1955
    %v2087 = vadd.f32 %v2086, %v1956
    %2088 = vadd.xlane.f32.xlu0 %v2087
    %v2089 = vpop.xlane.xlu0 %2088
    %v2090 = vadd.f32 %v1957, %v1958
    %v2091 = vadd.f32 %v2090, %v1959
    %v2092 = vadd.f32 %v2091, %v1960
    %2093 = vadd.xlane.f32.xlu0 %v2092
    %v2094 = vpop.xlane.xlu0 %2093
    %v2095 = vadd.f32 %v1961, %v1962
    %v2096 = vadd.f32 %v2095, %v1963
    %v2097 = vadd.f32 %v2096, %v1964
    %2098 = vadd.xlane.f32.xlu0 %v2097
    %v2099 = vpop.xlane.xlu0 %2098
    %v2100 = vadd.f32 %v1965, %v1966
    %v2101 = vadd.f32 %v2100, %v1967
    %v2102 = vadd.f32 %v2101, %v1968
    %2103 = vadd.xlane.f32.xlu0 %v2102
    %v2104 = vpop.xlane.xlu0 %2103
    %v2105 = vadd.f32 %v1969, %v1970
    %v2106 = vadd.f32 %v2105, %v1971
    %v2107 = vadd.f32 %v2106, %v1972
    %2108 = vadd.xlane.f32.xlu0 %v2107
    %v2109 = vpop.xlane.xlu0 %2108
    %v2110 = vadd.f32 %v1973, %v1974
    %v2111 = vadd.f32 %v2110, %v1975
    %v2112 = vadd.f32 %v2111, %v1976
    %2113 = vadd.xlane.f32.xlu0 %v2112
    %v2114 = vpop.xlane.xlu0 %2113
    %v2115 = vadd.f32 %v1977, %v1978
    %v2116 = vadd.f32 %v2115, %v1979
    %v2117 = vadd.f32 %v2116, %v1980
    %2118 = vadd.xlane.f32.xlu0 %v2117
    %v2119 = vpop.xlane.xlu0 %2118
    %v2120 = vadd.f32 %v1981, %v1982
    %v2121 = vadd.f32 %v2120, %v1983
    %v2122 = vadd.f32 %v2121, %v1984
    %2123 = vadd.xlane.f32.xlu0 %v2122
    %v2124 = vpop.xlane.xlu0 %2123
    %v2125 = vadd.f32 %v1985, %v1986
    %v2126 = vadd.f32 %v2125, %v1987
    %v2127 = vadd.f32 %v2126, %v1988
    %2128 = vadd.xlane.f32.xlu0 %v2127
    %v2129 = vpop.xlane.xlu0 %2128
    %v2130 = vadd.f32 %v1989, %v1990
    %v2131 = vadd.f32 %v2130, %v1991
    %v2132 = vadd.f32 %v2131, %v1992
    %2133 = vadd.xlane.f32.xlu0 %v2132
    %v2134 = vpop.xlane.xlu0 %2133
    %v2135 = vadd.f32 %v1993, %v1994
    %v2136 = vadd.f32 %v2135, %v1995
    %v2137 = vadd.f32 %v2136, %v1996
    %2138 = vadd.xlane.f32.xlu0 %v2137
    %v2139 = vpop.xlane.xlu0 %2138
    %v2140 = vadd.f32 %v1997, %v1998
    %v2141 = vadd.f32 %v2140, %v1999
    %v2142 = vadd.f32 %v2141, %v2000
    %2143 = vadd.xlane.f32.xlu0 %v2142
    %v2144 = vpop.xlane.xlu0 %2143
    %v2145 = vadd.f32 %v2001, %v2002
    %v2146 = vadd.f32 %v2145, %v2003
    %v2147 = vadd.f32 %v2146, %v2004
    %2148 = vadd.xlane.f32.xlu0 %v2147
    %v2149 = vpop.xlane.xlu0 %2148
    %v2150 = vadd.f32 %v2005, %v2006
    %v2151 = vadd.f32 %v2150, %v2007
    %v2152 = vadd.f32 %v2151, %v2008
    %2153 = vadd.xlane.f32.xlu0 %v2152
    %v2154 = vpop.xlane.xlu0 %2153
    %v2155 = vadd.f32 %v2009, %v2010
    %v2156 = vadd.f32 %v2155, %v2011
    %v2157 = vadd.f32 %v2156, %v2012
    %2158 = vadd.xlane.f32.xlu0 %v2157
    %v2159 = vpop.xlane.xlu0 %2158
    %v2160 = vadd.f32 %v2013, %v2014
    %v2161 = vadd.f32 %v2160, %v2015
    %v2162 = vadd.f32 %v2161, %v2016
    %2163 = vadd.xlane.f32.xlu0 %v2162
    %v2164 = vpop.xlane.xlu0 %2163
    %v2165 = vadd.f32 %v2017, %v2018
    %v2166 = vadd.f32 %v2165, %v2019
    %v2167 = vadd.f32 %v2166, %v2020
    %2168 = vadd.xlane.f32.xlu0 %v2167
    %v2169 = vpop.xlane.xlu0 %2168
    %v2170 = vadd.f32 %v2021, %v2022
    %v2171 = vadd.f32 %v2170, %v2023
    %v2172 = vadd.f32 %v2171, %v2024
    %2173 = vadd.xlane.f32.xlu0 %v2172
    %v2174 = vpop.xlane.xlu0 %2173
    %v2175 = vadd.f32 %v2025, %v2026
    %v2176 = vadd.f32 %v2175, %v2027
    %v2177 = vadd.f32 %v2176, %v2028
    %2178 = vadd.xlane.f32.xlu0 %v2177
    %v2179 = vpop.xlane.xlu0 %2178
    %v2180 = vadd.f32 %v2029, %v2030
    %v2181 = vadd.f32 %v2180, %v2031
    %v2182 = vadd.f32 %v2181, %v2032
    %2183 = vadd.xlane.f32.xlu0 %v2182
    %v2184 = vpop.xlane.xlu0 %2183
    %v2185 = vadd.f32 %v2033, %v2034
    %v2186 = vadd.f32 %v2185, %v2035
    %v2187 = vadd.f32 %v2186, %v2036
    %2188 = vadd.xlane.f32.xlu0 %v2187
    %v2189 = vpop.xlane.xlu0 %2188
    %v2190 = vadd.f32 %v2037, %v2038
    %v2191 = vadd.f32 %v2190, %v2039
    %v2192 = vadd.f32 %v2191, %v2040
    %2193 = vadd.xlane.f32.xlu0 %v2192
    %v2194 = vpop.xlane.xlu0 %2193
    %v2195 = vadd.f32 %v2041, %v2042
    %v2196 = vadd.f32 %v2195, %v2043
    %v2197 = vadd.f32 %v2196, %v2044
    %2198 = vadd.xlane.f32.xlu0 %v2197
    %v2199 = vpop.xlane.xlu0 %2198
    %v2200 = vadd.f32 %v2045, %v2046
    %v2201 = vadd.f32 %v2200, %v2047
    %v2202 = vadd.f32 %v2201, %v2048
    %2203 = vadd.xlane.f32.xlu0 %v2202
    %v2204 = vpop.xlane.xlu0 %2203
    %v2205 = vadd.f32 %v2049, %v2050
    %v2206 = vadd.f32 %v2205, %v2051
    %v2207 = vadd.f32 %v2206, %v2052
    %2208 = vadd.xlane.f32.xlu0 %v2207
    %v2209 = vpop.xlane.xlu0 %2208
    %v2210 = vadd.f32 %v2053, %v2054
    %v2211 = vadd.f32 %v2210, %v2055
    %v2212 = vadd.f32 %v2211, %v2056
    %2213 = vadd.xlane.f32.xlu0 %v2212
    %v2214 = vpop.xlane.xlu0 %2213
    %v2215 = vadd.f32 %v2057, %v2058
    %v2216 = vadd.f32 %v2215, %v2059
    %v2217 = vadd.f32 %v2216, %v2060
    %2218 = vadd.xlane.f32.xlu0 %v2217
    %v2219 = vpop.xlane.xlu0 %2218
    %v2220 = vadd.f32 %v2061, %v2062
    %v2221 = vadd.f32 %v2220, %v2063
    %v2222 = vadd.f32 %v2221, %v2064
    %2223 = vadd.xlane.f32.xlu0 %v2222
    %v2224 = vpop.xlane.xlu0 %2223
    %v2225 = vmax.f32 %v2069, 1e-24
    %v2226 = vmax.f32 %v2074, 1e-24
    %v2227 = vmax.f32 %v2079, 1e-24
    %v2228 = vmax.f32 %v2084, 1e-24
    %v2229 = vmax.f32 %v2089, 1e-24
    %v2230 = vmax.f32 %v2094, 1e-24
    %v2231 = vmax.f32 %v2099, 1e-24
    %v2232 = vmax.f32 %v2104, 1e-24
    %v2233 = vmax.f32 %v2109, 1e-24
    %v2234 = vmax.f32 %v2114, 1e-24
    %v2235 = vmax.f32 %v2119, 1e-24
    %v2236 = vmax.f32 %v2124, 1e-24
    %v2237 = vmax.f32 %v2129, 1e-24
    %v2238 = vmax.f32 %v2134, 1e-24
    %v2239 = vmax.f32 %v2139, 1e-24
    %v2240 = vmax.f32 %v2144, 1e-24
    %v2241 = vmax.f32 %v2149, 1e-24
    %v2242 = vmax.f32 %v2154, 1e-24
    %v2243 = vmax.f32 %v2159, 1e-24
    %v2244 = vmax.f32 %v2164, 1e-24
    %v2245 = vmax.f32 %v2169, 1e-24
    %v2246 = vmax.f32 %v2174, 1e-24
    %v2247 = vmax.f32 %v2179, 1e-24
    %v2248 = vmax.f32 %v2184, 1e-24
    %v2249 = vmax.f32 %v2189, 1e-24
    %v2250 = vmax.f32 %v2194, 1e-24
    %v2251 = vmax.f32 %v2199, 1e-24
    %v2252 = vmax.f32 %v2204, 1e-24
    %v2253 = vmax.f32 %v2209, 1e-24
    %v2254 = vmax.f32 %v2214, 1e-24
    %v2255 = vmax.f32 %v2219, 1e-24
    %v2256 = vmax.f32 %v2224, 1e-24
    %v2257 = vrsqrt.pop %v2225
    %v2258 = vmul.f32 %v2257, %v2225
    %v2259 = vmul.f32 %v2258, %v2257
    %v2260 = vmul.f32 0.5, %v2259
    %v2261 = vsub.f32 1.5, %v2260
    %v2262 = vmul.f32 %v2257, %v2261
    %vm2263 = vweird.f32 %v2225
    %vm2264 = vweird.f32 %v2257
    %vm2265 = vmor %vm2263, %vm2264
    %v2266 = vsel %vm2265, %v2257, %v2262
    %v2267 = vrsqrt.pop %v2226
    %v2268 = vmul.f32 %v2267, %v2226
    %v2269 = vmul.f32 %v2268, %v2267
    %v2270 = vmul.f32 0.5, %v2269
    %v2271 = vsub.f32 1.5, %v2270
    %v2272 = vmul.f32 %v2267, %v2271
    %vm2273 = vweird.f32 %v2226
    %vm2274 = vweird.f32 %v2267
    %vm2275 = vmor %vm2273, %vm2274
    %v2276 = vsel %vm2275, %v2267, %v2272
    %v2277 = vrsqrt.pop %v2227
    %v2278 = vmul.f32 %v2277, %v2227
    %v2279 = vmul.f32 %v2278, %v2277
    %v2280 = vmul.f32 0.5, %v2279
    %v2281 = vsub.f32 1.5, %v2280
    %v2282 = vmul.f32 %v2277, %v2281
    %vm2283 = vweird.f32 %v2227
    %vm2284 = vweird.f32 %v2277
    %vm2285 = vmor %vm2283, %vm2284
    %v2286 = vsel %vm2285, %v2277, %v2282
    %v2287 = vrsqrt.pop %v2228
    %v2288 = vmul.f32 %v2287, %v2228
    %v2289 = vmul.f32 %v2288, %v2287
    %v2290 = vmul.f32 0.5, %v2289
    %v2291 = vsub.f32 1.5, %v2290
    %v2292 = vmul.f32 %v2287, %v2291
    %vm2293 = vweird.f32 %v2228
    %vm2294 = vweird.f32 %v2287
    %vm2295 = vmor %vm2293, %vm2294
    %v2296 = vsel %vm2295, %v2287, %v2292
    %v2297 = vrsqrt.pop %v2229
    %v2298 = vmul.f32 %v2297, %v2229
    %v2299 = vmul.f32 %v2298, %v2297
    %v2300 = vmul.f32 0.5, %v2299
    %v2301 = vsub.f32 1.5, %v2300
    %v2302 = vmul.f32 %v2297, %v2301
    %vm2303 = vweird.f32 %v2229
    %vm2304 = vweird.f32 %v2297
    %vm2305 = vmor %vm2303, %vm2304
    %v2306 = vsel %vm2305, %v2297, %v2302
    %v2307 = vrsqrt.pop %v2230
    %v2308 = vmul.f32 %v2307, %v2230
    %v2309 = vmul.f32 %v2308, %v2307
    %v2310 = vmul.f32 0.5, %v2309
    %v2311 = vsub.f32 1.5, %v2310
    %v2312 = vmul.f32 %v2307, %v2311
    %vm2313 = vweird.f32 %v2230
    %vm2314 = vweird.f32 %v2307
    %vm2315 = vmor %vm2313, %vm2314
    %v2316 = vsel %vm2315, %v2307, %v2312
    %v2317 = vrsqrt.pop %v2231
    %v2318 = vmul.f32 %v2317, %v2231
    %v2319 = vmul.f32 %v2318, %v2317
    %v2320 = vmul.f32 0.5, %v2319
    %v2321 = vsub.f32 1.5, %v2320
    %v2322 = vmul.f32 %v2317, %v2321
    %vm2323 = vweird.f32 %v2231
    %vm2324 = vweird.f32 %v2317
    %vm2325 = vmor %vm2323, %vm2324
    %v2326 = vsel %vm2325, %v2317, %v2322
    %v2327 = vrsqrt.pop %v2232
    %v2328 = vmul.f32 %v2327, %v2232
    %v2329 = vmul.f32 %v2328, %v2327
    %v2330 = vmul.f32 0.5, %v2329
    %v2331 = vsub.f32 1.5, %v2330
    %v2332 = vmul.f32 %v2327, %v2331
    %vm2333 = vweird.f32 %v2232
    %vm2334 = vweird.f32 %v2327
    %vm2335 = vmor %vm2333, %vm2334
    %v2336 = vsel %vm2335, %v2327, %v2332
    %v2337 = vrsqrt.pop %v2233
    %v2338 = vmul.f32 %v2337, %v2233
    %v2339 = vmul.f32 %v2338, %v2337
    %v2340 = vmul.f32 0.5, %v2339
    %v2341 = vsub.f32 1.5, %v2340
    %v2342 = vmul.f32 %v2337, %v2341
    %vm2343 = vweird.f32 %v2233
    %vm2344 = vweird.f32 %v2337
    %vm2345 = vmor %vm2343, %vm2344
    %v2346 = vsel %vm2345, %v2337, %v2342
    %v2347 = vrsqrt.pop %v2234
    %v2348 = vmul.f32 %v2347, %v2234
    %v2349 = vmul.f32 %v2348, %v2347
    %v2350 = vmul.f32 0.5, %v2349
    %v2351 = vsub.f32 1.5, %v2350
    %v2352 = vmul.f32 %v2347, %v2351
    %vm2353 = vweird.f32 %v2234
    %vm2354 = vweird.f32 %v2347
    %vm2355 = vmor %vm2353, %vm2354
    %v2356 = vsel %vm2355, %v2347, %v2352
    %v2357 = vrsqrt.pop %v2235
    %v2358 = vmul.f32 %v2357, %v2235
    %v2359 = vmul.f32 %v2358, %v2357
    %v2360 = vmul.f32 0.5, %v2359
    %v2361 = vsub.f32 1.5, %v2360
    %v2362 = vmul.f32 %v2357, %v2361
    %vm2363 = vweird.f32 %v2235
    %vm2364 = vweird.f32 %v2357
    %vm2365 = vmor %vm2363, %vm2364
    %v2366 = vsel %vm2365, %v2357, %v2362
    %v2367 = vrsqrt.pop %v2236
    %v2368 = vmul.f32 %v2367, %v2236
    %v2369 = vmul.f32 %v2368, %v2367
    %v2370 = vmul.f32 0.5, %v2369
    %v2371 = vsub.f32 1.5, %v2370
    %v2372 = vmul.f32 %v2367, %v2371
    %vm2373 = vweird.f32 %v2236
    %vm2374 = vweird.f32 %v2367
    %vm2375 = vmor %vm2373, %vm2374
    %v2376 = vsel %vm2375, %v2367, %v2372
    %v2377 = vrsqrt.pop %v2237
    %v2378 = vmul.f32 %v2377, %v2237
    %v2379 = vmul.f32 %v2378, %v2377
    %v2380 = vmul.f32 0.5, %v2379
    %v2381 = vsub.f32 1.5, %v2380
    %v2382 = vmul.f32 %v2377, %v2381
    %vm2383 = vweird.f32 %v2237
    %vm2384 = vweird.f32 %v2377
    %vm2385 = vmor %vm2383, %vm2384
    %v2386 = vsel %vm2385, %v2377, %v2382
    %v2387 = vrsqrt.pop %v2238
    %v2388 = vmul.f32 %v2387, %v2238
    %v2389 = vmul.f32 %v2388, %v2387
    %v2390 = vmul.f32 0.5, %v2389
    %v2391 = vsub.f32 1.5, %v2390
    %v2392 = vmul.f32 %v2387, %v2391
    %vm2393 = vweird.f32 %v2238
    %vm2394 = vweird.f32 %v2387
    %vm2395 = vmor %vm2393, %vm2394
    %v2396 = vsel %vm2395, %v2387, %v2392
    %v2397 = vrsqrt.pop %v2239
    %v2398 = vmul.f32 %v2397, %v2239
    %v2399 = vmul.f32 %v2398, %v2397
    %v2400 = vmul.f32 0.5, %v2399
    %v2401 = vsub.f32 1.5, %v2400
    %v2402 = vmul.f32 %v2397, %v2401
    %vm2403 = vweird.f32 %v2239
    %vm2404 = vweird.f32 %v2397
    %vm2405 = vmor %vm2403, %vm2404
    %v2406 = vsel %vm2405, %v2397, %v2402
    %v2407 = vrsqrt.pop %v2240
    %v2408 = vmul.f32 %v2407, %v2240
    %v2409 = vmul.f32 %v2408, %v2407
    %v2410 = vmul.f32 0.5, %v2409
    %v2411 = vsub.f32 1.5, %v2410
    %v2412 = vmul.f32 %v2407, %v2411
    %vm2413 = vweird.f32 %v2240
    %vm2414 = vweird.f32 %v2407
    %vm2415 = vmor %vm2413, %vm2414
    %v2416 = vsel %vm2415, %v2407, %v2412
    %v2417 = vrsqrt.pop %v2241
    %v2418 = vmul.f32 %v2417, %v2241
    %v2419 = vmul.f32 %v2418, %v2417
    %v2420 = vmul.f32 0.5, %v2419
    %v2421 = vsub.f32 1.5, %v2420
    %v2422 = vmul.f32 %v2417, %v2421
    %vm2423 = vweird.f32 %v2241
    %vm2424 = vweird.f32 %v2417
    %vm2425 = vmor %vm2423, %vm2424
    %v2426 = vsel %vm2425, %v2417, %v2422
    %v2427 = vrsqrt.pop %v2242
    %v2428 = vmul.f32 %v2427, %v2242
    %v2429 = vmul.f32 %v2428, %v2427
    %v2430 = vmul.f32 0.5, %v2429
    %v2431 = vsub.f32 1.5, %v2430
    %v2432 = vmul.f32 %v2427, %v2431
    %vm2433 = vweird.f32 %v2242
    %vm2434 = vweird.f32 %v2427
    %vm2435 = vmor %vm2433, %vm2434
    %v2436 = vsel %vm2435, %v2427, %v2432
    %v2437 = vrsqrt.pop %v2243
    %v2438 = vmul.f32 %v2437, %v2243
    %v2439 = vmul.f32 %v2438, %v2437
    %v2440 = vmul.f32 0.5, %v2439
    %v2441 = vsub.f32 1.5, %v2440
    %v2442 = vmul.f32 %v2437, %v2441
    %vm2443 = vweird.f32 %v2243
    %vm2444 = vweird.f32 %v2437
    %vm2445 = vmor %vm2443, %vm2444
    %v2446 = vsel %vm2445, %v2437, %v2442
    %v2447 = vrsqrt.pop %v2244
    %v2448 = vmul.f32 %v2447, %v2244
    %v2449 = vmul.f32 %v2448, %v2447
    %v2450 = vmul.f32 0.5, %v2449
    %v2451 = vsub.f32 1.5, %v2450
    %v2452 = vmul.f32 %v2447, %v2451
    %vm2453 = vweird.f32 %v2244
    %vm2454 = vweird.f32 %v2447
    %vm2455 = vmor %vm2453, %vm2454
    %v2456 = vsel %vm2455, %v2447, %v2452
    %v2457 = vrsqrt.pop %v2245
    %v2458 = vmul.f32 %v2457, %v2245
    %v2459 = vmul.f32 %v2458, %v2457
    %v2460 = vmul.f32 0.5, %v2459
    %v2461 = vsub.f32 1.5, %v2460
    %v2462 = vmul.f32 %v2457, %v2461
    %vm2463 = vweird.f32 %v2245
    %vm2464 = vweird.f32 %v2457
    %vm2465 = vmor %vm2463, %vm2464
    %v2466 = vsel %vm2465, %v2457, %v2462
    %v2467 = vrsqrt.pop %v2246
    %v2468 = vmul.f32 %v2467, %v2246
    %v2469 = vmul.f32 %v2468, %v2467
    %v2470 = vmul.f32 0.5, %v2469
    %v2471 = vsub.f32 1.5, %v2470
    %v2472 = vmul.f32 %v2467, %v2471
    %vm2473 = vweird.f32 %v2246
    %vm2474 = vweird.f32 %v2467
    %vm2475 = vmor %vm2473, %vm2474
    %v2476 = vsel %vm2475, %v2467, %v2472
    %v2477 = vrsqrt.pop %v2247
    %v2478 = vmul.f32 %v2477, %v2247
    %v2479 = vmul.f32 %v2478, %v2477
    %v2480 = vmul.f32 0.5, %v2479
    %v2481 = vsub.f32 1.5, %v2480
    %v2482 = vmul.f32 %v2477, %v2481
    %vm2483 = vweird.f32 %v2247
    %vm2484 = vweird.f32 %v2477
    %vm2485 = vmor %vm2483, %vm2484
    %v2486 = vsel %vm2485, %v2477, %v2482
    %v2487 = vrsqrt.pop %v2248
    %v2488 = vmul.f32 %v2487, %v2248
    %v2489 = vmul.f32 %v2488, %v2487
    %v2490 = vmul.f32 0.5, %v2489
    %v2491 = vsub.f32 1.5, %v2490
    %v2492 = vmul.f32 %v2487, %v2491
    %vm2493 = vweird.f32 %v2248
    %vm2494 = vweird.f32 %v2487
    %vm2495 = vmor %vm2493, %vm2494
    %v2496 = vsel %vm2495, %v2487, %v2492
    %v2497 = vrsqrt.pop %v2249
    %v2498 = vmul.f32 %v2497, %v2249
    %v2499 = vmul.f32 %v2498, %v2497
    %v2500 = vmul.f32 0.5, %v2499
    %v2501 = vsub.f32 1.5, %v2500
    %v2502 = vmul.f32 %v2497, %v2501
    %vm2503 = vweird.f32 %v2249
    %vm2504 = vweird.f32 %v2497
    %vm2505 = vmor %vm2503, %vm2504
    %v2506 = vsel %vm2505, %v2497, %v2502
    %v2507 = vrsqrt.pop %v2250
    %v2508 = vmul.f32 %v2507, %v2250
    %v2509 = vmul.f32 %v2508, %v2507
    %v2510 = vmul.f32 0.5, %v2509
    %v2511 = vsub.f32 1.5, %v2510
    %v2512 = vmul.f32 %v2507, %v2511
    %vm2513 = vweird.f32 %v2250
    %vm2514 = vweird.f32 %v2507
    %vm2515 = vmor %vm2513, %vm2514
    %v2516 = vsel %vm2515, %v2507, %v2512
    %v2517 = vrsqrt.pop %v2251
    %v2518 = vmul.f32 %v2517, %v2251
    %v2519 = vmul.f32 %v2518, %v2517
    %v2520 = vmul.f32 0.5, %v2519
    %v2521 = vsub.f32 1.5, %v2520
    %v2522 = vmul.f32 %v2517, %v2521
    %vm2523 = vweird.f32 %v2251
    %vm2524 = vweird.f32 %v2517
    %vm2525 = vmor %vm2523, %vm2524
    %v2526 = vsel %vm2525, %v2517, %v2522
    %v2527 = vrsqrt.pop %v2252
    %v2528 = vmul.f32 %v2527, %v2252
    %v2529 = vmul.f32 %v2528, %v2527
    %v2530 = vmul.f32 0.5, %v2529
    %v2531 = vsub.f32 1.5, %v2530
    %v2532 = vmul.f32 %v2527, %v2531
    %vm2533 = vweird.f32 %v2252
    %vm2534 = vweird.f32 %v2527
    %vm2535 = vmor %vm2533, %vm2534
    %v2536 = vsel %vm2535, %v2527, %v2532
    %v2537 = vrsqrt.pop %v2253
    %v2538 = vmul.f32 %v2537, %v2253
    %v2539 = vmul.f32 %v2538, %v2537
    %v2540 = vmul.f32 0.5, %v2539
    %v2541 = vsub.f32 1.5, %v2540
    %v2542 = vmul.f32 %v2537, %v2541
    %vm2543 = vweird.f32 %v2253
    %vm2544 = vweird.f32 %v2537
    %vm2545 = vmor %vm2543, %vm2544
    %v2546 = vsel %vm2545, %v2537, %v2542
    %v2547 = vrsqrt.pop %v2254
    %v2548 = vmul.f32 %v2547, %v2254
    %v2549 = vmul.f32 %v2548, %v2547
    %v2550 = vmul.f32 0.5, %v2549
    %v2551 = vsub.f32 1.5, %v2550
    %v2552 = vmul.f32 %v2547, %v2551
    %vm2553 = vweird.f32 %v2254
    %vm2554 = vweird.f32 %v2547
    %vm2555 = vmor %vm2553, %vm2554
    %v2556 = vsel %vm2555, %v2547, %v2552
    %v2557 = vrsqrt.pop %v2255
    %v2558 = vmul.f32 %v2557, %v2255
    %v2559 = vmul.f32 %v2558, %v2557
    %v2560 = vmul.f32 0.5, %v2559
    %v2561 = vsub.f32 1.5, %v2560
    %v2562 = vmul.f32 %v2557, %v2561
    %vm2563 = vweird.f32 %v2255
    %vm2564 = vweird.f32 %v2557
    %vm2565 = vmor %vm2563, %vm2564
    %v2566 = vsel %vm2565, %v2557, %v2562
    %v2567 = vrsqrt.pop %v2256
    %v2568 = vmul.f32 %v2567, %v2256
    %v2569 = vmul.f32 %v2568, %v2567
    %v2570 = vmul.f32 0.5, %v2569
    %v2571 = vsub.f32 1.5, %v2570
    %v2572 = vmul.f32 %v2567, %v2571
    %vm2573 = vweird.f32 %v2256
    %vm2574 = vweird.f32 %v2567
    %vm2575 = vmor %vm2573, %vm2574
    %v2576 = vsel %vm2575, %v2567, %v2572
    %v2577 = vmul.f32 %v298, %v1626
    %v2578 = vmul.f32 %v411, %v1626
    %v2579 = vmul.f32 %v524, %v1626
    %v2580 = vmul.f32 %v637, %v1626
    %v2581 = vmul.f32 %v301, %v1636
    %v2582 = vmul.f32 %v414, %v1636
    %v2583 = vmul.f32 %v527, %v1636
    %v2584 = vmul.f32 %v640, %v1636
    %v2585 = vmul.f32 %v304, %v1646
    %v2586 = vmul.f32 %v417, %v1646
    %v2587 = vmul.f32 %v530, %v1646
    %v2588 = vmul.f32 %v643, %v1646
    %v2589 = vmul.f32 %v307, %v1656
    %v2590 = vmul.f32 %v420, %v1656
    %v2591 = vmul.f32 %v533, %v1656
    %v2592 = vmul.f32 %v646, %v1656
    %v2593 = vmul.f32 %v310, %v1666
    %v2594 = vmul.f32 %v423, %v1666
    %v2595 = vmul.f32 %v536, %v1666
    %v2596 = vmul.f32 %v649, %v1666
    %v2597 = vmul.f32 %v313, %v1676
    %v2598 = vmul.f32 %v426, %v1676
    %v2599 = vmul.f32 %v539, %v1676
    %v2600 = vmul.f32 %v652, %v1676
    %v2601 = vmul.f32 %v316, %v1686
    %v2602 = vmul.f32 %v429, %v1686
    %v2603 = vmul.f32 %v542, %v1686
    %v2604 = vmul.f32 %v655, %v1686
    %v2605 = vmul.f32 %v319, %v1696
    %v2606 = vmul.f32 %v432, %v1696
    %v2607 = vmul.f32 %v545, %v1696
    %v2608 = vmul.f32 %v658, %v1696
    %v2609 = vmul.f32 %v322, %v1706
    %v2610 = vmul.f32 %v435, %v1706
    %v2611 = vmul.f32 %v548, %v1706
    %v2612 = vmul.f32 %v661, %v1706
    %v2613 = vmul.f32 %v325, %v1716
    %v2614 = vmul.f32 %v438, %v1716
    %v2615 = vmul.f32 %v551, %v1716
    %v2616 = vmul.f32 %v664, %v1716
    %v2617 = vmul.f32 %v328, %v1726
    %v2618 = vmul.f32 %v441, %v1726
    %v2619 = vmul.f32 %v554, %v1726
    %v2620 = vmul.f32 %v667, %v1726
    %v2621 = vmul.f32 %v331, %v1736
    %v2622 = vmul.f32 %v444, %v1736
    %v2623 = vmul.f32 %v557, %v1736
    %v2624 = vmul.f32 %v670, %v1736
    %v2625 = vmul.f32 %v334, %v1746
    %v2626 = vmul.f32 %v447, %v1746
    %v2627 = vmul.f32 %v560, %v1746
    %v2628 = vmul.f32 %v673, %v1746
    %v2629 = vmul.f32 %v337, %v1756
    %v2630 = vmul.f32 %v450, %v1756
    %v2631 = vmul.f32 %v563, %v1756
    %v2632 = vmul.f32 %v676, %v1756
    %v2633 = vmul.f32 %v340, %v1766
    %v2634 = vmul.f32 %v453, %v1766
    %v2635 = vmul.f32 %v566, %v1766
    %v2636 = vmul.f32 %v679, %v1766
    %v2637 = vmul.f32 %v343, %v1776
    %v2638 = vmul.f32 %v456, %v1776
    %v2639 = vmul.f32 %v569, %v1776
    %v2640 = vmul.f32 %v682, %v1776
    %v2641 = vmul.f32 %v346, %v1786
    %v2642 = vmul.f32 %v459, %v1786
    %v2643 = vmul.f32 %v572, %v1786
    %v2644 = vmul.f32 %v685, %v1786
    %v2645 = vmul.f32 %v349, %v1796
    %v2646 = vmul.f32 %v462, %v1796
    %v2647 = vmul.f32 %v575, %v1796
    %v2648 = vmul.f32 %v688, %v1796
    %v2649 = vmul.f32 %v352, %v1806
    %v2650 = vmul.f32 %v465, %v1806
    %v2651 = vmul.f32 %v578, %v1806
    %v2652 = vmul.f32 %v691, %v1806
    %v2653 = vmul.f32 %v355, %v1816
    %v2654 = vmul.f32 %v468, %v1816
    %v2655 = vmul.f32 %v581, %v1816
    %v2656 = vmul.f32 %v694, %v1816
    %v2657 = vmul.f32 %v358, %v1826
    %v2658 = vmul.f32 %v471, %v1826
    %v2659 = vmul.f32 %v584, %v1826
    %v2660 = vmul.f32 %v697, %v1826
    %v2661 = vmul.f32 %v361, %v1836
    %v2662 = vmul.f32 %v474, %v1836
    %v2663 = vmul.f32 %v587, %v1836
    %v2664 = vmul.f32 %v700, %v1836
    %v2665 = vmul.f32 %v364, %v1846
    %v2666 = vmul.f32 %v477, %v1846
    %v2667 = vmul.f32 %v590, %v1846
    %v2668 = vmul.f32 %v703, %v1846
    %v2669 = vmul.f32 %v367, %v1856
    %v2670 = vmul.f32 %v480, %v1856
    %v2671 = vmul.f32 %v593, %v1856
    %v2672 = vmul.f32 %v706, %v1856
    %v2673 = vmul.f32 %v370, %v1866
    %v2674 = vmul.f32 %v483, %v1866
    %v2675 = vmul.f32 %v596, %v1866
    %v2676 = vmul.f32 %v709, %v1866
    %v2677 = vmul.f32 %v373, %v1876
    %v2678 = vmul.f32 %v486, %v1876
    %v2679 = vmul.f32 %v599, %v1876
    %v2680 = vmul.f32 %v712, %v1876
    %v2681 = vmul.f32 %v376, %v1886
    %v2682 = vmul.f32 %v489, %v1886
    %v2683 = vmul.f32 %v602, %v1886
    %v2684 = vmul.f32 %v715, %v1886
    %v2685 = vmul.f32 %v379, %v1896
    %v2686 = vmul.f32 %v492, %v1896
    %v2687 = vmul.f32 %v605, %v1896
    %v2688 = vmul.f32 %v718, %v1896
    %v2689 = vmul.f32 %v382, %v1906
    %v2690 = vmul.f32 %v495, %v1906
    %v2691 = vmul.f32 %v608, %v1906
    %v2692 = vmul.f32 %v721, %v1906
    %v2693 = vmul.f32 %v385, %v1916
    %v2694 = vmul.f32 %v498, %v1916
    %v2695 = vmul.f32 %v611, %v1916
    %v2696 = vmul.f32 %v724, %v1916
    %v2697 = vmul.f32 %v388, %v1926
    %v2698 = vmul.f32 %v501, %v1926
    %v2699 = vmul.f32 %v614, %v1926
    %v2700 = vmul.f32 %v727, %v1926
    %v2701 = vmul.f32 %v391, %v1936
    %v2702 = vmul.f32 %v504, %v1936
    %v2703 = vmul.f32 %v617, %v1936
    %v2704 = vmul.f32 %v730, %v1936
    %v2705 = vmul.f32 %v750, %v2266
    %v2706 = vmul.f32 %v863, %v2266
    %v2707 = vmul.f32 %v976, %v2266
    %v2708 = vmul.f32 %v1089, %v2266
    %v2709 = vmul.f32 %v753, %v2276
    %v2710 = vmul.f32 %v866, %v2276
    %v2711 = vmul.f32 %v979, %v2276
    %v2712 = vmul.f32 %v1092, %v2276
    %v2713 = vmul.f32 %v756, %v2286
    %v2714 = vmul.f32 %v869, %v2286
    %v2715 = vmul.f32 %v982, %v2286
    %v2716 = vmul.f32 %v1095, %v2286
    %v2717 = vmul.f32 %v759, %v2296
    %v2718 = vmul.f32 %v872, %v2296
    %v2719 = vmul.f32 %v985, %v2296
    %v2720 = vmul.f32 %v1098, %v2296
    %v2721 = vmul.f32 %v762, %v2306
    %v2722 = vmul.f32 %v875, %v2306
    %v2723 = vmul.f32 %v988, %v2306
    %v2724 = vmul.f32 %v1101, %v2306
    %v2725 = vmul.f32 %v765, %v2316
    %v2726 = vmul.f32 %v878, %v2316
    %v2727 = vmul.f32 %v991, %v2316
    %v2728 = vmul.f32 %v1104, %v2316
    %v2729 = vmul.f32 %v768, %v2326
    %v2730 = vmul.f32 %v881, %v2326
    %v2731 = vmul.f32 %v994, %v2326
    %v2732 = vmul.f32 %v1107, %v2326
    %v2733 = vmul.f32 %v771, %v2336
    %v2734 = vmul.f32 %v884, %v2336
    %v2735 = vmul.f32 %v997, %v2336
    %v2736 = vmul.f32 %v1110, %v2336
    %v2737 = vmul.f32 %v774, %v2346
    %v2738 = vmul.f32 %v887, %v2346
    %v2739 = vmul.f32 %v1000, %v2346
    %v2740 = vmul.f32 %v1113, %v2346
    %v2741 = vmul.f32 %v777, %v2356
    %v2742 = vmul.f32 %v890, %v2356
    %v2743 = vmul.f32 %v1003, %v2356
    %v2744 = vmul.f32 %v1116, %v2356
    %v2745 = vmul.f32 %v780, %v2366
    %v2746 = vmul.f32 %v893, %v2366
    %v2747 = vmul.f32 %v1006, %v2366
    %v2748 = vmul.f32 %v1119, %v2366
    %v2749 = vmul.f32 %v783, %v2376
    %v2750 = vmul.f32 %v896, %v2376
    %v2751 = vmul.f32 %v1009, %v2376
    %v2752 = vmul.f32 %v1122, %v2376
    %v2753 = vmul.f32 %v786, %v2386
    %v2754 = vmul.f32 %v899, %v2386
    %v2755 = vmul.f32 %v1012, %v2386
    %v2756 = vmul.f32 %v1125, %v2386
    %v2757 = vmul.f32 %v789, %v2396
    %v2758 = vmul.f32 %v902, %v2396
    %v2759 = vmul.f32 %v1015, %v2396
    %v2760 = vmul.f32 %v1128, %v2396
    %v2761 = vmul.f32 %v792, %v2406
    %v2762 = vmul.f32 %v905, %v2406
    %v2763 = vmul.f32 %v1018, %v2406
    %v2764 = vmul.f32 %v1131, %v2406
    %v2765 = vmul.f32 %v795, %v2416
    %v2766 = vmul.f32 %v908, %v2416
    %v2767 = vmul.f32 %v1021, %v2416
    %v2768 = vmul.f32 %v1134, %v2416
    %v2769 = vmul.f32 %v798, %v2426
    %v2770 = vmul.f32 %v911, %v2426
    %v2771 = vmul.f32 %v1024, %v2426
    %v2772 = vmul.f32 %v1137, %v2426
    %v2773 = vmul.f32 %v801, %v2436
    %v2774 = vmul.f32 %v914, %v2436
    %v2775 = vmul.f32 %v1027, %v2436
    %v2776 = vmul.f32 %v1140, %v2436
    %v2777 = vmul.f32 %v804, %v2446
    %v2778 = vmul.f32 %v917, %v2446
    %v2779 = vmul.f32 %v1030, %v2446
    %v2780 = vmul.f32 %v1143, %v2446
    %v2781 = vmul.f32 %v807, %v2456
    %v2782 = vmul.f32 %v920, %v2456
    %v2783 = vmul.f32 %v1033, %v2456
    %v2784 = vmul.f32 %v1146, %v2456
    %v2785 = vmul.f32 %v810, %v2466
    %v2786 = vmul.f32 %v923, %v2466
    %v2787 = vmul.f32 %v1036, %v2466
    %v2788 = vmul.f32 %v1149, %v2466
    %v2789 = vmul.f32 %v813, %v2476
    %v2790 = vmul.f32 %v926, %v2476
    %v2791 = vmul.f32 %v1039, %v2476
    %v2792 = vmul.f32 %v1152, %v2476
    %v2793 = vmul.f32 %v816, %v2486
    %v2794 = vmul.f32 %v929, %v2486
    %v2795 = vmul.f32 %v1042, %v2486
    %v2796 = vmul.f32 %v1155, %v2486
    %v2797 = vmul.f32 %v819, %v2496
    %v2798 = vmul.f32 %v932, %v2496
    %v2799 = vmul.f32 %v1045, %v2496
    %v2800 = vmul.f32 %v1158, %v2496
    %v2801 = vmul.f32 %v822, %v2506
    %v2802 = vmul.f32 %v935, %v2506
    %v2803 = vmul.f32 %v1048, %v2506
    %v2804 = vmul.f32 %v1161, %v2506
    %v2805 = vmul.f32 %v825, %v2516
    %v2806 = vmul.f32 %v938, %v2516
    %v2807 = vmul.f32 %v1051, %v2516
    %v2808 = vmul.f32 %v1164, %v2516
    %v2809 = vmul.f32 %v828, %v2526
    %v2810 = vmul.f32 %v941, %v2526
    %v2811 = vmul.f32 %v1054, %v2526
    %v2812 = vmul.f32 %v1167, %v2526
    %v2813 = vmul.f32 %v831, %v2536
    %v2814 = vmul.f32 %v944, %v2536
    %v2815 = vmul.f32 %v1057, %v2536
    %v2816 = vmul.f32 %v1170, %v2536
    %v2817 = vmul.f32 %v834, %v2546
    %v2818 = vmul.f32 %v947, %v2546
    %v2819 = vmul.f32 %v1060, %v2546
    %v2820 = vmul.f32 %v1173, %v2546
    %v2821 = vmul.f32 %v837, %v2556
    %v2822 = vmul.f32 %v950, %v2556
    %v2823 = vmul.f32 %v1063, %v2556
    %v2824 = vmul.f32 %v1176, %v2556
    %v2825 = vmul.f32 %v840, %v2566
    %v2826 = vmul.f32 %v953, %v2566
    %v2827 = vmul.f32 %v1066, %v2566
    %v2828 = vmul.f32 %v1179, %v2566
    %v2829 = vmul.f32 %v843, %v2576
    %v2830 = vmul.f32 %v956, %v2576
    %v2831 = vmul.f32 %v1069, %v2576
    %v2832 = vmul.f32 %v1182, %v2576
    %v2833 = vmul.f32 %v1202, %v1626
    %v2834 = vmul.f32 %v1205, %v1636
    %v2835 = vmul.f32 %v1208, %v1646
    %v2836 = vmul.f32 %v1211, %v1656
    %v2837 = vmul.f32 %v1214, %v1666
    %v2838 = vmul.f32 %v1217, %v1676
    %v2839 = vmul.f32 %v1220, %v1686
    %v2840 = vmul.f32 %v1223, %v1696
    %v2841 = vmul.f32 %v1226, %v1706
    %v2842 = vmul.f32 %v1229, %v1716
    %v2843 = vmul.f32 %v1232, %v1726
    %v2844 = vmul.f32 %v1235, %v1736
    %v2845 = vmul.f32 %v1238, %v1746
    %v2846 = vmul.f32 %v1241, %v1756
    %v2847 = vmul.f32 %v1244, %v1766
    %v2848 = vmul.f32 %v1247, %v1776
    %v2849 = vmul.f32 %v1250, %v1786
    %v2850 = vmul.f32 %v1253, %v1796
    %v2851 = vmul.f32 %v1256, %v1806
    %v2852 = vmul.f32 %v1259, %v1816
    %v2853 = vmul.f32 %v1262, %v1826
    %v2854 = vmul.f32 %v1265, %v1836
    %v2855 = vmul.f32 %v1268, %v1846
    %v2856 = vmul.f32 %v1271, %v1856
    %v2857 = vmul.f32 %v1274, %v1866
    %v2858 = vmul.f32 %v1277, %v1876
    %v2859 = vmul.f32 %v1280, %v1886
    %v2860 = vmul.f32 %v1283, %v1896
    %v2861 = vmul.f32 %v1286, %v1906
    %v2862 = vmul.f32 %v1289, %v1916
    %v2863 = vmul.f32 %v1292, %v1926
    %v2864 = vmul.f32 %v1295, %v1936
    %v2865 = vmul.f32 %v2833, %v2833
    %v2866 = vmul.f32 %v2834, %v2834
    %v2867 = vmul.f32 %v2835, %v2835
    %v2868 = vmul.f32 %v2836, %v2836
    %v2869 = vmul.f32 %v2837, %v2837
    %v2870 = vmul.f32 %v2838, %v2838
    %v2871 = vmul.f32 %v2839, %v2839
    %v2872 = vmul.f32 %v2840, %v2840
    %v2873 = vmul.f32 %v2841, %v2841
    %v2874 = vmul.f32 %v2842, %v2842
    %v2875 = vmul.f32 %v2843, %v2843
    %v2876 = vmul.f32 %v2844, %v2844
    %v2877 = vmul.f32 %v2845, %v2845
    %v2878 = vmul.f32 %v2846, %v2846
    %v2879 = vmul.f32 %v2847, %v2847
    %v2880 = vmul.f32 %v2848, %v2848
    %v2881 = vmul.f32 %v2849, %v2849
    %v2882 = vmul.f32 %v2850, %v2850
    %v2883 = vmul.f32 %v2851, %v2851
    %v2884 = vmul.f32 %v2852, %v2852
    %v2885 = vmul.f32 %v2853, %v2853
    %v2886 = vmul.f32 %v2854, %v2854
    %v2887 = vmul.f32 %v2855, %v2855
    %v2888 = vmul.f32 %v2856, %v2856
    %v2889 = vmul.f32 %v2857, %v2857
    %v2890 = vmul.f32 %v2858, %v2858
    %v2891 = vmul.f32 %v2859, %v2859
    %v2892 = vmul.f32 %v2860, %v2860
    %v2893 = vmul.f32 %v2861, %v2861
    %v2894 = vmul.f32 %v2862, %v2862
    %v2895 = vmul.f32 %v2863, %v2863
    %v2896 = vmul.f32 %v2864, %v2864
    %vm2897 = vcmask 7168
    %v2898 = vsel %vm2897, %v2865, 0.0
    %v2899 = vsel %vm2897, %v2866, 0.0
    %v2900 = vadd.f32 %v2898, %v2899
    %v2901 = vsel %vm2897, %v2867, 0.0
    %v2902 = vadd.f32 %v2900, %v2901
    %v2903 = vsel %vm2897, %v2868, 0.0
    %v2904 = vadd.f32 %v2902, %v2903
    %v2905 = vrot.slane %v2904, 4
    %v2906 = vadd.f32 %v2904, %v2905
    %v2907 = vrot.slane %v2906, 2
    %v2908 = vadd.f32 %v2906, %v2907
    %v2909 = vrot.slane %v2908, 1
    %v2910 = vadd.f32 %v2908, %v2909
    %v2911 = vsel %vm2897, %v2869, 0.0
    %v2912 = vsel %vm2897, %v2870, 0.0
    %v2913 = vadd.f32 %v2911, %v2912
    %v2914 = vsel %vm2897, %v2871, 0.0
    %v2915 = vadd.f32 %v2913, %v2914
    %v2916 = vsel %vm2897, %v2872, 0.0
    %v2917 = vadd.f32 %v2915, %v2916
    %v2918 = vrot.slane %v2917, 4
    %v2919 = vadd.f32 %v2917, %v2918
    %v2920 = vrot.slane %v2919, 2
    %v2921 = vadd.f32 %v2919, %v2920
    %v2922 = vrot.slane %v2921, 1
    %v2923 = vadd.f32 %v2921, %v2922
    %v2924 = vsel %vm2897, %v2873, 0.0
    %v2925 = vsel %vm2897, %v2874, 0.0
    %v2926 = vadd.f32 %v2924, %v2925
    %v2927 = vsel %vm2897, %v2875, 0.0
    %v2928 = vadd.f32 %v2926, %v2927
    %v2929 = vsel %vm2897, %v2876, 0.0
    %v2930 = vadd.f32 %v2928, %v2929
    %v2931 = vrot.slane %v2930, 4
    %v2932 = vadd.f32 %v2930, %v2931
    %v2933 = vrot.slane %v2932, 2
    %v2934 = vadd.f32 %v2932, %v2933
    %v2935 = vrot.slane %v2934, 1
    %v2936 = vadd.f32 %v2934, %v2935
    %v2937 = vsel %vm2897, %v2877, 0.0
    %v2938 = vsel %vm2897, %v2878, 0.0
    %v2939 = vadd.f32 %v2937, %v2938
    %v2940 = vsel %vm2897, %v2879, 0.0
    %v2941 = vadd.f32 %v2939, %v2940
    %v2942 = vsel %vm2897, %v2880, 0.0
    %v2943 = vadd.f32 %v2941, %v2942
    %v2944 = vrot.slane %v2943, 4
    %v2945 = vadd.f32 %v2943, %v2944
    %v2946 = vrot.slane %v2945, 2
    %v2947 = vadd.f32 %v2945, %v2946
    %v2948 = vrot.slane %v2947, 1
    %v2949 = vadd.f32 %v2947, %v2948
    %v2950 = vsel %vm2897, %v2881, 0.0
    %v2951 = vsel %vm2897, %v2882, 0.0
    %v2952 = vadd.f32 %v2950, %v2951
    %v2953 = vsel %vm2897, %v2883, 0.0
    %v2954 = vadd.f32 %v2952, %v2953
    %v2955 = vsel %vm2897, %v2884, 0.0
    %v2956 = vadd.f32 %v2954, %v2955
    %v2957 = vrot.slane %v2956, 4
    %v2958 = vadd.f32 %v2956, %v2957
    %v2959 = vrot.slane %v2958, 2
    %v2960 = vadd.f32 %v2958, %v2959
    %v2961 = vrot.slane %v2960, 1
    %v2962 = vadd.f32 %v2960, %v2961
    %v2963 = vsel %vm2897, %v2885, 0.0
    %v2964 = vsel %vm2897, %v2886, 0.0
    %v2965 = vadd.f32 %v2963, %v2964
    %v2966 = vsel %vm2897, %v2887, 0.0
    %v2967 = vadd.f32 %v2965, %v2966
    %v2968 = vsel %vm2897, %v2888, 0.0
    %v2969 = vadd.f32 %v2967, %v2968
    %v2970 = vrot.slane %v2969, 4
    %v2971 = vadd.f32 %v2969, %v2970
    %v2972 = vrot.slane %v2971, 2
    %v2973 = vadd.f32 %v2971, %v2972
    %v2974 = vrot.slane %v2973, 1
    %v2975 = vadd.f32 %v2973, %v2974
    %v2976 = vsel %vm2897, %v2889, 0.0
    %v2977 = vsel %vm2897, %v2890, 0.0
    %v2978 = vadd.f32 %v2976, %v2977
    %v2979 = vsel %vm2897, %v2891, 0.0
    %v2980 = vadd.f32 %v2978, %v2979
    %v2981 = vsel %vm2897, %v2892, 0.0
    %v2982 = vadd.f32 %v2980, %v2981
    %v2983 = vrot.slane %v2982, 4
    %v2984 = vadd.f32 %v2982, %v2983
    %v2985 = vrot.slane %v2984, 2
    %v2986 = vadd.f32 %v2984, %v2985
    %v2987 = vrot.slane %v2986, 1
    %v2988 = vadd.f32 %v2986, %v2987
    %v2989 = vsel %vm2897, %v2893, 0.0
    %v2990 = vsel %vm2897, %v2894, 0.0
    %v2991 = vadd.f32 %v2989, %v2990
    %v2992 = vsel %vm2897, %v2895, 0.0
    %v2993 = vadd.f32 %v2991, %v2992
    %v2994 = vsel %vm2897, %v2896, 0.0
    %v2995 = vadd.f32 %v2993, %v2994
    %v2996 = vrot.slane %v2995, 4
    %v2997 = vadd.f32 %v2995, %v2996
    %v2998 = vrot.slane %v2997, 2
    %v2999 = vadd.f32 %v2997, %v2998
    %v3000 = vrot.slane %v2999, 1
    %v3001 = vadd.f32 %v2999, %v3000
    %v3002 = vmax.f32 %v2910, 1e-24
    %v3003 = vmax.f32 %v2923, 1e-24
    %v3004 = vmax.f32 %v2936, 1e-24
    %v3005 = vmax.f32 %v2949, 1e-24
    %v3006 = vmax.f32 %v2962, 1e-24
    %v3007 = vmax.f32 %v2975, 1e-24
    %v3008 = vmax.f32 %v2988, 1e-24
    %v3009 = vmax.f32 %v3001, 1e-24
    %v3010 = vrsqrt.pop %v3002
    %v3011 = vmul.f32 %v3010, %v3002
    %v3012 = vmul.f32 %v3011, %v3010
    %v3013 = vmul.f32 0.5, %v3012
    %v3014 = vsub.f32 1.5, %v3013
    %v3015 = vmul.f32 %v3010, %v3014
    %vm3016 = vweird.f32 %v3002
    %vm3017 = vweird.f32 %v3010
    %vm3018 = vmor %vm3016, %vm3017
    %v3019 = vsel %vm3018, %v3010, %v3015
    %v3020 = vrsqrt.pop %v3003
    %v3021 = vmul.f32 %v3020, %v3003
    %v3022 = vmul.f32 %v3021, %v3020
    %v3023 = vmul.f32 0.5, %v3022
    %v3024 = vsub.f32 1.5, %v3023
    %v3025 = vmul.f32 %v3020, %v3024
    %vm3026 = vweird.f32 %v3003
    %vm3027 = vweird.f32 %v3020
    %vm3028 = vmor %vm3026, %vm3027
    %v3029 = vsel %vm3028, %v3020, %v3025
    %v3030 = vrsqrt.pop %v3004
    %v3031 = vmul.f32 %v3030, %v3004
    %v3032 = vmul.f32 %v3031, %v3030
    %v3033 = vmul.f32 0.5, %v3032
    %v3034 = vsub.f32 1.5, %v3033
    %v3035 = vmul.f32 %v3030, %v3034
    %vm3036 = vweird.f32 %v3004
    %vm3037 = vweird.f32 %v3030
    %vm3038 = vmor %vm3036, %vm3037
    %v3039 = vsel %vm3038, %v3030, %v3035
    %v3040 = vrsqrt.pop %v3005
    %v3041 = vmul.f32 %v3040, %v3005
    %v3042 = vmul.f32 %v3041, %v3040
    %v3043 = vmul.f32 0.5, %v3042
    %v3044 = vsub.f32 1.5, %v3043
    %v3045 = vmul.f32 %v3040, %v3044
    %vm3046 = vweird.f32 %v3005
    %vm3047 = vweird.f32 %v3040
    %vm3048 = vmor %vm3046, %vm3047
    %v3049 = vsel %vm3048, %v3040, %v3045
    %v3050 = vrsqrt.pop %v3006
    %v3051 = vmul.f32 %v3050, %v3006
    %v3052 = vmul.f32 %v3051, %v3050
    %v3053 = vmul.f32 0.5, %v3052
    %v3054 = vsub.f32 1.5, %v3053
    %v3055 = vmul.f32 %v3050, %v3054
    %vm3056 = vweird.f32 %v3006
    %vm3057 = vweird.f32 %v3050
    %vm3058 = vmor %vm3056, %vm3057
    %v3059 = vsel %vm3058, %v3050, %v3055
    %v3060 = vrsqrt.pop %v3007
    %v3061 = vmul.f32 %v3060, %v3007
    %v3062 = vmul.f32 %v3061, %v3060
    %v3063 = vmul.f32 0.5, %v3062
    %v3064 = vsub.f32 1.5, %v3063
    %v3065 = vmul.f32 %v3060, %v3064
    %vm3066 = vweird.f32 %v3007
    %vm3067 = vweird.f32 %v3060
    %vm3068 = vmor %vm3066, %vm3067
    %v3069 = vsel %vm3068, %v3060, %v3065
    %v3070 = vrsqrt.pop %v3008
    %v3071 = vmul.f32 %v3070, %v3008
    %v3072 = vmul.f32 %v3071, %v3070
    %v3073 = vmul.f32 0.5, %v3072
    %v3074 = vsub.f32 1.5, %v3073
    %v3075 = vmul.f32 %v3070, %v3074
    %vm3076 = vweird.f32 %v3008
    %vm3077 = vweird.f32 %v3070
    %vm3078 = vmor %vm3076, %vm3077
    %v3079 = vsel %vm3078, %v3070, %v3075
    %v3080 = vrsqrt.pop %v3009
    %v3081 = vmul.f32 %v3080, %v3009
    %v3082 = vmul.f32 %v3081, %v3080
    %v3083 = vmul.f32 0.5, %v3082
    %v3084 = vsub.f32 1.5, %v3083
    %v3085 = vmul.f32 %v3080, %v3084
    %vm3086 = vweird.f32 %v3009
    %vm3087 = vweird.f32 %v3080
    %vm3088 = vmor %vm3086, %vm3087
    %v3089 = vsel %vm3088, %v3080, %v3085
    %v3090 = vmul.f32 %v2833, %v3019
    %v3091 = vmul.f32 %v2834, %v3019
    %v3092 = vmul.f32 %v2835, %v3019
    %v3093 = vmul.f32 %v2836, %v3019
    %v3094 = vmul.f32 %v2837, %v3029
    %v3095 = vmul.f32 %v2838, %v3029
    %v3096 = vmul.f32 %v2839, %v3029
    %v3097 = vmul.f32 %v2840, %v3029
    %v3098 = vmul.f32 %v2841, %v3039
    %v3099 = vmul.f32 %v2842, %v3039
    %v3100 = vmul.f32 %v2843, %v3039
    %v3101 = vmul.f32 %v2844, %v3039
    %v3102 = vmul.f32 %v2845, %v3049
    %v3103 = vmul.f32 %v2846, %v3049
    %v3104 = vmul.f32 %v2847, %v3049
    %v3105 = vmul.f32 %v2848, %v3049
    %v3106 = vmul.f32 %v2849, %v3059
    %v3107 = vmul.f32 %v2850, %v3059
    %v3108 = vmul.f32 %v2851, %v3059
    %v3109 = vmul.f32 %v2852, %v3059
    %v3110 = vmul.f32 %v2853, %v3069
    %v3111 = vmul.f32 %v2854, %v3069
    %v3112 = vmul.f32 %v2855, %v3069
    %v3113 = vmul.f32 %v2856, %v3069
    %v3114 = vmul.f32 %v2857, %v3079
    %v3115 = vmul.f32 %v2858, %v3079
    %v3116 = vmul.f32 %v2859, %v3079
    %v3117 = vmul.f32 %v2860, %v3079
    %v3118 = vmul.f32 %v2861, %v3089
    %v3119 = vmul.f32 %v2862, %v3089
    %v3120 = vmul.f32 %v2863, %v3089
    %v3121 = vmul.f32 %v2864, %v3089
    %3123 = vset.pattern.permute.xlu0 0
    %3124 = vperm.xlu0 %3123, %v3090
    %v3125 = vpop.permute.xlu0 %3124
    %3128 = vset.pattern.permute.xlu0 0
    %3129 = vperm.xlu0 %3128, %v3091
    %v3130 = vpop.permute.xlu0 %3129
    %3133 = vset.pattern.permute.xlu0 0
    %3134 = vperm.xlu0 %3133, %v3092
    %v3135 = vpop.permute.xlu0 %3134
    %3138 = vset.pattern.permute.xlu0 0
    %3139 = vperm.xlu0 %3138, %v3093
    %v3140 = vpop.permute.xlu0 %3139
    %3143 = vset.pattern.permute.xlu0 0
    %3144 = vperm.xlu0 %3143, %v3094
    %v3145 = vpop.permute.xlu0 %3144
    %3148 = vset.pattern.permute.xlu0 0
    %3149 = vperm.xlu0 %3148, %v3095
    %v3150 = vpop.permute.xlu0 %3149
    %3153 = vset.pattern.permute.xlu0 0
    %3154 = vperm.xlu0 %3153, %v3096
    %v3155 = vpop.permute.xlu0 %3154
    %3158 = vset.pattern.permute.xlu0 0
    %3159 = vperm.xlu0 %3158, %v3097
    %v3160 = vpop.permute.xlu0 %3159
    %3163 = vset.pattern.permute.xlu0 0
    %3164 = vperm.xlu0 %3163, %v3098
    %v3165 = vpop.permute.xlu0 %3164
    %3168 = vset.pattern.permute.xlu0 0
    %3169 = vperm.xlu0 %3168, %v3099
    %v3170 = vpop.permute.xlu0 %3169
    %3173 = vset.pattern.permute.xlu0 0
    %3174 = vperm.xlu0 %3173, %v3100
    %v3175 = vpop.permute.xlu0 %3174
    %3178 = vset.pattern.permute.xlu0 0
    %3179 = vperm.xlu0 %3178, %v3101
    %v3180 = vpop.permute.xlu0 %3179
    %3183 = vset.pattern.permute.xlu0 0
    %3184 = vperm.xlu0 %3183, %v3102
    %v3185 = vpop.permute.xlu0 %3184
    %3188 = vset.pattern.permute.xlu0 0
    %3189 = vperm.xlu0 %3188, %v3103
    %v3190 = vpop.permute.xlu0 %3189
    %3193 = vset.pattern.permute.xlu0 0
    %3194 = vperm.xlu0 %3193, %v3104
    %v3195 = vpop.permute.xlu0 %3194
    %3198 = vset.pattern.permute.xlu0 0
    %3199 = vperm.xlu0 %3198, %v3105
    %v3200 = vpop.permute.xlu0 %3199
    %3203 = vset.pattern.permute.xlu0 0
    %3204 = vperm.xlu0 %3203, %v3106
    %v3205 = vpop.permute.xlu0 %3204
    %3208 = vset.pattern.permute.xlu0 0
    %3209 = vperm.xlu0 %3208, %v3107
    %v3210 = vpop.permute.xlu0 %3209
    %3213 = vset.pattern.permute.xlu0 0
    %3214 = vperm.xlu0 %3213, %v3108
    %v3215 = vpop.permute.xlu0 %3214
    %3218 = vset.pattern.permute.xlu0 0
    %3219 = vperm.xlu0 %3218, %v3109
    %v3220 = vpop.permute.xlu0 %3219
    %3223 = vset.pattern.permute.xlu0 0
    %3224 = vperm.xlu0 %3223, %v3110
    %v3225 = vpop.permute.xlu0 %3224
    %3228 = vset.pattern.permute.xlu0 0
    %3229 = vperm.xlu0 %3228, %v3111
    %v3230 = vpop.permute.xlu0 %3229
    %3233 = vset.pattern.permute.xlu0 0
    %3234 = vperm.xlu0 %3233, %v3112
    %v3235 = vpop.permute.xlu0 %3234
    %3238 = vset.pattern.permute.xlu0 0
    %3239 = vperm.xlu0 %3238, %v3113
    %v3240 = vpop.permute.xlu0 %3239
    %3243 = vset.pattern.permute.xlu0 0
    %3244 = vperm.xlu0 %3243, %v3114
    %v3245 = vpop.permute.xlu0 %3244
    %3248 = vset.pattern.permute.xlu0 0
    %3249 = vperm.xlu0 %3248, %v3115
    %v3250 = vpop.permute.xlu0 %3249
    %3253 = vset.pattern.permute.xlu0 0
    %3254 = vperm.xlu0 %3253, %v3116
    %v3255 = vpop.permute.xlu0 %3254
    %3258 = vset.pattern.permute.xlu0 0
    %3259 = vperm.xlu0 %3258, %v3117
    %v3260 = vpop.permute.xlu0 %3259
    %3263 = vset.pattern.permute.xlu0 0
    %3264 = vperm.xlu0 %3263, %v3118
    %v3265 = vpop.permute.xlu0 %3264
    %3268 = vset.pattern.permute.xlu0 0
    %3269 = vperm.xlu0 %3268, %v3119
    %v3270 = vpop.permute.xlu0 %3269
    %3273 = vset.pattern.permute.xlu0 0
    %3274 = vperm.xlu0 %3273, %v3120
    %v3275 = vpop.permute.xlu0 %3274
    %3278 = vset.pattern.permute.xlu0 0
    %3279 = vperm.xlu0 %3278, %v3121
    %v3280 = vpop.permute.xlu0 %3279
    %v3282 = vmul.f32 %v3125, %v2577
    %v3283 = vmul.f32 %v3125, %v2578
    %v3284 = vmul.f32 %v3125, %v2579
    %v3285 = vmul.f32 %v3125, %v2580
    %v3286 = vmul.f32 %v3130, %v2581
    %v3287 = vmul.f32 %v3130, %v2582
    %v3288 = vmul.f32 %v3130, %v2583
    %v3289 = vmul.f32 %v3130, %v2584
    %v3290 = vmul.f32 %v3135, %v2585
    %v3291 = vmul.f32 %v3135, %v2586
    %v3292 = vmul.f32 %v3135, %v2587
    %v3293 = vmul.f32 %v3135, %v2588
    %v3294 = vmul.f32 %v3140, %v2589
    %v3295 = vmul.f32 %v3140, %v2590
    %v3296 = vmul.f32 %v3140, %v2591
    %v3297 = vmul.f32 %v3140, %v2592
    %v3298 = vmul.f32 %v3145, %v2593
    %v3299 = vmul.f32 %v3145, %v2594
    %v3300 = vmul.f32 %v3145, %v2595
    %v3301 = vmul.f32 %v3145, %v2596
    %v3302 = vmul.f32 %v3150, %v2597
    %v3303 = vmul.f32 %v3150, %v2598
    %v3304 = vmul.f32 %v3150, %v2599
    %v3305 = vmul.f32 %v3150, %v2600
    %v3306 = vmul.f32 %v3155, %v2601
    %v3307 = vmul.f32 %v3155, %v2602
    %v3308 = vmul.f32 %v3155, %v2603
    %v3309 = vmul.f32 %v3155, %v2604
    %v3310 = vmul.f32 %v3160, %v2605
    %v3311 = vmul.f32 %v3160, %v2606
    %v3312 = vmul.f32 %v3160, %v2607
    %v3313 = vmul.f32 %v3160, %v2608
    %v3314 = vmul.f32 %v3165, %v2609
    %v3315 = vmul.f32 %v3165, %v2610
    %v3316 = vmul.f32 %v3165, %v2611
    %v3317 = vmul.f32 %v3165, %v2612
    %v3318 = vmul.f32 %v3170, %v2613
    %v3319 = vmul.f32 %v3170, %v2614
    %v3320 = vmul.f32 %v3170, %v2615
    %v3321 = vmul.f32 %v3170, %v2616
    %v3322 = vmul.f32 %v3175, %v2617
    %v3323 = vmul.f32 %v3175, %v2618
    %v3324 = vmul.f32 %v3175, %v2619
    %v3325 = vmul.f32 %v3175, %v2620
    %v3326 = vmul.f32 %v3180, %v2621
    %v3327 = vmul.f32 %v3180, %v2622
    %v3328 = vmul.f32 %v3180, %v2623
    %v3329 = vmul.f32 %v3180, %v2624
    %v3330 = vmul.f32 %v3185, %v2625
    %v3331 = vmul.f32 %v3185, %v2626
    %v3332 = vmul.f32 %v3185, %v2627
    %v3333 = vmul.f32 %v3185, %v2628
    %v3334 = vmul.f32 %v3190, %v2629
    %v3335 = vmul.f32 %v3190, %v2630
    %v3336 = vmul.f32 %v3190, %v2631
    %v3337 = vmul.f32 %v3190, %v2632
    %v3338 = vmul.f32 %v3195, %v2633
    %v3339 = vmul.f32 %v3195, %v2634
    %v3340 = vmul.f32 %v3195, %v2635
    %v3341 = vmul.f32 %v3195, %v2636
    %v3342 = vmul.f32 %v3200, %v2637
    %v3343 = vmul.f32 %v3200, %v2638
    %v3344 = vmul.f32 %v3200, %v2639
    %v3345 = vmul.f32 %v3200, %v2640
    %v3346 = vmul.f32 %v3205, %v2641
    %v3347 = vmul.f32 %v3205, %v2642
    %v3348 = vmul.f32 %v3205, %v2643
    %v3349 = vmul.f32 %v3205, %v2644
    %v3350 = vmul.f32 %v3210, %v2645
    %v3351 = vmul.f32 %v3210, %v2646
    %v3352 = vmul.f32 %v3210, %v2647
    %v3353 = vmul.f32 %v3210, %v2648
    %v3354 = vmul.f32 %v3215, %v2649
    %v3355 = vmul.f32 %v3215, %v2650
    %v3356 = vmul.f32 %v3215, %v2651
    %v3357 = vmul.f32 %v3215, %v2652
    %v3358 = vmul.f32 %v3220, %v2653
    %v3359 = vmul.f32 %v3220, %v2654
    %v3360 = vmul.f32 %v3220, %v2655
    %v3361 = vmul.f32 %v3220, %v2656
    %v3362 = vmul.f32 %v3225, %v2657
    %v3363 = vmul.f32 %v3225, %v2658
    %v3364 = vmul.f32 %v3225, %v2659
    %v3365 = vmul.f32 %v3225, %v2660
    %v3366 = vmul.f32 %v3230, %v2661
    %v3367 = vmul.f32 %v3230, %v2662
    %v3368 = vmul.f32 %v3230, %v2663
    %v3369 = vmul.f32 %v3230, %v2664
    %v3370 = vmul.f32 %v3235, %v2665
    %v3371 = vmul.f32 %v3235, %v2666
    %v3372 = vmul.f32 %v3235, %v2667
    %v3373 = vmul.f32 %v3235, %v2668
    %v3374 = vmul.f32 %v3240, %v2669
    %v3375 = vmul.f32 %v3240, %v2670
    %v3376 = vmul.f32 %v3240, %v2671
    %v3377 = vmul.f32 %v3240, %v2672
    %v3378 = vmul.f32 %v3245, %v2673
    %v3379 = vmul.f32 %v3245, %v2674
    %v3380 = vmul.f32 %v3245, %v2675
    %v3381 = vmul.f32 %v3245, %v2676
    %v3382 = vmul.f32 %v3250, %v2677
    %v3383 = vmul.f32 %v3250, %v2678
    %v3384 = vmul.f32 %v3250, %v2679
    %v3385 = vmul.f32 %v3250, %v2680
    %v3386 = vmul.f32 %v3255, %v2681
    %v3387 = vmul.f32 %v3255, %v2682
    %v3388 = vmul.f32 %v3255, %v2683
    %v3389 = vmul.f32 %v3255, %v2684
    %v3390 = vmul.f32 %v3260, %v2685
    %v3391 = vmul.f32 %v3260, %v2686
    %v3392 = vmul.f32 %v3260, %v2687
    %v3393 = vmul.f32 %v3260, %v2688
    %v3394 = vmul.f32 %v3265, %v2689
    %v3395 = vmul.f32 %v3265, %v2690
    %v3396 = vmul.f32 %v3265, %v2691
    %v3397 = vmul.f32 %v3265, %v2692
    %v3398 = vmul.f32 %v3270, %v2693
    %v3399 = vmul.f32 %v3270, %v2694
    %v3400 = vmul.f32 %v3270, %v2695
    %v3401 = vmul.f32 %v3270, %v2696
    %v3402 = vmul.f32 %v3275, %v2697
    %v3403 = vmul.f32 %v3275, %v2698
    %v3404 = vmul.f32 %v3275, %v2699
    %v3405 = vmul.f32 %v3275, %v2700
    %v3406 = vmul.f32 %v3280, %v2701
    %v3407 = vmul.f32 %v3280, %v2702
    %v3408 = vmul.f32 %v3280, %v2703
    %v3409 = vmul.f32 %v3280, %v2704
    %v3410 = vadd.f32 %v3282, %v3286
    %v3411 = vadd.f32 %v3410, %v3290
    %v3412 = vadd.f32 %v3411, %v3294
    %v3413 = vrot.slane %v3412, 4
    %v3414 = vadd.f32 %v3412, %v3413
    %v3415 = vrot.slane %v3414, 2
    %v3416 = vadd.f32 %v3414, %v3415
    %v3417 = vrot.slane %v3416, 1
    %v3418 = vadd.f32 %v3416, %v3417
    %v3419 = vadd.f32 %v3283, %v3287
    %v3420 = vadd.f32 %v3419, %v3291
    %v3421 = vadd.f32 %v3420, %v3295
    %v3422 = vrot.slane %v3421, 4
    %v3423 = vadd.f32 %v3421, %v3422
    %v3424 = vrot.slane %v3423, 2
    %v3425 = vadd.f32 %v3423, %v3424
    %v3426 = vrot.slane %v3425, 1
    %v3427 = vadd.f32 %v3425, %v3426
    %v3428 = vadd.f32 %v3284, %v3288
    %v3429 = vadd.f32 %v3428, %v3292
    %v3430 = vadd.f32 %v3429, %v3296
    %v3431 = vrot.slane %v3430, 4
    %v3432 = vadd.f32 %v3430, %v3431
    %v3433 = vrot.slane %v3432, 2
    %v3434 = vadd.f32 %v3432, %v3433
    %v3435 = vrot.slane %v3434, 1
    %v3436 = vadd.f32 %v3434, %v3435
    %v3437 = vadd.f32 %v3285, %v3289
    %v3438 = vadd.f32 %v3437, %v3293
    %v3439 = vadd.f32 %v3438, %v3297
    %v3440 = vrot.slane %v3439, 4
    %v3441 = vadd.f32 %v3439, %v3440
    %v3442 = vrot.slane %v3441, 2
    %v3443 = vadd.f32 %v3441, %v3442
    %v3444 = vrot.slane %v3443, 1
    %v3445 = vadd.f32 %v3443, %v3444
    %v3446 = vadd.f32 %v3298, %v3302
    %v3447 = vadd.f32 %v3446, %v3306
    %v3448 = vadd.f32 %v3447, %v3310
    %v3449 = vrot.slane %v3448, 4
    %v3450 = vadd.f32 %v3448, %v3449
    %v3451 = vrot.slane %v3450, 2
    %v3452 = vadd.f32 %v3450, %v3451
    %v3453 = vrot.slane %v3452, 1
    %v3454 = vadd.f32 %v3452, %v3453
    %v3455 = vadd.f32 %v3299, %v3303
    %v3456 = vadd.f32 %v3455, %v3307
    %v3457 = vadd.f32 %v3456, %v3311
    %v3458 = vrot.slane %v3457, 4
    %v3459 = vadd.f32 %v3457, %v3458
    %v3460 = vrot.slane %v3459, 2
    %v3461 = vadd.f32 %v3459, %v3460
    %v3462 = vrot.slane %v3461, 1
    %v3463 = vadd.f32 %v3461, %v3462
    %v3464 = vadd.f32 %v3300, %v3304
    %v3465 = vadd.f32 %v3464, %v3308
    %v3466 = vadd.f32 %v3465, %v3312
    %v3467 = vrot.slane %v3466, 4
    %v3468 = vadd.f32 %v3466, %v3467
    %v3469 = vrot.slane %v3468, 2
    %v3470 = vadd.f32 %v3468, %v3469
    %v3471 = vrot.slane %v3470, 1
    %v3472 = vadd.f32 %v3470, %v3471
    %v3473 = vadd.f32 %v3301, %v3305
    %v3474 = vadd.f32 %v3473, %v3309
    %v3475 = vadd.f32 %v3474, %v3313
    %v3476 = vrot.slane %v3475, 4
    %v3477 = vadd.f32 %v3475, %v3476
    %v3478 = vrot.slane %v3477, 2
    %v3479 = vadd.f32 %v3477, %v3478
    %v3480 = vrot.slane %v3479, 1
    %v3481 = vadd.f32 %v3479, %v3480
    %v3482 = vadd.f32 %v3314, %v3318
    %v3483 = vadd.f32 %v3482, %v3322
    %v3484 = vadd.f32 %v3483, %v3326
    %v3485 = vrot.slane %v3484, 4
    %v3486 = vadd.f32 %v3484, %v3485
    %v3487 = vrot.slane %v3486, 2
    %v3488 = vadd.f32 %v3486, %v3487
    %v3489 = vrot.slane %v3488, 1
    %v3490 = vadd.f32 %v3488, %v3489
    %v3491 = vadd.f32 %v3315, %v3319
    %v3492 = vadd.f32 %v3491, %v3323
    %v3493 = vadd.f32 %v3492, %v3327
    %v3494 = vrot.slane %v3493, 4
    %v3495 = vadd.f32 %v3493, %v3494
    %v3496 = vrot.slane %v3495, 2
    %v3497 = vadd.f32 %v3495, %v3496
    %v3498 = vrot.slane %v3497, 1
    %v3499 = vadd.f32 %v3497, %v3498
    %v3500 = vadd.f32 %v3316, %v3320
    %v3501 = vadd.f32 %v3500, %v3324
    %v3502 = vadd.f32 %v3501, %v3328
    %v3503 = vrot.slane %v3502, 4
    %v3504 = vadd.f32 %v3502, %v3503
    %v3505 = vrot.slane %v3504, 2
    %v3506 = vadd.f32 %v3504, %v3505
    %v3507 = vrot.slane %v3506, 1
    %v3508 = vadd.f32 %v3506, %v3507
    %v3509 = vadd.f32 %v3317, %v3321
    %v3510 = vadd.f32 %v3509, %v3325
    %v3511 = vadd.f32 %v3510, %v3329
    %v3512 = vrot.slane %v3511, 4
    %v3513 = vadd.f32 %v3511, %v3512
    %v3514 = vrot.slane %v3513, 2
    %v3515 = vadd.f32 %v3513, %v3514
    %v3516 = vrot.slane %v3515, 1
    %v3517 = vadd.f32 %v3515, %v3516
    %v3518 = vadd.f32 %v3330, %v3334
    %v3519 = vadd.f32 %v3518, %v3338
    %v3520 = vadd.f32 %v3519, %v3342
    %v3521 = vrot.slane %v3520, 4
    %v3522 = vadd.f32 %v3520, %v3521
    %v3523 = vrot.slane %v3522, 2
    %v3524 = vadd.f32 %v3522, %v3523
    %v3525 = vrot.slane %v3524, 1
    %v3526 = vadd.f32 %v3524, %v3525
    %v3527 = vadd.f32 %v3331, %v3335
    %v3528 = vadd.f32 %v3527, %v3339
    %v3529 = vadd.f32 %v3528, %v3343
    %v3530 = vrot.slane %v3529, 4
    %v3531 = vadd.f32 %v3529, %v3530
    %v3532 = vrot.slane %v3531, 2
    %v3533 = vadd.f32 %v3531, %v3532
    %v3534 = vrot.slane %v3533, 1
    %v3535 = vadd.f32 %v3533, %v3534
    %v3536 = vadd.f32 %v3332, %v3336
    %v3537 = vadd.f32 %v3536, %v3340
    %v3538 = vadd.f32 %v3537, %v3344
    %v3539 = vrot.slane %v3538, 4
    %v3540 = vadd.f32 %v3538, %v3539
    %v3541 = vrot.slane %v3540, 2
    %v3542 = vadd.f32 %v3540, %v3541
    %v3543 = vrot.slane %v3542, 1
    %v3544 = vadd.f32 %v3542, %v3543
    %v3545 = vadd.f32 %v3333, %v3337
    %v3546 = vadd.f32 %v3545, %v3341
    %v3547 = vadd.f32 %v3546, %v3345
    %v3548 = vrot.slane %v3547, 4
    %v3549 = vadd.f32 %v3547, %v3548
    %v3550 = vrot.slane %v3549, 2
    %v3551 = vadd.f32 %v3549, %v3550
    %v3552 = vrot.slane %v3551, 1
    %v3553 = vadd.f32 %v3551, %v3552
    %v3554 = vadd.f32 %v3346, %v3350
    %v3555 = vadd.f32 %v3554, %v3354
    %v3556 = vadd.f32 %v3555, %v3358
    %v3557 = vrot.slane %v3556, 4
    %v3558 = vadd.f32 %v3556, %v3557
    %v3559 = vrot.slane %v3558, 2
    %v3560 = vadd.f32 %v3558, %v3559
    %v3561 = vrot.slane %v3560, 1
    %v3562 = vadd.f32 %v3560, %v3561
    %v3563 = vadd.f32 %v3347, %v3351
    %v3564 = vadd.f32 %v3563, %v3355
    %v3565 = vadd.f32 %v3564, %v3359
    %v3566 = vrot.slane %v3565, 4
    %v3567 = vadd.f32 %v3565, %v3566
    %v3568 = vrot.slane %v3567, 2
    %v3569 = vadd.f32 %v3567, %v3568
    %v3570 = vrot.slane %v3569, 1
    %v3571 = vadd.f32 %v3569, %v3570
    %v3572 = vadd.f32 %v3348, %v3352
    %v3573 = vadd.f32 %v3572, %v3356
    %v3574 = vadd.f32 %v3573, %v3360
    %v3575 = vrot.slane %v3574, 4
    %v3576 = vadd.f32 %v3574, %v3575
    %v3577 = vrot.slane %v3576, 2
    %v3578 = vadd.f32 %v3576, %v3577
    %v3579 = vrot.slane %v3578, 1
    %v3580 = vadd.f32 %v3578, %v3579
    %v3581 = vadd.f32 %v3349, %v3353
    %v3582 = vadd.f32 %v3581, %v3357
    %v3583 = vadd.f32 %v3582, %v3361
    %v3584 = vrot.slane %v3583, 4
    %v3585 = vadd.f32 %v3583, %v3584
    %v3586 = vrot.slane %v3585, 2
    %v3587 = vadd.f32 %v3585, %v3586
    %v3588 = vrot.slane %v3587, 1
    %v3589 = vadd.f32 %v3587, %v3588
    %v3590 = vadd.f32 %v3362, %v3366
    %v3591 = vadd.f32 %v3590, %v3370
    %v3592 = vadd.f32 %v3591, %v3374
    %v3593 = vrot.slane %v3592, 4
    %v3594 = vadd.f32 %v3592, %v3593
    %v3595 = vrot.slane %v3594, 2
    %v3596 = vadd.f32 %v3594, %v3595
    %v3597 = vrot.slane %v3596, 1
    %v3598 = vadd.f32 %v3596, %v3597
    %v3599 = vadd.f32 %v3363, %v3367
    %v3600 = vadd.f32 %v3599, %v3371
    %v3601 = vadd.f32 %v3600, %v3375
    %v3602 = vrot.slane %v3601, 4
    %v3603 = vadd.f32 %v3601, %v3602
    %v3604 = vrot.slane %v3603, 2
    %v3605 = vadd.f32 %v3603, %v3604
    %v3606 = vrot.slane %v3605, 1
    %v3607 = vadd.f32 %v3605, %v3606
    %v3608 = vadd.f32 %v3364, %v3368
    %v3609 = vadd.f32 %v3608, %v3372
    %v3610 = vadd.f32 %v3609, %v3376
    %v3611 = vrot.slane %v3610, 4
    %v3612 = vadd.f32 %v3610, %v3611
    %v3613 = vrot.slane %v3612, 2
    %v3614 = vadd.f32 %v3612, %v3613
    %v3615 = vrot.slane %v3614, 1
    %v3616 = vadd.f32 %v3614, %v3615
    %v3617 = vadd.f32 %v3365, %v3369
    %v3618 = vadd.f32 %v3617, %v3373
    %v3619 = vadd.f32 %v3618, %v3377
    %v3620 = vrot.slane %v3619, 4
    %v3621 = vadd.f32 %v3619, %v3620
    %v3622 = vrot.slane %v3621, 2
    %v3623 = vadd.f32 %v3621, %v3622
    %v3624 = vrot.slane %v3623, 1
    %v3625 = vadd.f32 %v3623, %v3624
    %v3626 = vadd.f32 %v3378, %v3382
    %v3627 = vadd.f32 %v3626, %v3386
    %v3628 = vadd.f32 %v3627, %v3390
    %v3629 = vrot.slane %v3628, 4
    %v3630 = vadd.f32 %v3628, %v3629
    %v3631 = vrot.slane %v3630, 2
    %v3632 = vadd.f32 %v3630, %v3631
    %v3633 = vrot.slane %v3632, 1
    %v3634 = vadd.f32 %v3632, %v3633
    %v3635 = vadd.f32 %v3379, %v3383
    %v3636 = vadd.f32 %v3635, %v3387
    %v3637 = vadd.f32 %v3636, %v3391
    %v3638 = vrot.slane %v3637, 4
    %v3639 = vadd.f32 %v3637, %v3638
    %v3640 = vrot.slane %v3639, 2
    %v3641 = vadd.f32 %v3639, %v3640
    %v3642 = vrot.slane %v3641, 1
    %v3643 = vadd.f32 %v3641, %v3642
    %v3644 = vadd.f32 %v3380, %v3384
    %v3645 = vadd.f32 %v3644, %v3388
    %v3646 = vadd.f32 %v3645, %v3392
    %v3647 = vrot.slane %v3646, 4
    %v3648 = vadd.f32 %v3646, %v3647
    %v3649 = vrot.slane %v3648, 2
    %v3650 = vadd.f32 %v3648, %v3649
    %v3651 = vrot.slane %v3650, 1
    %v3652 = vadd.f32 %v3650, %v3651
    %v3653 = vadd.f32 %v3381, %v3385
    %v3654 = vadd.f32 %v3653, %v3389
    %v3655 = vadd.f32 %v3654, %v3393
    %v3656 = vrot.slane %v3655, 4
    %v3657 = vadd.f32 %v3655, %v3656
    %v3658 = vrot.slane %v3657, 2
    %v3659 = vadd.f32 %v3657, %v3658
    %v3660 = vrot.slane %v3659, 1
    %v3661 = vadd.f32 %v3659, %v3660
    %v3662 = vadd.f32 %v3394, %v3398
    %v3663 = vadd.f32 %v3662, %v3402
    %v3664 = vadd.f32 %v3663, %v3406
    %v3665 = vrot.slane %v3664, 4
    %v3666 = vadd.f32 %v3664, %v3665
    %v3667 = vrot.slane %v3666, 2
    %v3668 = vadd.f32 %v3666, %v3667
    %v3669 = vrot.slane %v3668, 1
    %v3670 = vadd.f32 %v3668, %v3669
    %v3671 = vadd.f32 %v3395, %v3399
    %v3672 = vadd.f32 %v3671, %v3403
    %v3673 = vadd.f32 %v3672, %v3407
    %v3674 = vrot.slane %v3673, 4
    %v3675 = vadd.f32 %v3673, %v3674
    %v3676 = vrot.slane %v3675, 2
    %v3677 = vadd.f32 %v3675, %v3676
    %v3678 = vrot.slane %v3677, 1
    %v3679 = vadd.f32 %v3677, %v3678
    %v3680 = vadd.f32 %v3396, %v3400
    %v3681 = vadd.f32 %v3680, %v3404
    %v3682 = vadd.f32 %v3681, %v3408
    %v3683 = vrot.slane %v3682, 4
    %v3684 = vadd.f32 %v3682, %v3683
    %v3685 = vrot.slane %v3684, 2
    %v3686 = vadd.f32 %v3684, %v3685
    %v3687 = vrot.slane %v3686, 1
    %v3688 = vadd.f32 %v3686, %v3687
    %v3689 = vadd.f32 %v3397, %v3401
    %v3690 = vadd.f32 %v3689, %v3405
    %v3691 = vadd.f32 %v3690, %v3409
    %v3692 = vrot.slane %v3691, 4
    %v3693 = vadd.f32 %v3691, %v3692
    %v3694 = vrot.slane %v3693, 2
    %v3695 = vadd.f32 %v3693, %v3694
    %v3696 = vrot.slane %v3695, 1
    %v3697 = vadd.f32 %v3695, %v3696
    %v3698 = vmul.f32 %v3418, %v2705
    %v3699 = vmul.f32 %v3427, %v2706
    %v3700 = vmul.f32 %v3436, %v2707
    %v3701 = vmul.f32 %v3445, %v2708
    %v3702 = vmul.f32 %v3418, %v2709
    %v3703 = vmul.f32 %v3427, %v2710
    %v3704 = vmul.f32 %v3436, %v2711
    %v3705 = vmul.f32 %v3445, %v2712
    %v3706 = vmul.f32 %v3418, %v2713
    %v3707 = vmul.f32 %v3427, %v2714
    %v3708 = vmul.f32 %v3436, %v2715
    %v3709 = vmul.f32 %v3445, %v2716
    %v3710 = vmul.f32 %v3418, %v2717
    %v3711 = vmul.f32 %v3427, %v2718
    %v3712 = vmul.f32 %v3436, %v2719
    %v3713 = vmul.f32 %v3445, %v2720
    %v3714 = vmul.f32 %v3454, %v2721
    %v3715 = vmul.f32 %v3463, %v2722
    %v3716 = vmul.f32 %v3472, %v2723
    %v3717 = vmul.f32 %v3481, %v2724
    %v3718 = vmul.f32 %v3454, %v2725
    %v3719 = vmul.f32 %v3463, %v2726
    %v3720 = vmul.f32 %v3472, %v2727
    %v3721 = vmul.f32 %v3481, %v2728
    %v3722 = vmul.f32 %v3454, %v2729
    %v3723 = vmul.f32 %v3463, %v2730
    %v3724 = vmul.f32 %v3472, %v2731
    %v3725 = vmul.f32 %v3481, %v2732
    %v3726 = vmul.f32 %v3454, %v2733
    %v3727 = vmul.f32 %v3463, %v2734
    %v3728 = vmul.f32 %v3472, %v2735
    %v3729 = vmul.f32 %v3481, %v2736
    %v3730 = vmul.f32 %v3490, %v2737
    %v3731 = vmul.f32 %v3499, %v2738
    %v3732 = vmul.f32 %v3508, %v2739
    %v3733 = vmul.f32 %v3517, %v2740
    %v3734 = vmul.f32 %v3490, %v2741
    %v3735 = vmul.f32 %v3499, %v2742
    %v3736 = vmul.f32 %v3508, %v2743
    %v3737 = vmul.f32 %v3517, %v2744
    %v3738 = vmul.f32 %v3490, %v2745
    %v3739 = vmul.f32 %v3499, %v2746
    %v3740 = vmul.f32 %v3508, %v2747
    %v3741 = vmul.f32 %v3517, %v2748
    %v3742 = vmul.f32 %v3490, %v2749
    %v3743 = vmul.f32 %v3499, %v2750
    %v3744 = vmul.f32 %v3508, %v2751
    %v3745 = vmul.f32 %v3517, %v2752
    %v3746 = vmul.f32 %v3526, %v2753
    %v3747 = vmul.f32 %v3535, %v2754
    %v3748 = vmul.f32 %v3544, %v2755
    %v3749 = vmul.f32 %v3553, %v2756
    %v3750 = vmul.f32 %v3526, %v2757
    %v3751 = vmul.f32 %v3535, %v2758
    %v3752 = vmul.f32 %v3544, %v2759
    %v3753 = vmul.f32 %v3553, %v2760
    %v3754 = vmul.f32 %v3526, %v2761
    %v3755 = vmul.f32 %v3535, %v2762
    %v3756 = vmul.f32 %v3544, %v2763
    %v3757 = vmul.f32 %v3553, %v2764
    %v3758 = vmul.f32 %v3526, %v2765
    %v3759 = vmul.f32 %v3535, %v2766
    %v3760 = vmul.f32 %v3544, %v2767
    %v3761 = vmul.f32 %v3553, %v2768
    %v3762 = vmul.f32 %v3562, %v2769
    %v3763 = vmul.f32 %v3571, %v2770
    %v3764 = vmul.f32 %v3580, %v2771
    %v3765 = vmul.f32 %v3589, %v2772
    %v3766 = vmul.f32 %v3562, %v2773
    %v3767 = vmul.f32 %v3571, %v2774
    %v3768 = vmul.f32 %v3580, %v2775
    %v3769 = vmul.f32 %v3589, %v2776
    %v3770 = vmul.f32 %v3562, %v2777
    %v3771 = vmul.f32 %v3571, %v2778
    %v3772 = vmul.f32 %v3580, %v2779
    %v3773 = vmul.f32 %v3589, %v2780
    %v3774 = vmul.f32 %v3562, %v2781
    %v3775 = vmul.f32 %v3571, %v2782
    %v3776 = vmul.f32 %v3580, %v2783
    %v3777 = vmul.f32 %v3589, %v2784
    %v3778 = vmul.f32 %v3598, %v2785
    %v3779 = vmul.f32 %v3607, %v2786
    %v3780 = vmul.f32 %v3616, %v2787
    %v3781 = vmul.f32 %v3625, %v2788
    %v3782 = vmul.f32 %v3598, %v2789
    %v3783 = vmul.f32 %v3607, %v2790
    %v3784 = vmul.f32 %v3616, %v2791
    %v3785 = vmul.f32 %v3625, %v2792
    %v3786 = vmul.f32 %v3598, %v2793
    %v3787 = vmul.f32 %v3607, %v2794
    %v3788 = vmul.f32 %v3616, %v2795
    %v3789 = vmul.f32 %v3625, %v2796
    %v3790 = vmul.f32 %v3598, %v2797
    %v3791 = vmul.f32 %v3607, %v2798
    %v3792 = vmul.f32 %v3616, %v2799
    %v3793 = vmul.f32 %v3625, %v2800
    %v3794 = vmul.f32 %v3634, %v2801
    %v3795 = vmul.f32 %v3643, %v2802
    %v3796 = vmul.f32 %v3652, %v2803
    %v3797 = vmul.f32 %v3661, %v2804
    %v3798 = vmul.f32 %v3634, %v2805
    %v3799 = vmul.f32 %v3643, %v2806
    %v3800 = vmul.f32 %v3652, %v2807
    %v3801 = vmul.f32 %v3661, %v2808
    %v3802 = vmul.f32 %v3634, %v2809
    %v3803 = vmul.f32 %v3643, %v2810
    %v3804 = vmul.f32 %v3652, %v2811
    %v3805 = vmul.f32 %v3661, %v2812
    %v3806 = vmul.f32 %v3634, %v2813
    %v3807 = vmul.f32 %v3643, %v2814
    %v3808 = vmul.f32 %v3652, %v2815
    %v3809 = vmul.f32 %v3661, %v2816
    %v3810 = vmul.f32 %v3670, %v2817
    %v3811 = vmul.f32 %v3679, %v2818
    %v3812 = vmul.f32 %v3688, %v2819
    %v3813 = vmul.f32 %v3697, %v2820
    %v3814 = vmul.f32 %v3670, %v2821
    %v3815 = vmul.f32 %v3679, %v2822
    %v3816 = vmul.f32 %v3688, %v2823
    %v3817 = vmul.f32 %v3697, %v2824
    %v3818 = vmul.f32 %v3670, %v2825
    %v3819 = vmul.f32 %v3679, %v2826
    %v3820 = vmul.f32 %v3688, %v2827
    %v3821 = vmul.f32 %v3697, %v2828
    %v3822 = vmul.f32 %v3670, %v2829
    %v3823 = vmul.f32 %v3679, %v2830
    %v3824 = vmul.f32 %v3688, %v2831
    %v3825 = vmul.f32 %v3697, %v2832
    %v3826 = vld [vmem:[#allocation8] sm:$0xff]
    %v3827 = vld [vmem:[#allocation8 + $0x8] sm:$0xff]
    %v3828 = vld [vmem:[#allocation8 + $0x10] sm:$0xff]
    %v3829 = vld [vmem:[#allocation8 + $0x18] sm:$0xff]
    %v3830 = vld [vmem:[#allocation8 + $0x20] sm:$0xff]
    %v3831 = vld [vmem:[#allocation8 + $0x28] sm:$0xff]
    %v3832 = vld [vmem:[#allocation8 + $0x30] sm:$0xff]
    %v3833 = vld [vmem:[#allocation8 + $0x38] sm:$0xff]
    %v3834 = vld [vmem:[#allocation8 + $0x40] sm:$0xff]
    %v3835 = vld [vmem:[#allocation8 + $0x48] sm:$0xff]
    %v3836 = vld [vmem:[#allocation8 + $0x50] sm:$0xff]
    %v3837 = vld [vmem:[#allocation8 + $0x58] sm:$0xff]
    %v3838 = vld [vmem:[#allocation8 + $0x60] sm:$0xff]
    %v3839 = vld [vmem:[#allocation8 + $0x68] sm:$0xff]
    %v3840 = vld [vmem:[#allocation8 + $0x70] sm:$0xff]
    %v3841 = vld [vmem:[#allocation8 + $0x78] sm:$0xff]
    %v3842 = vld [vmem:[#allocation8 + $0x80] sm:$0xff]
    %v3843 = vld [vmem:[#allocation8 + $0x88] sm:$0xff]
    %v3844 = vld [vmem:[#allocation8 + $0x90] sm:$0xff]
    %v3845 = vld [vmem:[#allocation8 + $0x98] sm:$0xff]
    %v3846 = vld [vmem:[#allocation8 + $0xa0] sm:$0xff]
    %v3847 = vld [vmem:[#allocation8 + $0xa8] sm:$0xff]
    %v3848 = vld [vmem:[#allocation8 + $0xb0] sm:$0xff]
    %v3849 = vld [vmem:[#allocation8 + $0xb8] sm:$0xff]
    %v3850 = vld [vmem:[#allocation8 + $0xc0] sm:$0xff]
    %v3851 = vld [vmem:[#allocation8 + $0xc8] sm:$0xff]
    %v3852 = vld [vmem:[#allocation8 + $0xd0] sm:$0xff]
    %v3853 = vld [vmem:[#allocation8 + $0xd8] sm:$0xff]
    %v3854 = vld [vmem:[#allocation8 + $0xe0] sm:$0xff]
    %v3855 = vld [vmem:[#allocation8 + $0xe8] sm:$0xff]
    %v3856 = vld [vmem:[#allocation8 + $0xf0] sm:$0xff]
    %v3857 = vld [vmem:[#allocation8 + $0xf8] sm:$0xff]
    %v3858 = vld [vmem:[#allocation8 + $0x100] sm:$0xff]
    %v3859 = vld [vmem:[#allocation8 + $0x108] sm:$0xff]
    %v3860 = vld [vmem:[#allocation8 + $0x110] sm:$0xff]
    %v3861 = vld [vmem:[#allocation8 + $0x118] sm:$0xff]
    %v3862 = vld [vmem:[#allocation8 + $0x120] sm:$0xff]
    %v3863 = vld [vmem:[#allocation8 + $0x128] sm:$0xff]
    %v3864 = vld [vmem:[#allocation8 + $0x130] sm:$0xff]
    %v3865 = vld [vmem:[#allocation8 + $0x138] sm:$0xff]
    %v3866 = vld [vmem:[#allocation8 + $0x140] sm:$0xff]
    %v3867 = vld [vmem:[#allocation8 + $0x148] sm:$0xff]
    %v3868 = vld [vmem:[#allocation8 + $0x150] sm:$0xff]
    %v3869 = vld [vmem:[#allocation8 + $0x158] sm:$0xff]
    %v3870 = vld [vmem:[#allocation8 + $0x160] sm:$0xff]
    %v3871 = vld [vmem:[#allocation8 + $0x168] sm:$0xff]
    %v3872 = vld [vmem:[#allocation8 + $0x170] sm:$0xff]
    %v3873 = vld [vmem:[#allocation8 + $0x178] sm:$0xff]
    %v3874 = vld [vmem:[#allocation8 + $0x180] sm:$0xff]
    %v3875 = vld [vmem:[#allocation8 + $0x188] sm:$0xff]
    %v3876 = vld [vmem:[#allocation8 + $0x190] sm:$0xff]
    %v3877 = vld [vmem:[#allocation8 + $0x198] sm:$0xff]
    %v3878 = vld [vmem:[#allocation8 + $0x1a0] sm:$0xff]
    %v3879 = vld [vmem:[#allocation8 + $0x1a8] sm:$0xff]
    %v3880 = vld [vmem:[#allocation8 + $0x1b0] sm:$0xff]
    %v3881 = vld [vmem:[#allocation8 + $0x1b8] sm:$0xff]
    %v3882 = vld [vmem:[#allocation8 + $0x1c0] sm:$0xff]
    %v3883 = vld [vmem:[#allocation8 + $0x1c8] sm:$0xff]
    %v3884 = vld [vmem:[#allocation8 + $0x1d0] sm:$0xff]
    %v3885 = vld [vmem:[#allocation8 + $0x1d8] sm:$0xff]
    %v3886 = vld [vmem:[#allocation8 + $0x1e0] sm:$0xff]
    %v3887 = vld [vmem:[#allocation8 + $0x1e8] sm:$0xff]
    %v3888 = vld [vmem:[#allocation8 + $0x1f0] sm:$0xff]
    %v3889 = vld [vmem:[#allocation8 + $0x1f8] sm:$0xff]
    %v3890 = vld [vmem:[#allocation8 + $0x200] sm:$0xff]
    %v3891 = vld [vmem:[#allocation8 + $0x208] sm:$0xff]
    %v3892 = vld [vmem:[#allocation8 + $0x210] sm:$0xff]
    %v3893 = vld [vmem:[#allocation8 + $0x218] sm:$0xff]
    %v3894 = vld [vmem:[#allocation8 + $0x220] sm:$0xff]
    %v3895 = vld [vmem:[#allocation8 + $0x228] sm:$0xff]
    %v3896 = vld [vmem:[#allocation8 + $0x230] sm:$0xff]
    %v3897 = vld [vmem:[#allocation8 + $0x238] sm:$0xff]
    %v3898 = vld [vmem:[#allocation8 + $0x240] sm:$0xff]
    %v3899 = vld [vmem:[#allocation8 + $0x248] sm:$0xff]
    %v3900 = vld [vmem:[#allocation8 + $0x250] sm:$0xff]
    %v3901 = vld [vmem:[#allocation8 + $0x258] sm:$0xff]
    %v3902 = vld [vmem:[#allocation8 + $0x260] sm:$0xff]
    %v3903 = vld [vmem:[#allocation8 + $0x268] sm:$0xff]
    %v3904 = vld [vmem:[#allocation8 + $0x270] sm:$0xff]
    %v3905 = vld [vmem:[#allocation8 + $0x278] sm:$0xff]
    %v3906 = vld [vmem:[#allocation8 + $0x280] sm:$0xff]
    %v3907 = vld [vmem:[#allocation8 + $0x288] sm:$0xff]
    %v3908 = vld [vmem:[#allocation8 + $0x290] sm:$0xff]
    %v3909 = vld [vmem:[#allocation8 + $0x298] sm:$0xff]
    %v3910 = vld [vmem:[#allocation8 + $0x2a0] sm:$0xff]
    %v3911 = vld [vmem:[#allocation8 + $0x2a8] sm:$0xff]
    %v3912 = vld [vmem:[#allocation8 + $0x2b0] sm:$0xff]
    %v3913 = vld [vmem:[#allocation8 + $0x2b8] sm:$0xff]
    %v3914 = vld [vmem:[#allocation8 + $0x2c0] sm:$0xff]
    %v3915 = vld [vmem:[#allocation8 + $0x2c8] sm:$0xff]
    %v3916 = vld [vmem:[#allocation8 + $0x2d0] sm:$0xff]
    %v3917 = vld [vmem:[#allocation8 + $0x2d8] sm:$0xff]
    %v3918 = vld [vmem:[#allocation8 + $0x2e0] sm:$0xff]
    %v3919 = vld [vmem:[#allocation8 + $0x2e8] sm:$0xff]
    %v3920 = vld [vmem:[#allocation8 + $0x2f0] sm:$0xff]
    %v3921 = vld [vmem:[#allocation8 + $0x2f8] sm:$0xff]
    %v3922 = vld [vmem:[#allocation8 + $0x300] sm:$0xff]
    %v3923 = vld [vmem:[#allocation8 + $0x308] sm:$0xff]
    %v3924 = vld [vmem:[#allocation8 + $0x310] sm:$0xff]
    %v3925 = vld [vmem:[#allocation8 + $0x318] sm:$0xff]
    %v3926 = vld [vmem:[#allocation8 + $0x320] sm:$0xff]
    %v3927 = vld [vmem:[#allocation8 + $0x328] sm:$0xff]
    %v3928 = vld [vmem:[#allocation8 + $0x330] sm:$0xff]
    %v3929 = vld [vmem:[#allocation8 + $0x338] sm:$0xff]
    %v3930 = vld [vmem:[#allocation8 + $0x340] sm:$0xff]
    %v3931 = vld [vmem:[#allocation8 + $0x348] sm:$0xff]
    %v3932 = vld [vmem:[#allocation8 + $0x350] sm:$0xff]
    %v3933 = vld [vmem:[#allocation8 + $0x358] sm:$0xff]
    %v3934 = vld [vmem:[#allocation8 + $0x360] sm:$0xff]
    %v3935 = vld [vmem:[#allocation8 + $0x368] sm:$0xff]
    %v3936 = vld [vmem:[#allocation8 + $0x370] sm:$0xff]
    %v3937 = vld [vmem:[#allocation8 + $0x378] sm:$0xff]
    %v3938 = vld [vmem:[#allocation8 + $0x380] sm:$0xff]
    %v3939 = vld [vmem:[#allocation8 + $0x388] sm:$0xff]
    %v3940 = vld [vmem:[#allocation8 + $0x390] sm:$0xff]
    %v3941 = vld [vmem:[#allocation8 + $0x398] sm:$0xff]
    %v3942 = vld [vmem:[#allocation8 + $0x3a0] sm:$0xff]
    %v3943 = vld [vmem:[#allocation8 + $0x3a8] sm:$0xff]
    %v3944 = vld [vmem:[#allocation8 + $0x3b0] sm:$0xff]
    %v3945 = vld [vmem:[#allocation8 + $0x3b8] sm:$0xff]
    %v3946 = vld [vmem:[#allocation8 + $0x3c0] sm:$0xff]
    %v3947 = vld [vmem:[#allocation8 + $0x3c8] sm:$0xff]
    %v3948 = vld [vmem:[#allocation8 + $0x3d0] sm:$0xff]
    %v3949 = vld [vmem:[#allocation8 + $0x3d8] sm:$0xff]
    %v3950 = vld [vmem:[#allocation8 + $0x3e0] sm:$0xff]
    %v3951 = vld [vmem:[#allocation8 + $0x3e8] sm:$0xff]
    %v3952 = vld [vmem:[#allocation8 + $0x3f0] sm:$0xff]
    %v3953 = vld [vmem:[#allocation8 + $0x3f8] sm:$0xff]
    %v3954 = vld [vmem:[%s4] sm:$0x1]
    %v3956 = vperm.slane %v3954, 0
    %3958 = vmatpush.msra.mxu0 %v3841
    %3959 = vmatpush.msra.mxu0 %v3840
    %3960 = vmatpush.msra.mxu0 %v3839
    %3961 = vmatpush.msra.mxu0 %v3838
    %3962 = vmatpush.msra.mxu0 %v3837
    %3963 = vmatpush.msra.mxu0 %v3836
    %3964 = vmatpush.msra.mxu0 %v3835
    %3965 = vmatpush.msra.mxu0 %v3834
    %3966 = vmatpush.msra.mxu0 %v3833
    %3967 = vmatpush.msra.mxu0 %v3832
    %3968 = vmatpush.msra.mxu0 %v3831
    %3969 = vmatpush.msra.mxu0 %v3830
    %3970 = vmatpush.msra.mxu0 %v3829
    %3971 = vmatpush.msra.mxu0 %v3828
    %3972 = vmatpush.msra.mxu0 %v3827
    %3973 = vmatpush.msra.mxu0 %v3826
    %3974 = vmatmul.f32.gmra.mxu0 %v3698
    %v3975 = vpop.f32.mrf.mxu0
    %v3976 = vadd.f32 %v3956, %v3975
    %3977 = vmatmul.f32.gmra.mxu0 %v3702
    %v3978 = vpop.f32.mrf.mxu0
    %v3979 = vadd.f32 %v3956, %v3978
    %3980 = vmatmul.f32.gmra.mxu0 %v3706
    %v3981 = vpop.f32.mrf.mxu0
    %v3982 = vadd.f32 %v3956, %v3981
    %3983 = vmatmul.f32.gmra.mxu0 %v3710
    %v3984 = vpop.f32.mrf.mxu0
    %v3985 = vadd.f32 %v3956, %v3984
    %3986 = vmatmul.f32.gmra.mxu0 %v3714
    %v3987 = vpop.f32.mrf.mxu0
    %v3988 = vadd.f32 %v3956, %v3987
    %3989 = vmatmul.f32.gmra.mxu0 %v3718
    %v3990 = vpop.f32.mrf.mxu0
    %v3991 = vadd.f32 %v3956, %v3990
    %3992 = vmatmul.f32.gmra.mxu0 %v3722
    %v3993 = vpop.f32.mrf.mxu0
    %v3994 = vadd.f32 %v3956, %v3993
    %3995 = vmatmul.f32.gmra.mxu0 %v3726
    %v3996 = vpop.f32.mrf.mxu0
    %v3997 = vadd.f32 %v3956, %v3996
    %3998 = vmatmul.f32.gmra.mxu0 %v3730
    %v3999 = vpop.f32.mrf.mxu0
    %v4000 = vadd.f32 %v3956, %v3999
    %4001 = vmatmul.f32.gmra.mxu0 %v3734
    %v4002 = vpop.f32.mrf.mxu0
    %v4003 = vadd.f32 %v3956, %v4002
    %4004 = vmatmul.f32.gmra.mxu0 %v3738
    %v4005 = vpop.f32.mrf.mxu0
    %v4006 = vadd.f32 %v3956, %v4005
    %4007 = vmatmul.f32.gmra.mxu0 %v3742
    %v4008 = vpop.f32.mrf.mxu0
    %v4009 = vadd.f32 %v3956, %v4008
    %4010 = vmatmul.f32.gmra.mxu0 %v3746
    %v4011 = vpop.f32.mrf.mxu0
    %v4012 = vadd.f32 %v3956, %v4011
    %4013 = vmatmul.f32.gmra.mxu0 %v3750
    %v4014 = vpop.f32.mrf.mxu0
    %v4015 = vadd.f32 %v3956, %v4014
    %4016 = vmatmul.f32.gmra.mxu0 %v3754
    %v4017 = vpop.f32.mrf.mxu0
    %v4018 = vadd.f32 %v3956, %v4017
    %4019 = vmatmul.f32.gmra.mxu0 %v3758
    %v4020 = vpop.f32.mrf.mxu0
    %v4021 = vadd.f32 %v3956, %v4020
    %4022 = vmatmul.f32.gmra.mxu0 %v3762
    %v4023 = vpop.f32.mrf.mxu0
    %v4024 = vadd.f32 %v3956, %v4023
    %4025 = vmatmul.f32.gmra.mxu0 %v3766
    %v4026 = vpop.f32.mrf.mxu0
    %v4027 = vadd.f32 %v3956, %v4026
    %4028 = vmatmul.f32.gmra.mxu0 %v3770
    %v4029 = vpop.f32.mrf.mxu0
    %v4030 = vadd.f32 %v3956, %v4029
    %4031 = vmatmul.f32.gmra.mxu0 %v3774
    %v4032 = vpop.f32.mrf.mxu0
    %v4033 = vadd.f32 %v3956, %v4032
    %4034 = vmatmul.f32.gmra.mxu0 %v3778
    %v4035 = vpop.f32.mrf.mxu0
    %v4036 = vadd.f32 %v3956, %v4035
    %4037 = vmatmul.f32.gmra.mxu0 %v3782
    %v4038 = vpop.f32.mrf.mxu0
    %v4039 = vadd.f32 %v3956, %v4038
    %4040 = vmatmul.f32.gmra.mxu0 %v3786
    %v4041 = vpop.f32.mrf.mxu0
    %v4042 = vadd.f32 %v3956, %v4041
    %4043 = vmatmul.f32.gmra.mxu0 %v3790
    %v4044 = vpop.f32.mrf.mxu0
    %v4045 = vadd.f32 %v3956, %v4044
    %4046 = vmatmul.f32.gmra.mxu0 %v3794
    %v4047 = vpop.f32.mrf.mxu0
    %v4048 = vadd.f32 %v3956, %v4047
    %4049 = vmatmul.f32.gmra.mxu0 %v3798
    %v4050 = vpop.f32.mrf.mxu0
    %v4051 = vadd.f32 %v3956, %v4050
    %4052 = vmatmul.f32.gmra.mxu0 %v3802
    %v4053 = vpop.f32.mrf.mxu0
    %v4054 = vadd.f32 %v3956, %v4053
    %4055 = vmatmul.f32.gmra.mxu0 %v3806
    %v4056 = vpop.f32.mrf.mxu0
    %v4057 = vadd.f32 %v3956, %v4056
    %4058 = vmatmul.f32.gmra.mxu0 %v3810
    %v4059 = vpop.f32.mrf.mxu0
    %v4060 = vadd.f32 %v3956, %v4059
    %4061 = vmatmul.f32.gmra.mxu0 %v3814
    %v4062 = vpop.f32.mrf.mxu0
    %v4063 = vadd.f32 %v3956, %v4062
    %4064 = vmatmul.f32.gmra.mxu0 %v3818
    %v4065 = vpop.f32.mrf.mxu0
    %v4066 = vadd.f32 %v3956, %v4065
    %4067 = vmatmul.f32.gmra.mxu0 %v3822
    %v4068 = vpop.f32.mrf.mxu0
    %v4069 = vadd.f32 %v3956, %v4068
    %4070 = vdwg.mxu0
    %4071 = vmatpush.msra.mxu0 %v3857
    %4072 = vmatpush.msra.mxu0 %v3856
    %4073 = vmatpush.msra.mxu0 %v3855
    %4074 = vmatpush.msra.mxu0 %v3854
    %4075 = vmatpush.msra.mxu0 %v3853
    %4076 = vmatpush.msra.mxu0 %v3852
    %4077 = vmatpush.msra.mxu0 %v3851
    %4078 = vmatpush.msra.mxu0 %v3850
    %4079 = vmatpush.msra.mxu0 %v3849
    %4080 = vmatpush.msra.mxu0 %v3848
    %4081 = vmatpush.msra.mxu0 %v3847
    %4082 = vmatpush.msra.mxu0 %v3846
    %4083 = vmatpush.msra.mxu0 %v3845
    %4084 = vmatpush.msra.mxu0 %v3844
    %4085 = vmatpush.msra.mxu0 %v3843
    %4086 = vmatpush.msra.mxu0 %v3842
    %4087 = vmatmul.f32.gmra.mxu0 %v3699
    %v4088 = vpop.f32.mrf.mxu0
    %v4089 = vadd.f32 %v3976, %v4088
    %4090 = vmatmul.f32.gmra.mxu0 %v3703
    %v4091 = vpop.f32.mrf.mxu0
    %v4092 = vadd.f32 %v3979, %v4091
    %4093 = vmatmul.f32.gmra.mxu0 %v3707
    %v4094 = vpop.f32.mrf.mxu0
    %v4095 = vadd.f32 %v3982, %v4094
    %4096 = vmatmul.f32.gmra.mxu0 %v3711
    %v4097 = vpop.f32.mrf.mxu0
    %v4098 = vadd.f32 %v3985, %v4097
    %4099 = vmatmul.f32.gmra.mxu0 %v3715
    %v4100 = vpop.f32.mrf.mxu0
    %v4101 = vadd.f32 %v3988, %v4100
    %4102 = vmatmul.f32.gmra.mxu0 %v3719
    %v4103 = vpop.f32.mrf.mxu0
    %v4104 = vadd.f32 %v3991, %v4103
    %4105 = vmatmul.f32.gmra.mxu0 %v3723
    %v4106 = vpop.f32.mrf.mxu0
    %v4107 = vadd.f32 %v3994, %v4106
    %4108 = vmatmul.f32.gmra.mxu0 %v3727
    %v4109 = vpop.f32.mrf.mxu0
    %v4110 = vadd.f32 %v3997, %v4109
    %4111 = vmatmul.f32.gmra.mxu0 %v3731
    %v4112 = vpop.f32.mrf.mxu0
    %v4113 = vadd.f32 %v4000, %v4112
    %4114 = vmatmul.f32.gmra.mxu0 %v3735
    %v4115 = vpop.f32.mrf.mxu0
    %v4116 = vadd.f32 %v4003, %v4115
    %4117 = vmatmul.f32.gmra.mxu0 %v3739
    %v4118 = vpop.f32.mrf.mxu0
    %v4119 = vadd.f32 %v4006, %v4118
    %4120 = vmatmul.f32.gmra.mxu0 %v3743
    %v4121 = vpop.f32.mrf.mxu0
    %v4122 = vadd.f32 %v4009, %v4121
    %4123 = vmatmul.f32.gmra.mxu0 %v3747
    %v4124 = vpop.f32.mrf.mxu0
    %v4125 = vadd.f32 %v4012, %v4124
    %4126 = vmatmul.f32.gmra.mxu0 %v3751
    %v4127 = vpop.f32.mrf.mxu0
    %v4128 = vadd.f32 %v4015, %v4127
    %4129 = vmatmul.f32.gmra.mxu0 %v3755
    %v4130 = vpop.f32.mrf.mxu0
    %v4131 = vadd.f32 %v4018, %v4130
    %4132 = vmatmul.f32.gmra.mxu0 %v3759
    %v4133 = vpop.f32.mrf.mxu0
    %v4134 = vadd.f32 %v4021, %v4133
    %4135 = vmatmul.f32.gmra.mxu0 %v3763
    %v4136 = vpop.f32.mrf.mxu0
    %v4137 = vadd.f32 %v4024, %v4136
    %4138 = vmatmul.f32.gmra.mxu0 %v3767
    %v4139 = vpop.f32.mrf.mxu0
    %v4140 = vadd.f32 %v4027, %v4139
    %4141 = vmatmul.f32.gmra.mxu0 %v3771
    %v4142 = vpop.f32.mrf.mxu0
    %v4143 = vadd.f32 %v4030, %v4142
    %4144 = vmatmul.f32.gmra.mxu0 %v3775
    %v4145 = vpop.f32.mrf.mxu0
    %v4146 = vadd.f32 %v4033, %v4145
    %4147 = vmatmul.f32.gmra.mxu0 %v3779
    %v4148 = vpop.f32.mrf.mxu0
    %v4149 = vadd.f32 %v4036, %v4148
    %4150 = vmatmul.f32.gmra.mxu0 %v3783
    %v4151 = vpop.f32.mrf.mxu0
    %v4152 = vadd.f32 %v4039, %v4151
    %4153 = vmatmul.f32.gmra.mxu0 %v3787
    %v4154 = vpop.f32.mrf.mxu0
    %v4155 = vadd.f32 %v4042, %v4154
    %4156 = vmatmul.f32.gmra.mxu0 %v3791
    %v4157 = vpop.f32.mrf.mxu0
    %v4158 = vadd.f32 %v4045, %v4157
    %4159 = vmatmul.f32.gmra.mxu0 %v3795
    %v4160 = vpop.f32.mrf.mxu0
    %v4161 = vadd.f32 %v4048, %v4160
    %4162 = vmatmul.f32.gmra.mxu0 %v3799
    %v4163 = vpop.f32.mrf.mxu0
    %v4164 = vadd.f32 %v4051, %v4163
    %4165 = vmatmul.f32.gmra.mxu0 %v3803
    %v4166 = vpop.f32.mrf.mxu0
    %v4167 = vadd.f32 %v4054, %v4166
    %4168 = vmatmul.f32.gmra.mxu0 %v3807
    %v4169 = vpop.f32.mrf.mxu0
    %v4170 = vadd.f32 %v4057, %v4169
    %4171 = vmatmul.f32.gmra.mxu0 %v3811
    %v4172 = vpop.f32.mrf.mxu0
    %v4173 = vadd.f32 %v4060, %v4172
    %4174 = vmatmul.f32.gmra.mxu0 %v3815
    %v4175 = vpop.f32.mrf.mxu0
    %v4176 = vadd.f32 %v4063, %v4175
    %4177 = vmatmul.f32.gmra.mxu0 %v3819
    %v4178 = vpop.f32.mrf.mxu0
    %v4179 = vadd.f32 %v4066, %v4178
    %4180 = vmatmul.f32.gmra.mxu0 %v3823
    %v4181 = vpop.f32.mrf.mxu0
    %v4182 = vadd.f32 %v4069, %v4181
    %4183 = vdwg.mxu0
    %4184 = vmatpush.msra.mxu0 %v3873
    %4185 = vmatpush.msra.mxu0 %v3872
    %4186 = vmatpush.msra.mxu0 %v3871
    %4187 = vmatpush.msra.mxu0 %v3870
    %4188 = vmatpush.msra.mxu0 %v3869
    %4189 = vmatpush.msra.mxu0 %v3868
    %4190 = vmatpush.msra.mxu0 %v3867
    %4191 = vmatpush.msra.mxu0 %v3866
    %4192 = vmatpush.msra.mxu0 %v3865
    %4193 = vmatpush.msra.mxu0 %v3864
    %4194 = vmatpush.msra.mxu0 %v3863
    %4195 = vmatpush.msra.mxu0 %v3862
    %4196 = vmatpush.msra.mxu0 %v3861
    %4197 = vmatpush.msra.mxu0 %v3860
    %4198 = vmatpush.msra.mxu0 %v3859
    %4199 = vmatpush.msra.mxu0 %v3858
    %4200 = vmatmul.f32.gmra.mxu0 %v3700
    %v4201 = vpop.f32.mrf.mxu0
    %v4202 = vadd.f32 %v4089, %v4201
    %4203 = vmatmul.f32.gmra.mxu0 %v3704
    %v4204 = vpop.f32.mrf.mxu0
    %v4205 = vadd.f32 %v4092, %v4204
    %4206 = vmatmul.f32.gmra.mxu0 %v3708
    %v4207 = vpop.f32.mrf.mxu0
    %v4208 = vadd.f32 %v4095, %v4207
    %4209 = vmatmul.f32.gmra.mxu0 %v3712
    %v4210 = vpop.f32.mrf.mxu0
    %v4211 = vadd.f32 %v4098, %v4210
    %4212 = vmatmul.f32.gmra.mxu0 %v3716
    %v4213 = vpop.f32.mrf.mxu0
    %v4214 = vadd.f32 %v4101, %v4213
    %4215 = vmatmul.f32.gmra.mxu0 %v3720
    %v4216 = vpop.f32.mrf.mxu0
    %v4217 = vadd.f32 %v4104, %v4216
    %4218 = vmatmul.f32.gmra.mxu0 %v3724
    %v4219 = vpop.f32.mrf.mxu0
    %v4220 = vadd.f32 %v4107, %v4219
    %4221 = vmatmul.f32.gmra.mxu0 %v3728
    %v4222 = vpop.f32.mrf.mxu0
    %v4223 = vadd.f32 %v4110, %v4222
    %4224 = vmatmul.f32.gmra.mxu0 %v3732
    %v4225 = vpop.f32.mrf.mxu0
    %v4226 = vadd.f32 %v4113, %v4225
    %4227 = vmatmul.f32.gmra.mxu0 %v3736
    %v4228 = vpop.f32.mrf.mxu0
    %v4229 = vadd.f32 %v4116, %v4228
    %4230 = vmatmul.f32.gmra.mxu0 %v3740
    %v4231 = vpop.f32.mrf.mxu0
    %v4232 = vadd.f32 %v4119, %v4231
    %4233 = vmatmul.f32.gmra.mxu0 %v3744
    %v4234 = vpop.f32.mrf.mxu0
    %v4235 = vadd.f32 %v4122, %v4234
    %4236 = vmatmul.f32.gmra.mxu0 %v3748
    %v4237 = vpop.f32.mrf.mxu0
    %v4238 = vadd.f32 %v4125, %v4237
    %4239 = vmatmul.f32.gmra.mxu0 %v3752
    %v4240 = vpop.f32.mrf.mxu0
    %v4241 = vadd.f32 %v4128, %v4240
    %4242 = vmatmul.f32.gmra.mxu0 %v3756
    %v4243 = vpop.f32.mrf.mxu0
    %v4244 = vadd.f32 %v4131, %v4243
    %4245 = vmatmul.f32.gmra.mxu0 %v3760
    %v4246 = vpop.f32.mrf.mxu0
    %v4247 = vadd.f32 %v4134, %v4246
    %4248 = vmatmul.f32.gmra.mxu0 %v3764
    %v4249 = vpop.f32.mrf.mxu0
    %v4250 = vadd.f32 %v4137, %v4249
    %4251 = vmatmul.f32.gmra.mxu0 %v3768
    %v4252 = vpop.f32.mrf.mxu0
    %v4253 = vadd.f32 %v4140, %v4252
    %4254 = vmatmul.f32.gmra.mxu0 %v3772
    %v4255 = vpop.f32.mrf.mxu0
    %v4256 = vadd.f32 %v4143, %v4255
    %4257 = vmatmul.f32.gmra.mxu0 %v3776
    %v4258 = vpop.f32.mrf.mxu0
    %v4259 = vadd.f32 %v4146, %v4258
    %4260 = vmatmul.f32.gmra.mxu0 %v3780
    %v4261 = vpop.f32.mrf.mxu0
    %v4262 = vadd.f32 %v4149, %v4261
    %4263 = vmatmul.f32.gmra.mxu0 %v3784
    %v4264 = vpop.f32.mrf.mxu0
    %v4265 = vadd.f32 %v4152, %v4264
    %4266 = vmatmul.f32.gmra.mxu0 %v3788
    %v4267 = vpop.f32.mrf.mxu0
    %v4268 = vadd.f32 %v4155, %v4267
    %4269 = vmatmul.f32.gmra.mxu0 %v3792
    %v4270 = vpop.f32.mrf.mxu0
    %v4271 = vadd.f32 %v4158, %v4270
    %4272 = vmatmul.f32.gmra.mxu0 %v3796
    %v4273 = vpop.f32.mrf.mxu0
    %v4274 = vadd.f32 %v4161, %v4273
    %4275 = vmatmul.f32.gmra.mxu0 %v3800
    %v4276 = vpop.f32.mrf.mxu0
    %v4277 = vadd.f32 %v4164, %v4276
    %4278 = vmatmul.f32.gmra.mxu0 %v3804
    %v4279 = vpop.f32.mrf.mxu0
    %v4280 = vadd.f32 %v4167, %v4279
    %4281 = vmatmul.f32.gmra.mxu0 %v3808
    %v4282 = vpop.f32.mrf.mxu0
    %v4283 = vadd.f32 %v4170, %v4282
    %4284 = vmatmul.f32.gmra.mxu0 %v3812
    %v4285 = vpop.f32.mrf.mxu0
    %v4286 = vadd.f32 %v4173, %v4285
    %4287 = vmatmul.f32.gmra.mxu0 %v3816
    %v4288 = vpop.f32.mrf.mxu0
    %v4289 = vadd.f32 %v4176, %v4288
    %4290 = vmatmul.f32.gmra.mxu0 %v3820
    %v4291 = vpop.f32.mrf.mxu0
    %v4292 = vadd.f32 %v4179, %v4291
    %4293 = vmatmul.f32.gmra.mxu0 %v3824
    %v4294 = vpop.f32.mrf.mxu0
    %v4295 = vadd.f32 %v4182, %v4294
    %4296 = vdwg.mxu0
    %4297 = vmatpush.msra.mxu0 %v3889
    %4298 = vmatpush.msra.mxu0 %v3888
    %4299 = vmatpush.msra.mxu0 %v3887
    %4300 = vmatpush.msra.mxu0 %v3886
    %4301 = vmatpush.msra.mxu0 %v3885
    %4302 = vmatpush.msra.mxu0 %v3884
    %4303 = vmatpush.msra.mxu0 %v3883
    %4304 = vmatpush.msra.mxu0 %v3882
    %4305 = vmatpush.msra.mxu0 %v3881
    %4306 = vmatpush.msra.mxu0 %v3880
    %4307 = vmatpush.msra.mxu0 %v3879
    %4308 = vmatpush.msra.mxu0 %v3878
    %4309 = vmatpush.msra.mxu0 %v3877
    %4310 = vmatpush.msra.mxu0 %v3876
    %4311 = vmatpush.msra.mxu0 %v3875
    %4312 = vmatpush.msra.mxu0 %v3874
    %4313 = vmatmul.f32.gmra.mxu0 %v3701
    %v4314 = vpop.f32.mrf.mxu0
    %v4315 = vadd.f32 %v4202, %v4314
    %4316 = vmatmul.f32.gmra.mxu0 %v3705
    %v4317 = vpop.f32.mrf.mxu0
    %v4318 = vadd.f32 %v4205, %v4317
    %4319 = vmatmul.f32.gmra.mxu0 %v3709
    %v4320 = vpop.f32.mrf.mxu0
    %v4321 = vadd.f32 %v4208, %v4320
    %4322 = vmatmul.f32.gmra.mxu0 %v3713
    %v4323 = vpop.f32.mrf.mxu0
    %v4324 = vadd.f32 %v4211, %v4323
    %4325 = vmatmul.f32.gmra.mxu0 %v3717
    %v4326 = vpop.f32.mrf.mxu0
    %v4327 = vadd.f32 %v4214, %v4326
    %4328 = vmatmul.f32.gmra.mxu0 %v3721
    %v4329 = vpop.f32.mrf.mxu0
    %v4330 = vadd.f32 %v4217, %v4329
    %4331 = vmatmul.f32.gmra.mxu0 %v3725
    %v4332 = vpop.f32.mrf.mxu0
    %v4333 = vadd.f32 %v4220, %v4332
    %4334 = vmatmul.f32.gmra.mxu0 %v3729
    %v4335 = vpop.f32.mrf.mxu0
    %v4336 = vadd.f32 %v4223, %v4335
    %4337 = vmatmul.f32.gmra.mxu0 %v3733
    %v4338 = vpop.f32.mrf.mxu0
    %v4339 = vadd.f32 %v4226, %v4338
    %4340 = vmatmul.f32.gmra.mxu0 %v3737
    %v4341 = vpop.f32.mrf.mxu0
    %v4342 = vadd.f32 %v4229, %v4341
    %4343 = vmatmul.f32.gmra.mxu0 %v3741
    %v4344 = vpop.f32.mrf.mxu0
    %v4345 = vadd.f32 %v4232, %v4344
    %4346 = vmatmul.f32.gmra.mxu0 %v3745
    %v4347 = vpop.f32.mrf.mxu0
    %v4348 = vadd.f32 %v4235, %v4347
    %4349 = vmatmul.f32.gmra.mxu0 %v3749
    %v4350 = vpop.f32.mrf.mxu0
    %v4351 = vadd.f32 %v4238, %v4350
    %4352 = vmatmul.f32.gmra.mxu0 %v3753
    %v4353 = vpop.f32.mrf.mxu0
    %v4354 = vadd.f32 %v4241, %v4353
    %4355 = vmatmul.f32.gmra.mxu0 %v3757
    %v4356 = vpop.f32.mrf.mxu0
    %v4357 = vadd.f32 %v4244, %v4356
    %4358 = vmatmul.f32.gmra.mxu0 %v3761
    %v4359 = vpop.f32.mrf.mxu0
    %v4360 = vadd.f32 %v4247, %v4359
    %4361 = vmatmul.f32.gmra.mxu0 %v3765
    %v4362 = vpop.f32.mrf.mxu0
    %v4363 = vadd.f32 %v4250, %v4362
    %4364 = vmatmul.f32.gmra.mxu0 %v3769
    %v4365 = vpop.f32.mrf.mxu0
    %v4366 = vadd.f32 %v4253, %v4365
    %4367 = vmatmul.f32.gmra.mxu0 %v3773
    %v4368 = vpop.f32.mrf.mxu0
    %v4369 = vadd.f32 %v4256, %v4368
    %4370 = vmatmul.f32.gmra.mxu0 %v3777
    %v4371 = vpop.f32.mrf.mxu0
    %v4372 = vadd.f32 %v4259, %v4371
    %4373 = vmatmul.f32.gmra.mxu0 %v3781
    %v4374 = vpop.f32.mrf.mxu0
    %v4375 = vadd.f32 %v4262, %v4374
    %4376 = vmatmul.f32.gmra.mxu0 %v3785
    %v4377 = vpop.f32.mrf.mxu0
    %v4378 = vadd.f32 %v4265, %v4377
    %4379 = vmatmul.f32.gmra.mxu0 %v3789
    %v4380 = vpop.f32.mrf.mxu0
    %v4381 = vadd.f32 %v4268, %v4380
    %4382 = vmatmul.f32.gmra.mxu0 %v3793
    %v4383 = vpop.f32.mrf.mxu0
    %v4384 = vadd.f32 %v4271, %v4383
    %4385 = vmatmul.f32.gmra.mxu0 %v3797
    %v4386 = vpop.f32.mrf.mxu0
    %v4387 = vadd.f32 %v4274, %v4386
    %4388 = vmatmul.f32.gmra.mxu0 %v3801
    %v4389 = vpop.f32.mrf.mxu0
    %v4390 = vadd.f32 %v4277, %v4389
    %4391 = vmatmul.f32.gmra.mxu0 %v3805
    %v4392 = vpop.f32.mrf.mxu0
    %v4393 = vadd.f32 %v4280, %v4392
    %4394 = vmatmul.f32.gmra.mxu0 %v3809
    %v4395 = vpop.f32.mrf.mxu0
    %v4396 = vadd.f32 %v4283, %v4395
    %4397 = vmatmul.f32.gmra.mxu0 %v3813
    %v4398 = vpop.f32.mrf.mxu0
    %v4399 = vadd.f32 %v4286, %v4398
    %4400 = vmatmul.f32.gmra.mxu0 %v3817
    %v4401 = vpop.f32.mrf.mxu0
    %v4402 = vadd.f32 %v4289, %v4401
    %4403 = vmatmul.f32.gmra.mxu0 %v3821
    %v4404 = vpop.f32.mrf.mxu0
    %v4405 = vadd.f32 %v4292, %v4404
    %4406 = vmatmul.f32.gmra.mxu0 %v3825
    %v4407 = vpop.f32.mrf.mxu0
    %v4408 = vadd.f32 %v4295, %v4407
    %4409 = vdwg.mxu0
    %4410 = vmatpush.msra.mxu0 %v3905
    %4411 = vmatpush.msra.mxu0 %v3904
    %4412 = vmatpush.msra.mxu0 %v3903
    %4413 = vmatpush.msra.mxu0 %v3902
    %4414 = vmatpush.msra.mxu0 %v3901
    %4415 = vmatpush.msra.mxu0 %v3900
    %4416 = vmatpush.msra.mxu0 %v3899
    %4417 = vmatpush.msra.mxu0 %v3898
    %4418 = vmatpush.msra.mxu0 %v3897
    %4419 = vmatpush.msra.mxu0 %v3896
    %4420 = vmatpush.msra.mxu0 %v3895
    %4421 = vmatpush.msra.mxu0 %v3894
    %4422 = vmatpush.msra.mxu0 %v3893
    %4423 = vmatpush.msra.mxu0 %v3892
    %4424 = vmatpush.msra.mxu0 %v3891
    %4425 = vmatpush.msra.mxu0 %v3890
    %4426 = vmatmul.f32.gmra.mxu0 %v2577
    %v4427 = vpop.f32.mrf.mxu0
    %v4428 = vadd.f32 %v4315, %v4427
    %4429 = vmatmul.f32.gmra.mxu0 %v2581
    %v4430 = vpop.f32.mrf.mxu0
    %v4431 = vadd.f32 %v4318, %v4430
    %4432 = vmatmul.f32.gmra.mxu0 %v2585
    %v4433 = vpop.f32.mrf.mxu0
    %v4434 = vadd.f32 %v4321, %v4433
    %4435 = vmatmul.f32.gmra.mxu0 %v2589
    %v4436 = vpop.f32.mrf.mxu0
    %v4437 = vadd.f32 %v4324, %v4436
    %4438 = vmatmul.f32.gmra.mxu0 %v2593
    %v4439 = vpop.f32.mrf.mxu0
    %v4440 = vadd.f32 %v4327, %v4439
    %4441 = vmatmul.f32.gmra.mxu0 %v2597
    %v4442 = vpop.f32.mrf.mxu0
    %v4443 = vadd.f32 %v4330, %v4442
    %4444 = vmatmul.f32.gmra.mxu0 %v2601
    %v4445 = vpop.f32.mrf.mxu0
    %v4446 = vadd.f32 %v4333, %v4445
    %4447 = vmatmul.f32.gmra.mxu0 %v2605
    %v4448 = vpop.f32.mrf.mxu0
    %v4449 = vadd.f32 %v4336, %v4448
    %4450 = vmatmul.f32.gmra.mxu0 %v2609
    %v4451 = vpop.f32.mrf.mxu0
    %v4452 = vadd.f32 %v4339, %v4451
    %4453 = vmatmul.f32.gmra.mxu0 %v2613
    %v4454 = vpop.f32.mrf.mxu0
    %v4455 = vadd.f32 %v4342, %v4454
    %4456 = vmatmul.f32.gmra.mxu0 %v2617
    %v4457 = vpop.f32.mrf.mxu0
    %v4458 = vadd.f32 %v4345, %v4457
    %4459 = vmatmul.f32.gmra.mxu0 %v2621
    %v4460 = vpop.f32.mrf.mxu0
    %v4461 = vadd.f32 %v4348, %v4460
    %4462 = vmatmul.f32.gmra.mxu0 %v2625
    %v4463 = vpop.f32.mrf.mxu0
    %v4464 = vadd.f32 %v4351, %v4463
    %4465 = vmatmul.f32.gmra.mxu0 %v2629
    %v4466 = vpop.f32.mrf.mxu0
    %v4467 = vadd.f32 %v4354, %v4466
    %4468 = vmatmul.f32.gmra.mxu0 %v2633
    %v4469 = vpop.f32.mrf.mxu0
    %v4470 = vadd.f32 %v4357, %v4469
    %4471 = vmatmul.f32.gmra.mxu0 %v2637
    %v4472 = vpop.f32.mrf.mxu0
    %v4473 = vadd.f32 %v4360, %v4472
    %4474 = vmatmul.f32.gmra.mxu0 %v2641
    %v4475 = vpop.f32.mrf.mxu0
    %v4476 = vadd.f32 %v4363, %v4475
    %4477 = vmatmul.f32.gmra.mxu0 %v2645
    %v4478 = vpop.f32.mrf.mxu0
    %v4479 = vadd.f32 %v4366, %v4478
    %4480 = vmatmul.f32.gmra.mxu0 %v2649
    %v4481 = vpop.f32.mrf.mxu0
    %v4482 = vadd.f32 %v4369, %v4481
    %4483 = vmatmul.f32.gmra.mxu0 %v2653
    %v4484 = vpop.f32.mrf.mxu0
    %v4485 = vadd.f32 %v4372, %v4484
    %4486 = vmatmul.f32.gmra.mxu0 %v2657
    %v4487 = vpop.f32.mrf.mxu0
    %v4488 = vadd.f32 %v4375, %v4487
    %4489 = vmatmul.f32.gmra.mxu0 %v2661
    %v4490 = vpop.f32.mrf.mxu0
    %v4491 = vadd.f32 %v4378, %v4490
    %4492 = vmatmul.f32.gmra.mxu0 %v2665
    %v4493 = vpop.f32.mrf.mxu0
    %v4494 = vadd.f32 %v4381, %v4493
    %4495 = vmatmul.f32.gmra.mxu0 %v2669
    %v4496 = vpop.f32.mrf.mxu0
    %v4497 = vadd.f32 %v4384, %v4496
    %4498 = vmatmul.f32.gmra.mxu0 %v2673
    %v4499 = vpop.f32.mrf.mxu0
    %v4500 = vadd.f32 %v4387, %v4499
    %4501 = vmatmul.f32.gmra.mxu0 %v2677
    %v4502 = vpop.f32.mrf.mxu0
    %v4503 = vadd.f32 %v4390, %v4502
    %4504 = vmatmul.f32.gmra.mxu0 %v2681
    %v4505 = vpop.f32.mrf.mxu0
    %v4506 = vadd.f32 %v4393, %v4505
    %4507 = vmatmul.f32.gmra.mxu0 %v2685
    %v4508 = vpop.f32.mrf.mxu0
    %v4509 = vadd.f32 %v4396, %v4508
    %4510 = vmatmul.f32.gmra.mxu0 %v2689
    %v4511 = vpop.f32.mrf.mxu0
    %v4512 = vadd.f32 %v4399, %v4511
    %4513 = vmatmul.f32.gmra.mxu0 %v2693
    %v4514 = vpop.f32.mrf.mxu0
    %v4515 = vadd.f32 %v4402, %v4514
    %4516 = vmatmul.f32.gmra.mxu0 %v2697
    %v4517 = vpop.f32.mrf.mxu0
    %v4518 = vadd.f32 %v4405, %v4517
    %4519 = vmatmul.f32.gmra.mxu0 %v2701
    %v4520 = vpop.f32.mrf.mxu0
    %v4521 = vadd.f32 %v4408, %v4520
    %4522 = vdwg.mxu0
    %4523 = vmatpush.msra.mxu0 %v3921
    %4524 = vmatpush.msra.mxu0 %v3920
    %4525 = vmatpush.msra.mxu0 %v3919
    %4526 = vmatpush.msra.mxu0 %v3918
    %4527 = vmatpush.msra.mxu0 %v3917
    %4528 = vmatpush.msra.mxu0 %v3916
    %4529 = vmatpush.msra.mxu0 %v3915
    %4530 = vmatpush.msra.mxu0 %v3914
    %4531 = vmatpush.msra.mxu0 %v3913
    %4532 = vmatpush.msra.mxu0 %v3912
    %4533 = vmatpush.msra.mxu0 %v3911
    %4534 = vmatpush.msra.mxu0 %v3910
    %4535 = vmatpush.msra.mxu0 %v3909
    %4536 = vmatpush.msra.mxu0 %v3908
    %4537 = vmatpush.msra.mxu0 %v3907
    %4538 = vmatpush.msra.mxu0 %v3906
    %4539 = vmatmul.f32.gmra.mxu0 %v2578
    %v4540 = vpop.f32.mrf.mxu0
    %v4541 = vadd.f32 %v4428, %v4540
    %4542 = vmatmul.f32.gmra.mxu0 %v2582
    %v4543 = vpop.f32.mrf.mxu0
    %v4544 = vadd.f32 %v4431, %v4543
    %4545 = vmatmul.f32.gmra.mxu0 %v2586
    %v4546 = vpop.f32.mrf.mxu0
    %v4547 = vadd.f32 %v4434, %v4546
    %4548 = vmatmul.f32.gmra.mxu0 %v2590
    %v4549 = vpop.f32.mrf.mxu0
    %v4550 = vadd.f32 %v4437, %v4549
    %4551 = vmatmul.f32.gmra.mxu0 %v2594
    %v4552 = vpop.f32.mrf.mxu0
    %v4553 = vadd.f32 %v4440, %v4552
    %4554 = vmatmul.f32.gmra.mxu0 %v2598
    %v4555 = vpop.f32.mrf.mxu0
    %v4556 = vadd.f32 %v4443, %v4555
    %4557 = vmatmul.f32.gmra.mxu0 %v2602
    %v4558 = vpop.f32.mrf.mxu0
    %v4559 = vadd.f32 %v4446, %v4558
    %4560 = vmatmul.f32.gmra.mxu0 %v2606
    %v4561 = vpop.f32.mrf.mxu0
    %v4562 = vadd.f32 %v4449, %v4561
    %4563 = vmatmul.f32.gmra.mxu0 %v2610
    %v4564 = vpop.f32.mrf.mxu0
    %v4565 = vadd.f32 %v4452, %v4564
    %4566 = vmatmul.f32.gmra.mxu0 %v2614
    %v4567 = vpop.f32.mrf.mxu0
    %v4568 = vadd.f32 %v4455, %v4567
    %4569 = vmatmul.f32.gmra.mxu0 %v2618
    %v4570 = vpop.f32.mrf.mxu0
    %v4571 = vadd.f32 %v4458, %v4570
    %4572 = vmatmul.f32.gmra.mxu0 %v2622
    %v4573 = vpop.f32.mrf.mxu0
    %v4574 = vadd.f32 %v4461, %v4573
    %4575 = vmatmul.f32.gmra.mxu0 %v2626
    %v4576 = vpop.f32.mrf.mxu0
    %v4577 = vadd.f32 %v4464, %v4576
    %4578 = vmatmul.f32.gmra.mxu0 %v2630
    %v4579 = vpop.f32.mrf.mxu0
    %v4580 = vadd.f32 %v4467, %v4579
    %4581 = vmatmul.f32.gmra.mxu0 %v2634
    %v4582 = vpop.f32.mrf.mxu0
    %v4583 = vadd.f32 %v4470, %v4582
    %4584 = vmatmul.f32.gmra.mxu0 %v2638
    %v4585 = vpop.f32.mrf.mxu0
    %v4586 = vadd.f32 %v4473, %v4585
    %4587 = vmatmul.f32.gmra.mxu0 %v2642
    %v4588 = vpop.f32.mrf.mxu0
    %v4589 = vadd.f32 %v4476, %v4588
    %4590 = vmatmul.f32.gmra.mxu0 %v2646
    %v4591 = vpop.f32.mrf.mxu0
    %v4592 = vadd.f32 %v4479, %v4591
    %4593 = vmatmul.f32.gmra.mxu0 %v2650
    %v4594 = vpop.f32.mrf.mxu0
    %v4595 = vadd.f32 %v4482, %v4594
    %4596 = vmatmul.f32.gmra.mxu0 %v2654
    %v4597 = vpop.f32.mrf.mxu0
    %v4598 = vadd.f32 %v4485, %v4597
    %4599 = vmatmul.f32.gmra.mxu0 %v2658
    %v4600 = vpop.f32.mrf.mxu0
    %v4601 = vadd.f32 %v4488, %v4600
    %4602 = vmatmul.f32.gmra.mxu0 %v2662
    %v4603 = vpop.f32.mrf.mxu0
    %v4604 = vadd.f32 %v4491, %v4603
    %4605 = vmatmul.f32.gmra.mxu0 %v2666
    %v4606 = vpop.f32.mrf.mxu0
    %v4607 = vadd.f32 %v4494, %v4606
    %4608 = vmatmul.f32.gmra.mxu0 %v2670
    %v4609 = vpop.f32.mrf.mxu0
    %v4610 = vadd.f32 %v4497, %v4609
    %4611 = vmatmul.f32.gmra.mxu0 %v2674
    %v4612 = vpop.f32.mrf.mxu0
    %v4613 = vadd.f32 %v4500, %v4612
    %4614 = vmatmul.f32.gmra.mxu0 %v2678
    %v4615 = vpop.f32.mrf.mxu0
    %v4616 = vadd.f32 %v4503, %v4615
    %4617 = vmatmul.f32.gmra.mxu0 %v2682
    %v4618 = vpop.f32.mrf.mxu0
    %v4619 = vadd.f32 %v4506, %v4618
    %4620 = vmatmul.f32.gmra.mxu0 %v2686
    %v4621 = vpop.f32.mrf.mxu0
    %v4622 = vadd.f32 %v4509, %v4621
    %4623 = vmatmul.f32.gmra.mxu0 %v2690
    %v4624 = vpop.f32.mrf.mxu0
    %v4625 = vadd.f32 %v4512, %v4624
    %4626 = vmatmul.f32.gmra.mxu0 %v2694
    %v4627 = vpop.f32.mrf.mxu0
    %v4628 = vadd.f32 %v4515, %v4627
    %4629 = vmatmul.f32.gmra.mxu0 %v2698
    %v4630 = vpop.f32.mrf.mxu0
    %v4631 = vadd.f32 %v4518, %v4630
    %4632 = vmatmul.f32.gmra.mxu0 %v2702
    %v4633 = vpop.f32.mrf.mxu0
    %v4634 = vadd.f32 %v4521, %v4633
    %4635 = vdwg.mxu0
    %4636 = vmatpush.msra.mxu0 %v3937
    %4637 = vmatpush.msra.mxu0 %v3936
    %4638 = vmatpush.msra.mxu0 %v3935
    %4639 = vmatpush.msra.mxu0 %v3934
    %4640 = vmatpush.msra.mxu0 %v3933
    %4641 = vmatpush.msra.mxu0 %v3932
    %4642 = vmatpush.msra.mxu0 %v3931
    %4643 = vmatpush.msra.mxu0 %v3930
    %4644 = vmatpush.msra.mxu0 %v3929
    %4645 = vmatpush.msra.mxu0 %v3928
    %4646 = vmatpush.msra.mxu0 %v3927
    %4647 = vmatpush.msra.mxu0 %v3926
    %4648 = vmatpush.msra.mxu0 %v3925
    %4649 = vmatpush.msra.mxu0 %v3924
    %4650 = vmatpush.msra.mxu0 %v3923
    %4651 = vmatpush.msra.mxu0 %v3922
    %4652 = vmatmul.f32.gmra.mxu0 %v2579
    %v4653 = vpop.f32.mrf.mxu0
    %v4654 = vadd.f32 %v4541, %v4653
    %4655 = vmatmul.f32.gmra.mxu0 %v2583
    %v4656 = vpop.f32.mrf.mxu0
    %v4657 = vadd.f32 %v4544, %v4656
    %4658 = vmatmul.f32.gmra.mxu0 %v2587
    %v4659 = vpop.f32.mrf.mxu0
    %v4660 = vadd.f32 %v4547, %v4659
    %4661 = vmatmul.f32.gmra.mxu0 %v2591
    %v4662 = vpop.f32.mrf.mxu0
    %v4663 = vadd.f32 %v4550, %v4662
    %4664 = vmatmul.f32.gmra.mxu0 %v2595
    %v4665 = vpop.f32.mrf.mxu0
    %v4666 = vadd.f32 %v4553, %v4665
    %4667 = vmatmul.f32.gmra.mxu0 %v2599
    %v4668 = vpop.f32.mrf.mxu0
    %v4669 = vadd.f32 %v4556, %v4668
    %4670 = vmatmul.f32.gmra.mxu0 %v2603
    %v4671 = vpop.f32.mrf.mxu0
    %v4672 = vadd.f32 %v4559, %v4671
    %4673 = vmatmul.f32.gmra.mxu0 %v2607
    %v4674 = vpop.f32.mrf.mxu0
    %v4675 = vadd.f32 %v4562, %v4674
    %4676 = vmatmul.f32.gmra.mxu0 %v2611
    %v4677 = vpop.f32.mrf.mxu0
    %v4678 = vadd.f32 %v4565, %v4677
    %4679 = vmatmul.f32.gmra.mxu0 %v2615
    %v4680 = vpop.f32.mrf.mxu0
    %v4681 = vadd.f32 %v4568, %v4680
    %4682 = vmatmul.f32.gmra.mxu0 %v2619
    %v4683 = vpop.f32.mrf.mxu0
    %v4684 = vadd.f32 %v4571, %v4683
    %4685 = vmatmul.f32.gmra.mxu0 %v2623
    %v4686 = vpop.f32.mrf.mxu0
    %v4687 = vadd.f32 %v4574, %v4686
    %4688 = vmatmul.f32.gmra.mxu0 %v2627
    %v4689 = vpop.f32.mrf.mxu0
    %v4690 = vadd.f32 %v4577, %v4689
    %4691 = vmatmul.f32.gmra.mxu0 %v2631
    %v4692 = vpop.f32.mrf.mxu0
    %v4693 = vadd.f32 %v4580, %v4692
    %4694 = vmatmul.f32.gmra.mxu0 %v2635
    %v4695 = vpop.f32.mrf.mxu0
    %v4696 = vadd.f32 %v4583, %v4695
    %4697 = vmatmul.f32.gmra.mxu0 %v2639
    %v4698 = vpop.f32.mrf.mxu0
    %v4699 = vadd.f32 %v4586, %v4698
    %4700 = vmatmul.f32.gmra.mxu0 %v2643
    %v4701 = vpop.f32.mrf.mxu0
    %v4702 = vadd.f32 %v4589, %v4701
    %4703 = vmatmul.f32.gmra.mxu0 %v2647
    %v4704 = vpop.f32.mrf.mxu0
    %v4705 = vadd.f32 %v4592, %v4704
    %4706 = vmatmul.f32.gmra.mxu0 %v2651
    %v4707 = vpop.f32.mrf.mxu0
    %v4708 = vadd.f32 %v4595, %v4707
    %4709 = vmatmul.f32.gmra.mxu0 %v2655
    %v4710 = vpop.f32.mrf.mxu0
    %v4711 = vadd.f32 %v4598, %v4710
    %4712 = vmatmul.f32.gmra.mxu0 %v2659
    %v4713 = vpop.f32.mrf.mxu0
    %v4714 = vadd.f32 %v4601, %v4713
    %4715 = vmatmul.f32.gmra.mxu0 %v2663
    %v4716 = vpop.f32.mrf.mxu0
    %v4717 = vadd.f32 %v4604, %v4716
    %4718 = vmatmul.f32.gmra.mxu0 %v2667
    %v4719 = vpop.f32.mrf.mxu0
    %v4720 = vadd.f32 %v4607, %v4719
    %4721 = vmatmul.f32.gmra.mxu0 %v2671
    %v4722 = vpop.f32.mrf.mxu0
    %v4723 = vadd.f32 %v4610, %v4722
    %4724 = vmatmul.f32.gmra.mxu0 %v2675
    %v4725 = vpop.f32.mrf.mxu0
    %v4726 = vadd.f32 %v4613, %v4725
    %4727 = vmatmul.f32.gmra.mxu0 %v2679
    %v4728 = vpop.f32.mrf.mxu0
    %v4729 = vadd.f32 %v4616, %v4728
    %4730 = vmatmul.f32.gmra.mxu0 %v2683
    %v4731 = vpop.f32.mrf.mxu0
    %v4732 = vadd.f32 %v4619, %v4731
    %4733 = vmatmul.f32.gmra.mxu0 %v2687
    %v4734 = vpop.f32.mrf.mxu0
    %v4735 = vadd.f32 %v4622, %v4734
    %4736 = vmatmul.f32.gmra.mxu0 %v2691
    %v4737 = vpop.f32.mrf.mxu0
    %v4738 = vadd.f32 %v4625, %v4737
    %4739 = vmatmul.f32.gmra.mxu0 %v2695
    %v4740 = vpop.f32.mrf.mxu0
    %v4741 = vadd.f32 %v4628, %v4740
    %4742 = vmatmul.f32.gmra.mxu0 %v2699
    %v4743 = vpop.f32.mrf.mxu0
    %v4744 = vadd.f32 %v4631, %v4743
    %4745 = vmatmul.f32.gmra.mxu0 %v2703
    %v4746 = vpop.f32.mrf.mxu0
    %v4747 = vadd.f32 %v4634, %v4746
    %4748 = vdwg.mxu0
    %4749 = vmatpush.msra.mxu0 %v3953
    %4750 = vmatpush.msra.mxu0 %v3952
    %4751 = vmatpush.msra.mxu0 %v3951
    %4752 = vmatpush.msra.mxu0 %v3950
    %4753 = vmatpush.msra.mxu0 %v3949
    %4754 = vmatpush.msra.mxu0 %v3948
    %4755 = vmatpush.msra.mxu0 %v3947
    %4756 = vmatpush.msra.mxu0 %v3946
    %4757 = vmatpush.msra.mxu0 %v3945
    %4758 = vmatpush.msra.mxu0 %v3944
    %4759 = vmatpush.msra.mxu0 %v3943
    %4760 = vmatpush.msra.mxu0 %v3942
    %4761 = vmatpush.msra.mxu0 %v3941
    %4762 = vmatpush.msra.mxu0 %v3940
    %4763 = vmatpush.msra.mxu0 %v3939
    %4764 = vmatpush.msra.mxu0 %v3938
    %4765 = vmatmul.f32.gmra.mxu0 %v2580
    %v4766 = vpop.f32.mrf.mxu0
    %v4767 = vadd.f32 %v4654, %v4766
    %4768 = vmatmul.f32.gmra.mxu0 %v2584
    %v4769 = vpop.f32.mrf.mxu0
    %v4770 = vadd.f32 %v4657, %v4769
    %4771 = vmatmul.f32.gmra.mxu0 %v2588
    %v4772 = vpop.f32.mrf.mxu0
    %v4773 = vadd.f32 %v4660, %v4772
    %4774 = vmatmul.f32.gmra.mxu0 %v2592
    %v4775 = vpop.f32.mrf.mxu0
    %v4776 = vadd.f32 %v4663, %v4775
    %4777 = vmatmul.f32.gmra.mxu0 %v2596
    %v4778 = vpop.f32.mrf.mxu0
    %v4779 = vadd.f32 %v4666, %v4778
    %4780 = vmatmul.f32.gmra.mxu0 %v2600
    %v4781 = vpop.f32.mrf.mxu0
    %v4782 = vadd.f32 %v4669, %v4781
    %4783 = vmatmul.f32.gmra.mxu0 %v2604
    %v4784 = vpop.f32.mrf.mxu0
    %v4785 = vadd.f32 %v4672, %v4784
    %4786 = vmatmul.f32.gmra.mxu0 %v2608
    %v4787 = vpop.f32.mrf.mxu0
    %v4788 = vadd.f32 %v4675, %v4787
    %4789 = vmatmul.f32.gmra.mxu0 %v2612
    %v4790 = vpop.f32.mrf.mxu0
    %v4791 = vadd.f32 %v4678, %v4790
    %4792 = vmatmul.f32.gmra.mxu0 %v2616
    %v4793 = vpop.f32.mrf.mxu0
    %v4794 = vadd.f32 %v4681, %v4793
    %4795 = vmatmul.f32.gmra.mxu0 %v2620
    %v4796 = vpop.f32.mrf.mxu0
    %v4797 = vadd.f32 %v4684, %v4796
    %4798 = vmatmul.f32.gmra.mxu0 %v2624
    %v4799 = vpop.f32.mrf.mxu0
    %v4800 = vadd.f32 %v4687, %v4799
    %4801 = vmatmul.f32.gmra.mxu0 %v2628
    %v4802 = vpop.f32.mrf.mxu0
    %v4803 = vadd.f32 %v4690, %v4802
    %4804 = vmatmul.f32.gmra.mxu0 %v2632
    %v4805 = vpop.f32.mrf.mxu0
    %v4806 = vadd.f32 %v4693, %v4805
    %4807 = vmatmul.f32.gmra.mxu0 %v2636
    %v4808 = vpop.f32.mrf.mxu0
    %v4809 = vadd.f32 %v4696, %v4808
    %4810 = vmatmul.f32.gmra.mxu0 %v2640
    %v4811 = vpop.f32.mrf.mxu0
    %v4812 = vadd.f32 %v4699, %v4811
    %4813 = vmatmul.f32.gmra.mxu0 %v2644
    %v4814 = vpop.f32.mrf.mxu0
    %v4815 = vadd.f32 %v4702, %v4814
    %4816 = vmatmul.f32.gmra.mxu0 %v2648
    %v4817 = vpop.f32.mrf.mxu0
    %v4818 = vadd.f32 %v4705, %v4817
    %4819 = vmatmul.f32.gmra.mxu0 %v2652
    %v4820 = vpop.f32.mrf.mxu0
    %v4821 = vadd.f32 %v4708, %v4820
    %4822 = vmatmul.f32.gmra.mxu0 %v2656
    %v4823 = vpop.f32.mrf.mxu0
    %v4824 = vadd.f32 %v4711, %v4823
    %4825 = vmatmul.f32.gmra.mxu0 %v2660
    %v4826 = vpop.f32.mrf.mxu0
    %v4827 = vadd.f32 %v4714, %v4826
    %4828 = vmatmul.f32.gmra.mxu0 %v2664
    %v4829 = vpop.f32.mrf.mxu0
    %v4830 = vadd.f32 %v4717, %v4829
    %4831 = vmatmul.f32.gmra.mxu0 %v2668
    %v4832 = vpop.f32.mrf.mxu0
    %v4833 = vadd.f32 %v4720, %v4832
    %4834 = vmatmul.f32.gmra.mxu0 %v2672
    %v4835 = vpop.f32.mrf.mxu0
    %v4836 = vadd.f32 %v4723, %v4835
    %4837 = vmatmul.f32.gmra.mxu0 %v2676
    %v4838 = vpop.f32.mrf.mxu0
    %v4839 = vadd.f32 %v4726, %v4838
    %4840 = vmatmul.f32.gmra.mxu0 %v2680
    %v4841 = vpop.f32.mrf.mxu0
    %v4842 = vadd.f32 %v4729, %v4841
    %4843 = vmatmul.f32.gmra.mxu0 %v2684
    %v4844 = vpop.f32.mrf.mxu0
    %v4845 = vadd.f32 %v4732, %v4844
    %4846 = vmatmul.f32.gmra.mxu0 %v2688
    %v4847 = vpop.f32.mrf.mxu0
    %v4848 = vadd.f32 %v4735, %v4847
    %4849 = vmatmul.f32.gmra.mxu0 %v2692
    %v4850 = vpop.f32.mrf.mxu0
    %v4851 = vadd.f32 %v4738, %v4850
    %4852 = vmatmul.f32.gmra.mxu0 %v2696
    %v4853 = vpop.f32.mrf.mxu0
    %v4854 = vadd.f32 %v4741, %v4853
    %4855 = vmatmul.f32.gmra.mxu0 %v2700
    %v4856 = vpop.f32.mrf.mxu0
    %v4857 = vadd.f32 %v4744, %v4856
    %4858 = vmatmul.f32.gmra.mxu0 %v2704
    %v4859 = vpop.f32.mrf.mxu0
    %v4860 = vadd.f32 %v4747, %v4859
    %4861 = vdwg.mxu0
    %4862 = vst [vmem:[#allocation10] sm:$0xff] %v4767
    %4863 = vst [vmem:[#allocation10 + $0x8] sm:$0xff] %v4770
    %4864 = vst [vmem:[#allocation10 + $0x10] sm:$0xff] %v4773
    %4865 = vst [vmem:[#allocation10 + $0x18] sm:$0xff] %v4776
    %4866 = vst [vmem:[#allocation10 + $0x20] sm:$0xff] %v4779
    %4867 = vst [vmem:[#allocation10 + $0x28] sm:$0xff] %v4782
    %4868 = vst [vmem:[#allocation10 + $0x30] sm:$0xff] %v4785
    %4869 = vst [vmem:[#allocation10 + $0x38] sm:$0xff] %v4788
    %4870 = vst [vmem:[#allocation10 + $0x40] sm:$0xff] %v4791
    %4871 = vst [vmem:[#allocation10 + $0x48] sm:$0xff] %v4794
    %4872 = vst [vmem:[#allocation10 + $0x50] sm:$0xff] %v4797
    %4873 = vst [vmem:[#allocation10 + $0x58] sm:$0xff] %v4800
    %4874 = vst [vmem:[#allocation10 + $0x60] sm:$0xff] %v4803
    %4875 = vst [vmem:[#allocation10 + $0x68] sm:$0xff] %v4806
    %4876 = vst [vmem:[#allocation10 + $0x70] sm:$0xff] %v4809
    %4877 = vst [vmem:[#allocation10 + $0x78] sm:$0xff] %v4812
    %4878 = vst [vmem:[#allocation10 + $0x80] sm:$0xff] %v4815
    %4879 = vst [vmem:[#allocation10 + $0x88] sm:$0xff] %v4818
    %4880 = vst [vmem:[#allocation10 + $0x90] sm:$0xff] %v4821
    %4881 = vst [vmem:[#allocation10 + $0x98] sm:$0xff] %v4824
    %4882 = vst [vmem:[#allocation10 + $0xa0] sm:$0xff] %v4827
    %4883 = vst [vmem:[#allocation10 + $0xa8] sm:$0xff] %v4830
    %4884 = vst [vmem:[#allocation10 + $0xb0] sm:$0xff] %v4833
    %4885 = vst [vmem:[#allocation10 + $0xb8] sm:$0xff] %v4836
    %4886 = vst [vmem:[#allocation10 + $0xc0] sm:$0xff] %v4839
    %4887 = vst [vmem:[#allocation10 + $0xc8] sm:$0xff] %v4842
    %4888 = vst [vmem:[#allocation10 + $0xd0] sm:$0xff] %v4845
    %4889 = vst [vmem:[#allocation10 + $0xd8] sm:$0xff] %v4848
    %4890 = vst [vmem:[#allocation10 + $0xe0] sm:$0xff] %v4851
    %4891 = vst [vmem:[#allocation10 + $0xe8] sm:$0xff] %v4854
    %4892 = vst [vmem:[#allocation10 + $0xf0] sm:$0xff] %v4857
    %4893 = vst [vmem:[#allocation10 + $0xf8] sm:$0xff] %v4860
    // Predicated region
    $region38: #{tpu_custom_call.1} parent=1 // pred_check
      _
    $region39: #{tpu_custom_call.1} parent=1 // pred_check_branch
      %4895 = sbr.rel (0) target = $region41
    $region40: #{tpu_custom_call.1} parent=1 // pred_region
      %4897 = vsyncadd [#allocation4], 0
      %s4898 = sshll.u32 [#allocation10], 4
      %s4899 = int_to_ptr.vmem [resolvable:$true] %s4898
      %s4900 = sshll.u32 %s5, 4
      %s4901 = int_to_ptr.hbm [resolvable:$true] %s4900
      %4906 = dma.vmem_to_hbm [thread:$0]  %s4899, 4096, %s4901, [#allocation4], 128, 128, 8
    $region41: #{tpu_custom_call.1} parent=1 // pred_fallthru
      _
    // Predicated region
    $region42: #{tpu_custom_call.1} parent=1 // pred_check
      _
    $region43: #{tpu_custom_call.1} parent=1 // pred_check_branch
      %4908 = sbr.rel (0) target = $region45
    $region44: #{tpu_custom_call.1} parent=1 // pred_region
      %4910 = dma.done [#allocation4], 4096
    $region45: #{tpu_custom_call.1} parent=1 // pred_fallthru
      _
    %4911 = vsyncpa [#allocation3], 1
    %4912 = vsyncpa [#allocation6], 1
    %4913 = vsyncpa [#allocation9], 1
    %4914 = vsyncpa [#allocation4], 1

</llo_original>
